<compile_context>
chip_gen: v7x
topology: tpu7x:2x2x1
jax: 0.10.0
libtpu: 0.0.40
codegen_flags: <defaults>
</compile_context>

<pallas_src>
import functools

import jax
import jax.numpy as jnp
from jax.experimental import pallas as pl
from jax.experimental.pallas import tpu as pltpu

EPS = 1e-5
_VMEM_LIMIT = 64 * 1024 * 1024  # safe on v5e/v6e (128 MiB) and v7x (64 MiB)


# ----------------------------------------------------------------------------
# small helpers
# ----------------------------------------------------------------------------
def _pick_tile(dim, target):
    """Largest divisor of `dim` <= target that is a multiple of 8 (or dim)."""
    if dim <= target:
        return dim
    for t in range(target, 0, -1):
        if dim % t == 0 and t % 8 == 0:
            return t
    return dim


def _pick_cout_tile(cout):
    if cout <= 256:
        return cout
    for t in (256, 128):
        if cout % t == 0:
            return t
    return cout


def _phase_split(x, s):
    """Zero-pad by 1 and space-to-depth by stride s.

    x: (N, H, W, C) -> phases (N, s*s, Hq, Wq, C) where phase a*s+b holds
    xpad[:, a::s, b::s, :].  For s == 1 this is just the padded input.
    Done once in JAX (one input-sized copy), so the conv kernel only needs
    static contiguous slices for every tap.
    """
    n, h, w, c = x.shape
    hp, wp = h + 2, w + 2
    hq, wq = -(-hp // s), -(-wp // s)
    xp = jnp.pad(x, ((0, 0), (1, s * hq - hp + 1), (1, s * wq - wp + 1), (0, 0)))
    xr = xp.reshape(n, hq, s, wq, s, c)
    ph = jnp.transpose(xr, (0, 2, 4, 1, 3, 5)).reshape(n, s * s, hq, wq, c)
    return ph, hq, wq


# ----------------------------------------------------------------------------
# fused 3x3 conv (pad=1, stride s) + per-channel stats, bf16 MXU operands
# ----------------------------------------------------------------------------
def _conv3x3_kernel(ph_ref, w_ref, out_ref, st_ref, *, stride, ho, wo, cin):
    s = stride
    cols = []
    for kh in range(3):
        for kw in range(3):
            p = (kh % s) * s + (kw % s)
            r0, c0 = kh // s, kw // s
            # static, contiguous slice of the phase-split input (bf16 in VMEM)
            cols.append(ph_ref[p, r0:r0 + ho, c0:c0 + wo, :].astype(jnp.float32))
    # in-VMEM im2col: (ho, wo, 9*cin) -> (ho*wo, 9*cin).  Done in f32 so the
    # flatten is layout-trivial when wo % 8 == 0; cast back to bf16 for the MXU.
    patches = jnp.concatenate(cols, axis=-1)
    patches = patches.reshape(ho * wo, 9 * cin).astype(jnp.bfloat16)
    acc = jnp.dot(patches, w_ref[...], preferred_element_type=jnp.float32)
    out_ref[...] = acc
    # fused BN-statistics epilogue: per-channel sum and sum-of-squares.
    st_ref[...] = jnp.concatenate(
        [jnp.sum(acc, axis=0, keepdims=True),
         jnp.sum(acc * acc, axis=0, keepdims=True)], axis=0)


def conv3x3_bn_stats(x_nhwc, w_flat_bf16, stride):
    """Returns conv output (N, Ho*Wo, Cout) f32 and partial stats (N, 2, Cout)."""
    n, h, w, cin = x_nhwc.shape
    cout = w_flat_bf16.shape[1]
    s = stride
    ho = (h - 1) // s + 1
    wo = (w - 1) // s + 1
    ph, hq, wq = _phase_split(x_nhwc.astype(jnp.bfloat16), s)
    tn = _pick_cout_tile(cout)
    kern = functools.partial(_conv3x3_kernel, stride=s, ho=ho, wo=wo, cin=cin)
    out, st = pl.pallas_call(
        kern,
        grid=(n, cout // tn),
        in_specs=[
            pl.BlockSpec((None, s * s, hq, wq, cin),
                         lambda i, j: (i, 0, 0, 0, 0)),
            pl.BlockSpec((9 * cin, tn), lambda i, j: (0, j)),
        ],
        out_specs=(
            pl.BlockSpec((None, ho * wo, tn), lambda i, j: (i, 0, j)),
            pl.BlockSpec((None, 2, tn), lambda i, j: (i, 0, j)),
        ),
        out_shape=(
            jax.ShapeDtypeStruct((n, ho * wo, cout), jnp.float32),
            jax.ShapeDtypeStruct((n, 2, cout), jnp.float32),
        ),
        compiler_params=pltpu.CompilerParams(
            dimension_semantics=("parallel", "parallel"),
            vmem_limit_bytes=_VMEM_LIMIT),
    )(ph, w_flat_bf16)
    return out, st, ho, wo


# ----------------------------------------------------------------------------
# 1x1 shortcut conv as a tiled matmul with fused stats (bf16 operands)
# ----------------------------------------------------------------------------
def _matmul_stats_kernel(a_ref, b_ref, o_ref, st_ref):
    acc = jnp.dot(a_ref[...], b_ref[...], preferred_element_type=jnp.float32)
    o_ref[...] = acc
    st_ref[...] = jnp.concatenate(
        [jnp.sum(acc, axis=0, keepdims=True),
         jnp.sum(acc * acc, axis=0, keepdims=True)], axis=0)


def matmul_stats(a_bf16, b_bf16, tm=512):
    m, k = a_bf16.shape
    cout = b_bf16.shape[1]
    tm = _pick_tile(m, tm)
    g = m // tm
    out, st = pl.pallas_call(
        _matmul_stats_kernel,
        grid=(g,),
        in_specs=[
            pl.BlockSpec((tm, k), lambda i: (i, 0)),
            pl.BlockSpec((k, cout), lambda i: (0, 0)),
        ],
        out_specs=(
            pl.BlockSpec((tm, cout), lambda i: (i, 0)),
            pl.BlockSpec((None, 2, cout), lambda i: (i, 0, 0)),
        ),
        out_shape=(
            jax.ShapeDtypeStruct((m, cout), jnp.float32),
            jax.ShapeDtypeStruct((g, 2, cout), jnp.float32),
        ),
        compiler_params=pltpu.CompilerParams(
            dimension_semantics=("parallel",),
            vmem_limit_bytes=_VMEM_LIMIT),
    )(a_bf16, b_bf16)
    return out, st


# ----------------------------------------------------------------------------
# fused BN scale/bias (+optional residual) (+ReLU) epilogue, in-place, f32
# ----------------------------------------------------------------------------
def bn_act(x2d, scale_row, bias_row, residual=None, relu=True, tm=512):
    """y = x*scale + bias [+ residual] [relu].  x2d: lane-dense (R, L) f32."""
    r, l = x2d.shape
    tr = _pick_tile(r, tm)
    has_res = residual is not None

    def kernel(*refs):
        if has_res:
            x_ref, s_ref, b_ref, res_ref, o_ref = refs
        else:
            x_ref, s_ref, b_ref, o_ref = refs
        y = x_ref[...] * s_ref[...] + b_ref[...]
        if has_res:
            y = y + res_ref[...]
        if relu:
            y = jnp.maximum(y, 0.0)
        o_ref[...] = y

    in_specs = [
        pl.BlockSpec((tr, l), lambda i: (i, 0)),
        pl.BlockSpec((1, l), lambda i: (0, 0)),
        pl.BlockSpec((1, l), lambda i: (0, 0)),
    ]
    args = [x2d, scale_row, bias_row]
    if has_res:
        in_specs.append(pl.BlockSpec((tr, l), lambda i: (i, 0)))
        args.append(residual)
    return pl.pallas_call(
        kernel,
        grid=(r // tr,),
        in_specs=in_specs,
        out_specs=pl.BlockSpec((tr, l), lambda i: (i, 0)),
        out_shape=jax.ShapeDtypeStruct((r, l), jnp.float32),
        input_output_aliases={0: 0},   # rewrite the conv output in place
        compiler_params=pltpu.CompilerParams(
            dimension_semantics=("parallel",),
            vmem_limit_bytes=_VMEM_LIMIT),
    )(*args)


# ----------------------------------------------------------------------------
# BN parameter folding from fused partial statistics (training-mode BN)
# ----------------------------------------------------------------------------
def fold_bn(partial_stats, count, gamma, beta):
    tot = jnp.sum(partial_stats, axis=0)          # (2, C)
    mean = tot[0] / count
    # E[x^2] - E[x]^2 in f32, clamped at 0.
    # TODO(synk): switch to a two-pass / Welford reduction if BN inputs ever
    # have |mean| >> std (catastrophic-cancellation risk).
    var = jnp.maximum(tot[1] / count - mean * mean, 0.0)
    scale = gamma * jax.lax.rsqrt(var + EPS)
    bias = beta - mean * scale
    return scale, bias


def _per_channel_row(v, wo):
    # Replicate a (C,) vector across the folded width so the epilogue runs on
    # a lane-dense (N*Ho, Wo*C) view.
    return jnp.tile(v, wo).reshape(1, -1)


# ----------------------------------------------------------------------------
# BasicBlock forward
# ----------------------------------------------------------------------------
@functools.partial(jax.jit, static_argnames=("stride",))
def basic_block_forward(x_nhwc, params, stride):
    n, h, w, cin = x_nhwc.shape
    planes = params["w1"].shape[-1]

    # conv1 (3x3, stride) + fused batch stats, then BN + ReLU epilogue.
    w1 = params["w1"].reshape(9 * cin, planes).astype(jnp.bfloat16)
    c1, st1, ho, wo = conv3x3_bn_stats(x_nhwc, w1, stride)
    m = n * ho * wo
    sc1, bi1 = fold_bn(st1, m, params["g1"], params["b1"])
    out1 = bn_act(c1.reshape(n * ho, wo * planes),
                  _per_channel_row(sc1, wo), _per_channel_row(bi1, wo),
                  residual=None, relu=True)
    out1_nhwc = out1.reshape(n, ho, wo, planes)

    # conv2 (3x3, stride 1) + fused batch stats.
    w2 = params["w2"].reshape(9 * planes, planes).astype(jnp.bfloat16)
    c2, st2, _, _ = conv3x3_bn_stats(out1_nhwc, w2, 1)
    sc2, bi2 = fold_bn(st2, m, params["g2"], params["b2"])

    # shortcut branch.
    if stride != 1 or cin != planes:
        xs = x_nhwc[:, ::stride, ::stride, :].reshape(m, cin)
        cs, sts = matmul_stats(xs.astype(jnp.bfloat16),
                               params["ws"].astype(jnp.bfloat16))
        scs, bis = fold_bn(sts, m, params["gs"], params["bs"])
        shortcut = bn_act(cs.reshape(n * ho, wo * planes),
                          _per_channel_row(scs, wo), _per_channel_row(bis, wo),
                          residual=None, relu=False)
    else:
        shortcut = x_nhwc.reshape(n * ho, wo * planes)

    # out = relu(bn2(conv2) + shortcut) — single fused elementwise kernel.
    out = bn_act(c2.reshape(n * ho, wo * planes),
                 _per_channel_row(sc2, wo), _per_channel_row(bi2, wo),
                 residual=shortcut, relu=True)
    return out.reshape(n, ho, wo, planes)


def init_params(key, in_planes, planes, stride):
    ks = jax.random.split(key, 3)
    params = {
        # conv weights stored (KH, KW, Cin, Cout)
        "w1": 0.1 * jax.random.normal(ks[0], (3, 3, in_planes, planes), jnp.float32),
        "g1": jnp.ones((planes,), jnp.float32),
        "b1": jnp.zeros((planes,), jnp.float32),
        "w2": 0.1 * jax.random.normal(ks[1], (3, 3, planes, planes), jnp.float32),
        "g2": jnp.ones((planes,), jnp.float32),
        "b2": jnp.zeros((planes,), jnp.float32),
    }
    if stride != 1 or in_planes != planes:
        params["ws"] = 0.1 * jax.random.normal(
            ks[2], (in_planes, planes), jnp.float32)   # 1x1 conv as matrix
        params["gs"] = jnp.ones((planes,), jnp.float32)
        params["bs"] = jnp.zeros((planes,), jnp.float32)
    return params


if __name__ == "__main__":
    key = jax.random.PRNGKey(0)
    kx, kp = jax.random.split(key)

    N, Cin, H, W = 2, 4, 16, 16      # PyTorch-style NCHW sizes
    planes, stride = 8, 2            # exercises the conv shortcut branch

    x_nchw = jax.random.normal(kx, (N, Cin, H, W), jnp.float32)
    x_nhwc = jnp.transpose(x_nchw, (0, 2, 3, 1))   # NCHW -> NHWC for kernels

    params = init_params(kp, Cin, planes, stride)
    out_nhwc = basic_block_forward(x_nhwc, params, stride=stride)
    out_nchw = jnp.transpose(out_nhwc, (0, 3, 1, 2))
    jax.block_until_ready(out_nchw)

    assert out_nchw.shape == (N, planes, H // stride, W // stride)
    assert bool(jnp.all(out_nchw >= 0.0))   # final ReLU
    print("KERNEL_OK")
</pallas_src>

<mosaic_0001>
module attributes {stable_mosaic.version = 11 : i64} {
  func.func @_matmul_stats_kernel(%arg0: i32, %arg1: memref<128x4xbf16, #tpu.memory_space<vmem>>, %arg2: memref<4x8xbf16, #tpu.memory_space<vmem>>, %arg3: memref<128x8xf32, #tpu.memory_space<vmem>>, %arg4: memref<1x2x8xf32, #tpu.memory_space<vmem>>) attributes {dimension_semantics = [#tpu.dimension_semantics<parallel>], iteration_bounds = array<i64: 1>, scalar_prefetch = 0 : i64, scratch_operands = 0 : i64, tpu.core_type = #tpu.core_type<tc>, window_params = [{transform_indices = @transform_0, window_bounds = array<i64: 128, 4>}, {pipeline_mode = #tpu.pipeline_mode<synchronous>, transform_indices = @transform_1, window_bounds = array<i64: 4, 8>}, {transform_indices = @transform_2, window_bounds = array<i64: 128, 8>}, {transform_indices = @transform_3, window_bounds = array<i64: 1, 2, 8>}]} {
    %c0 = arith.constant 0 : index
    %c0_0 = arith.constant 0 : index
    %0 = vector.load %arg1[%c0, %c0_0] : memref<128x4xbf16, #tpu.memory_space<vmem>>, vector<128x4xbf16>
    %c0_1 = arith.constant 0 : index
    %c0_2 = arith.constant 0 : index
    %1 = vector.load %arg2[%c0_1, %c0_2] : memref<4x8xbf16, #tpu.memory_space<vmem>>, vector<4x8xbf16>
    %cst = arith.constant dense<0.000000e+00> : vector<128x8xf32>
    %2 = tpu.matmul %0, %1, %cst {dimension_numbers = #tpu.dot_dimension_numbers<[1], [0], [0], [1], [0, 0, 1, 1], [], []>} : vector<128x4xbf16>, vector<4x8xbf16>, vector<128x8xf32> -> vector<128x8xf32>
    %c0_3 = arith.constant 0 : index
    %c0_4 = arith.constant 0 : index
    %3 = vector.load %arg3[%c0_3, %c0_4] : memref<128x8xf32, #tpu.memory_space<vmem>>, vector<128x8xf32>
    tpu.vector_store %arg3[%c0_3, %c0_4], %2 {strides = array<i32>} : memref<128x8xf32, #tpu.memory_space<vmem>>, vector<128x8xf32>,
    %cst_5 = arith.constant dense<0.000000e+00> : vector<8xf32>
    %4 = vector.multi_reduction <add>, %2, %cst_5 [0] : vector<128x8xf32> to vector<8xf32>
    %5 = vector.shape_cast %4 : vector<8xf32> to vector<1x8xf32>
    %6 = arith.mulf %2, %2 : vector<128x8xf32>
    %cst_6 = arith.constant dense<0.000000e+00> : vector<8xf32>
    %7 = vector.multi_reduction <add>, %6, %cst_6 [0] : vector<128x8xf32> to vector<8xf32>
    %8 = vector.shape_cast %7 : vector<8xf32> to vector<1x8xf32>
    %9 = tpu.concatenate %5, %8 in 0 : vector<1x8xf32>, vector<1x8xf32> -> vector<2x8xf32>
    %c0_7 = arith.constant 0 : index
    %c0_8 = arith.constant 0 : index
    %c0_9 = arith.constant 0 : index
    %10 = vector.load %arg4[%c0_7, %c0_8, %c0_9] : memref<1x2x8xf32, #tpu.memory_space<vmem>>, vector<1x2x8xf32>
    %11 = vector.shape_cast %10 : vector<1x2x8xf32> to vector<2x8xf32>
    %12 = vector.shape_cast %9 : vector<2x8xf32> to vector<1x2x8xf32>
    tpu.vector_store %arg4[%c0_7, %c0_8, %c0_9], %12 {strides = array<i32>} : memref<1x2x8xf32, #tpu.memory_space<vmem>>, vector<1x2x8xf32>,
    return
  }
  func.func @transform_0(%arg0: i32) -> (i32, i32) {
    %c0_i32 = arith.constant 0 : i32
    %c0_i32_0 = arith.constant 0 : i32
    return %arg0, %c0_i32 : i32, i32
  }
  func.func @transform_1(%arg0: i32) -> (i32, i32) {
    %c0_i32 = arith.constant 0 : i32
    %c0_i32_0 = arith.constant 0 : i32
    %c0_i32_1 = arith.constant 0 : i32
    return %c0_i32, %c0_i32_0 : i32, i32
  }
  func.func @transform_2(%arg0: i32) -> (i32, i32) {
    %c0_i32 = arith.constant 0 : i32
    %c0_i32_0 = arith.constant 0 : i32
    return %arg0, %c0_i32 : i32, i32
  }
  func.func @transform_3(%arg0: i32) -> (i32, i32, i32) {
    %c0_i32 = arith.constant 0 : i32
    %c0_i32_0 = arith.constant 0 : i32
    %c0_i32_1 = arith.constant 0 : i32
    return %arg0, %c0_i32, %c0_i32_0 : i32, i32, i32
  }
}

module attributes {stable_mosaic.version = 11 : i64} {
  func.func @kernel(%arg0: i32, %arg1: memref<16x64xf32, #tpu.memory_space<vmem>>, %arg2: memref<1x64xf32, #tpu.memory_space<vmem>>, %arg3: memref<1x64xf32, #tpu.memory_space<vmem>>, %arg4: memref<16x64xf32, #tpu.memory_space<vmem>>) attributes {dimension_semantics = [#tpu.dimension_semantics<parallel>], iteration_bounds = array<i64: 1>, scalar_prefetch = 0 : i64, scratch_operands = 0 : i64, tpu.core_type = #tpu.core_type<tc>, window_params = [{transform_indices = @transform_0, window_bounds = array<i64: 16, 64>}, {pipeline_mode = #tpu.pipeline_mode<synchronous>, transform_indices = @transform_1, window_bounds = array<i64: 1, 64>}, {pipeline_mode = #tpu.pipeline_mode<synchronous>, transform_indices = @transform_2, window_bounds = array<i64: 1, 64>}, {transform_indices = @transform_3, window_bounds = array<i64: 16, 64>}]} {
    %c0 = arith.constant 0 : index
    %c0_0 = arith.constant 0 : index
    %0 = vector.load %arg1[%c0, %c0_0] : memref<16x64xf32, #tpu.memory_space<vmem>>, vector<16x64xf32>
    %c0_1 = arith.constant 0 : index
    %c0_2 = arith.constant 0 : index
    %1 = vector.load %arg2[%c0_1, %c0_2] : memref<1x64xf32, #tpu.memory_space<vmem>>, vector<1x64xf32>
    %2 = vector.broadcast %1 : vector<1x64xf32> to vector<16x64xf32>
    %3 = arith.mulf %0, %2 : vector<16x64xf32>
    %c0_3 = arith.constant 0 : index
    %c0_4 = arith.constant 0 : index
    %4 = vector.load %arg3[%c0_3, %c0_4] : memref<1x64xf32, #tpu.memory_space<vmem>>, vector<1x64xf32>
    %5 = vector.broadcast %4 : vector<1x64xf32> to vector<16x64xf32>
    %6 = arith.addf %3, %5 : vector<16x64xf32>
    %c0_5 = arith.constant 0 : index
    %c0_6 = arith.constant 0 : index
    %7 = vector.load %arg4[%c0_5, %c0_6] : memref<16x64xf32, #tpu.memory_space<vmem>>, vector<16x64xf32>
    tpu.vector_store %arg4[%c0_5, %c0_6], %6 {strides = array<i32>} : memref<16x64xf32, #tpu.memory_space<vmem>>, vector<16x64xf32>,
    return
  }
  func.func @transform_0(%arg0: i32) -> (i32, i32) {
    %c0_i32 = arith.constant 0 : i32
    %c0_i32_0 = arith.constant 0 : i32
    return %arg0, %c0_i32 : i32, i32
  }
  func.func @transform_1(%arg0: i32) -> (i32, i32) {
    %c0_i32 = arith.constant 0 : i32
    %c0_i32_0 = arith.constant 0 : i32
    %c0_i32_1 = arith.constant 0 : i32
    return %c0_i32, %c0_i32_0 : i32, i32
  }
  func.func @transform_2(%arg0: i32) -> (i32, i32) {
    %c0_i32 = arith.constant 0 : i32
    %c0_i32_0 = arith.constant 0 : i32
    %c0_i32_1 = arith.constant 0 : i32
    return %c0_i32, %c0_i32_0 : i32, i32
  }
  func.func @transform_3(%arg0: i32) -> (i32, i32) {
    %c0_i32 = arith.constant 0 : i32
    %c0_i32_0 = arith.constant 0 : i32
    return %arg0, %c0_i32 : i32, i32
  }
}

module attributes {stable_mosaic.version = 11 : i64} {
  func.func @_conv3x3_kernel(%arg0: i32, %arg1: i32, %arg2: memref<1x4x9x9x4xbf16, #tpu.memory_space<vmem>>, %arg3: memref<36x8xbf16, #tpu.memory_space<vmem>>, %arg4: memref<1x64x8xf32, #tpu.memory_space<vmem>>, %arg5: memref<1x2x8xf32, #tpu.memory_space<vmem>>) attributes {dimension_semantics = [#tpu.dimension_semantics<parallel>, #tpu.dimension_semantics<parallel>], iteration_bounds = array<i64: 2, 1>, scalar_prefetch = 0 : i64, scratch_operands = 0 : i64, tpu.core_type = #tpu.core_type<tc>, window_params = [{transform_indices = @transform_0, window_bounds = array<i64: 1, 4, 9, 9, 4>}, {transform_indices = @transform_1, window_bounds = array<i64: 36, 8>}, {transform_indices = @transform_2, window_bounds = array<i64: 1, 64, 8>}, {transform_indices = @transform_3, window_bounds = array<i64: 1, 2, 8>}]} {
    %c0 = arith.constant 0 : index
    %c0_0 = arith.constant 0 : index
    %c0_1 = arith.constant 0 : index
    %c0_2 = arith.constant 0 : index
    %c0_3 = arith.constant 0 : index
    %0 = vector.load %arg2[%c0, %c0_0, %c0_1, %c0_2, %c0_3] : memref<1x4x9x9x4xbf16, #tpu.memory_space<vmem>>, vector<1x1x8x8x4xbf16>
    %1 = vector.shape_cast %0 : vector<1x1x8x8x4xbf16> to vector<8x8x4xbf16>
    %2 = arith.extf %1 : vector<8x8x4xbf16> to vector<8x8x4xf32>
    %c0_4 = arith.constant 0 : index
    %c1 = arith.constant 1 : index
    %c0_5 = arith.constant 0 : index
    %c0_6 = arith.constant 0 : index
    %c0_7 = arith.constant 0 : index
    %3 = vector.load %arg2[%c0_4, %c1, %c0_5, %c0_6, %c0_7] : memref<1x4x9x9x4xbf16, #tpu.memory_space<vmem>>, vector<1x1x8x8x4xbf16>
    %4 = vector.shape_cast %3 : vector<1x1x8x8x4xbf16> to vector<8x8x4xbf16>
    %5 = arith.extf %4 : vector<8x8x4xbf16> to vector<8x8x4xf32>
    %c0_8 = arith.constant 0 : index
    %c0_9 = arith.constant 0 : index
    %c0_10 = arith.constant 0 : index
    %c1_11 = arith.constant 1 : index
    %c0_12 = arith.constant 0 : index
    %6 = vector.load %arg2[%c0_8, %c0_9, %c0_10, %c1_11, %c0_12] : memref<1x4x9x9x4xbf16, #tpu.memory_space<vmem>>, vector<1x1x8x8x4xbf16>
    %7 = vector.shape_cast %6 : vector<1x1x8x8x4xbf16> to vector<8x8x4xbf16>
    %8 = arith.extf %7 : vector<8x8x4xbf16> to vector<8x8x4xf32>
    %c0_13 = arith.constant 0 : index
    %c2 = arith.constant 2 : index
    %c0_14 = arith.constant 0 : index
    %c0_15 = arith.constant 0 : index
    %c0_16 = arith.constant 0 : index
    %9 = vector.load %arg2[%c0_13, %c2, %c0_14, %c0_15, %c0_16] : memref<1x4x9x9x4xbf16, #tpu.memory_space<vmem>>, vector<1x1x8x8x4xbf16>
    %10 = vector.shape_cast %9 : vector<1x1x8x8x4xbf16> to vector<8x8x4xbf16>
    %11 = arith.extf %10 : vector<8x8x4xbf16> to vector<8x8x4xf32>
    %c0_17 = arith.constant 0 : index
    %c3 = arith.constant 3 : index
    %c0_18 = arith.constant 0 : index
    %c0_19 = arith.constant 0 : index
    %c0_20 = arith.constant 0 : index
    %12 = vector.load %arg2[%c0_17, %c3, %c0_18, %c0_19, %c0_20] : memref<1x4x9x9x4xbf16, #tpu.memory_space<vmem>>, vector<1x1x8x8x4xbf16>
    %13 = vector.shape_cast %12 : vector<1x1x8x8x4xbf16> to vector<8x8x4xbf16>
    %14 = arith.extf %13 : vector<8x8x4xbf16> to vector<8x8x4xf32>
    %c0_21 = arith.constant 0 : index
    %c2_22 = arith.constant 2 : index
    %c0_23 = arith.constant 0 : index
    %c1_24 = arith.constant 1 : index
    %c0_25 = arith.constant 0 : index
    %15 = vector.load %arg2[%c0_21, %c2_22, %c0_23, %c1_24, %c0_25] : memref<1x4x9x9x4xbf16, #tpu.memory_space<vmem>>, vector<1x1x8x8x4xbf16>
    %16 = vector.shape_cast %15 : vector<1x1x8x8x4xbf16> to vector<8x8x4xbf16>
    %17 = arith.extf %16 : vector<8x8x4xbf16> to vector<8x8x4xf32>
    %c0_26 = arith.constant 0 : index
    %c0_27 = arith.constant 0 : index
    %c1_28 = arith.constant 1 : index
    %c0_29 = arith.constant 0 : index
    %c0_30 = arith.constant 0 : index
    %18 = vector.load %arg2[%c0_26, %c0_27, %c1_28, %c0_29, %c0_30] : memref<1x4x9x9x4xbf16, #tpu.memory_space<vmem>>, vector<1x1x8x8x4xbf16>
    %19 = vector.shape_cast %18 : vector<1x1x8x8x4xbf16> to vector<8x8x4xbf16>
    %20 = arith.extf %19 : vector<8x8x4xbf16> to vector<8x8x4xf32>
    %c0_31 = arith.constant 0 : index
    %c1_32 = arith.constant 1 : index
    %c1_33 = arith.constant 1 : index
    %c0_34 = arith.constant 0 : index
    %c0_35 = arith.constant 0 : index
    %21 = vector.load %arg2[%c0_31, %c1_32, %c1_33, %c0_34, %c0_35] : memref<1x4x9x9x4xbf16, #tpu.memory_space<vmem>>, vector<1x1x8x8x4xbf16>
    %22 = vector.shape_cast %21 : vector<1x1x8x8x4xbf16> to vector<8x8x4xbf16>
    %23 = arith.extf %22 : vector<8x8x4xbf16> to vector<8x8x4xf32>
    %c0_36 = arith.constant 0 : index
    %c0_37 = arith.constant 0 : index
    %c1_38 = arith.constant 1 : index
    %c1_39 = arith.constant 1 : index
    %c0_40 = arith.constant 0 : index
    %24 = vector.load %arg2[%c0_36, %c0_37, %c1_38, %c1_39, %c0_40] : memref<1x4x9x9x4xbf16, #tpu.memory_space<vmem>>, vector<1x1x8x8x4xbf16>
    %25 = vector.shape_cast %24 : vector<1x1x8x8x4xbf16> to vector<8x8x4xbf16>
    %26 = arith.extf %25 : vector<8x8x4xbf16> to vector<8x8x4xf32>
    %27 = tpu.concatenate %2, %5, %8, %11, %14, %17, %20, %23, %26 in 2 : vector<8x8x4xf32>, vector<8x8x4xf32>, vector<8x8x4xf32>, vector<8x8x4xf32>, vector<8x8x4xf32>, vector<8x8x4xf32>, vector<8x8x4xf32>, vector<8x8x4xf32>, vector<8x8x4xf32> -> vector<8x8x36xf32>
    %28 = vector.shape_cast %27 : vector<8x8x36xf32> to vector<64x36xf32>
    %29 = arith.truncf %28 : vector<64x36xf32> to vector<64x36xbf16>
    %c0_41 = arith.constant 0 : index
    %c0_42 = arith.constant 0 : index
    %30 = vector.load %arg3[%c0_41, %c0_42] : memref<36x8xbf16, #tpu.memory_space<vmem>>, vector<36x8xbf16>
    %cst = arith.constant dense<0.000000e+00> : vector<64x8xf32>
    %31 = tpu.matmul %29, %30, %cst {dimension_numbers = #tpu.dot_dimension_numbers<[1], [0], [0], [1], [0, 0, 1, 1], [], []>} : vector<64x36xbf16>, vector<36x8xbf16>, vector<64x8xf32> -> vector<64x8xf32>
    %c0_43 = arith.constant 0 : index
    %c0_44 = arith.constant 0 : index
    %c0_45 = arith.constant 0 : index
    %32 = vector.load %arg4[%c0_43, %c0_44, %c0_45] : memref<1x64x8xf32, #tpu.memory_space<vmem>>, vector<1x64x8xf32>
    %33 = vector.shape_cast %32 : vector<1x64x8xf32> to vector<64x8xf32>
    %34 = vector.shape_cast %31 : vector<64x8xf32> to vector<1x64x8xf32>
    tpu.vector_store %arg4[%c0_43, %c0_44, %c0_45], %34 {strides = array<i32>} : memref<1x64x8xf32, #tpu.memory_space<vmem>>, vector<1x64x8xf32>,
    %cst_46 = arith.constant dense<0.000000e+00> : vector<8xf32>
    %35 = vector.multi_reduction <add>, %31, %cst_46 [0] : vector<64x8xf32> to vector<8xf32>
    %36 = vector.shape_cast %35 : vector<8xf32> to vector<1x8xf32>
    %37 = arith.mulf %31, %31 : vector<64x8xf32>
    %cst_47 = arith.constant dense<0.000000e+00> : vector<8xf32>
    %38 = vector.multi_reduction <add>, %37, %cst_47 [0] : vector<64x8xf32> to vector<8xf32>
    %39 = vector.shape_cast %38 : vector<8xf32> to vector<1x8xf32>
    %40 = tpu.concatenate %36, %39 in 0 : vector<1x8xf32>, vector<1x8xf32> -> vector<2x8xf32>
    %c0_48 = arith.constant 0 : index
    %c0_49 = arith.constant 0 : index
    %c0_50 = arith.constant 0 : index
    %41 = vector.load %arg5[%c0_48, %c0_49, %c0_50] : memref<1x2x8xf32, #tpu.memory_space<vmem>>, vector<1x2x8xf32>
    %42 = vector.shape_cast %41 : vector<1x2x8xf32> to vector<2x8xf32>
    %43 = vector.shape_cast %40 : vector<2x8xf32> to vector<1x2x8xf32>
    tpu.vector_store %arg5[%c0_48, %c0_49, %c0_50], %43 {strides = array<i32>} : memref<1x2x8xf32, #tpu.memory_space<vmem>>, vector<1x2x8xf32>,
    return
  }
  func.func @transform_0(%arg0: i32, %arg1: i32) -> (i32, i32, i32, i32, i32) {
    %c0_i32 = arith.constant 0 : i32
    %c0_i32_0 = arith.constant 0 : i32
    %c0_i32_1 = arith.constant 0 : i32
    %c0_i32_2 = arith.constant 0 : i32
    %c0_i32_3 = arith.constant 0 : i32
    return %arg0, %c0_i32, %c0_i32_0, %c0_i32_1, %c0_i32_2 : i32, i32, i32, i32, i32
  }
  func.func @transform_1(%arg0: i32, %arg1: i32) -> (i32, i32) {
    %c0_i32 = arith.constant 0 : i32
    %c0_i32_0 = arith.constant 0 : i32
    return %c0_i32, %arg1 : i32, i32
  }
  func.func @transform_2(%arg0: i32, %arg1: i32) -> (i32, i32, i32) {
    %c0_i32 = arith.constant 0 : i32
    %c0_i32_0 = arith.constant 0 : i32
    return %arg0, %c0_i32, %arg1 : i32, i32, i32
  }
  func.func @transform_3(%arg0: i32, %arg1: i32) -> (i32, i32, i32) {
    %c0_i32 = arith.constant 0 : i32
    %c0_i32_0 = arith.constant 0 : i32
    return %arg0, %c0_i32, %arg1 : i32, i32, i32
  }
}

module attributes {stable_mosaic.version = 11 : i64} {
  func.func @kernel(%arg0: i32, %arg1: memref<16x64xf32, #tpu.memory_space<vmem>>, %arg2: memref<1x64xf32, #tpu.memory_space<vmem>>, %arg3: memref<1x64xf32, #tpu.memory_space<vmem>>, %arg4: memref<16x64xf32, #tpu.memory_space<vmem>>) attributes {dimension_semantics = [#tpu.dimension_semantics<parallel>], iteration_bounds = array<i64: 1>, scalar_prefetch = 0 : i64, scratch_operands = 0 : i64, tpu.core_type = #tpu.core_type<tc>, window_params = [{transform_indices = @transform_0, window_bounds = array<i64: 16, 64>}, {pipeline_mode = #tpu.pipeline_mode<synchronous>, transform_indices = @transform_1, window_bounds = array<i64: 1, 64>}, {pipeline_mode = #tpu.pipeline_mode<synchronous>, transform_indices = @transform_2, window_bounds = array<i64: 1, 64>}, {transform_indices = @transform_3, window_bounds = array<i64: 16, 64>}]} {
    %c0 = arith.constant 0 : index
    %c0_0 = arith.constant 0 : index
    %0 = vector.load %arg1[%c0, %c0_0] : memref<16x64xf32, #tpu.memory_space<vmem>>, vector<16x64xf32>
    %c0_1 = arith.constant 0 : index
    %c0_2 = arith.constant 0 : index
    %1 = vector.load %arg2[%c0_1, %c0_2] : memref<1x64xf32, #tpu.memory_space<vmem>>, vector<1x64xf32>
    %2 = vector.broadcast %1 : vector<1x64xf32> to vector<16x64xf32>
    %3 = arith.mulf %0, %2 : vector<16x64xf32>
    %c0_3 = arith.constant 0 : index
    %c0_4 = arith.constant 0 : index
    %4 = vector.load %arg3[%c0_3, %c0_4] : memref<1x64xf32, #tpu.memory_space<vmem>>, vector<1x64xf32>
    %5 = vector.broadcast %4 : vector<1x64xf32> to vector<16x64xf32>
    %6 = arith.addf %3, %5 : vector<16x64xf32>
    %cst = arith.constant 0.000000e+00 : f32
    %7 = vector.broadcast %cst : f32 to vector<16x64xf32>
    %8 = arith.maximumf %6, %7 : vector<16x64xf32>
    %c0_5 = arith.constant 0 : index
    %c0_6 = arith.constant 0 : index
    %9 = vector.load %arg4[%c0_5, %c0_6] : memref<16x64xf32, #tpu.memory_space<vmem>>, vector<16x64xf32>
    tpu.vector_store %arg4[%c0_5, %c0_6], %8 {strides = array<i32>} : memref<16x64xf32, #tpu.memory_space<vmem>>, vector<16x64xf32>,
    return
  }
  func.func @transform_0(%arg0: i32) -> (i32, i32) {
    %c0_i32 = arith.constant 0 : i32
    %c0_i32_0 = arith.constant 0 : i32
    return %arg0, %c0_i32 : i32, i32
  }
  func.func @transform_1(%arg0: i32) -> (i32, i32) {
    %c0_i32 = arith.constant 0 : i32
    %c0_i32_0 = arith.constant 0 : i32
    %c0_i32_1 = arith.constant 0 : i32
    return %c0_i32, %c0_i32_0 : i32, i32
  }
  func.func @transform_2(%arg0: i32) -> (i32, i32) {
    %c0_i32 = arith.constant 0 : i32
    %c0_i32_0 = arith.constant 0 : i32
    %c0_i32_1 = arith.constant 0 : i32
    return %c0_i32, %c0_i32_0 : i32, i32
  }
  func.func @transform_3(%arg0: i32) -> (i32, i32) {
    %c0_i32 = arith.constant 0 : i32
    %c0_i32_0 = arith.constant 0 : i32
    return %arg0, %c0_i32 : i32, i32
  }
}

module attributes {stable_mosaic.version = 11 : i64} {
  func.func @kernel(%arg0: i32, %arg1: memref<16x64xf32, #tpu.memory_space<vmem>>, %arg2: memref<1x64xf32, #tpu.memory_space<vmem>>, %arg3: memref<1x64xf32, #tpu.memory_space<vmem>>, %arg4: memref<16x64xf32, #tpu.memory_space<vmem>>, %arg5: memref<16x64xf32, #tpu.memory_space<vmem>>) attributes {dimension_semantics = [#tpu.dimension_semantics<parallel>], iteration_bounds = array<i64: 1>, scalar_prefetch = 0 : i64, scratch_operands = 0 : i64, tpu.core_type = #tpu.core_type<tc>, window_params = [{transform_indices = @transform_0, window_bounds = array<i64: 16, 64>}, {pipeline_mode = #tpu.pipeline_mode<synchronous>, transform_indices = @transform_1, window_bounds = array<i64: 1, 64>}, {pipeline_mode = #tpu.pipeline_mode<synchronous>, transform_indices = @transform_2, window_bounds = array<i64: 1, 64>}, {transform_indices = @transform_3, window_bounds = array<i64: 16, 64>}, {transform_indices = @transform_4, window_bounds = array<i64: 16, 64>}]} {
    %c0 = arith.constant 0 : index
    %c0_0 = arith.constant 0 : index
    %0 = vector.load %arg1[%c0, %c0_0] : memref<16x64xf32, #tpu.memory_space<vmem>>, vector<16x64xf32>
    %c0_1 = arith.constant 0 : index
    %c0_2 = arith.constant 0 : index
    %1 = vector.load %arg2[%c0_1, %c0_2] : memref<1x64xf32, #tpu.memory_space<vmem>>, vector<1x64xf32>
    %2 = vector.broadcast %1 : vector<1x64xf32> to vector<16x64xf32>
    %3 = arith.mulf %0, %2 : vector<16x64xf32>
    %c0_3 = arith.constant 0 : index
    %c0_4 = arith.constant 0 : index
    %4 = vector.load %arg3[%c0_3, %c0_4] : memref<1x64xf32, #tpu.memory_space<vmem>>, vector<1x64xf32>
    %5 = vector.broadcast %4 : vector<1x64xf32> to vector<16x64xf32>
    %6 = arith.addf %3, %5 : vector<16x64xf32>
    %c0_5 = arith.constant 0 : index
    %c0_6 = arith.constant 0 : index
    %7 = vector.load %arg4[%c0_5, %c0_6] : memref<16x64xf32, #tpu.memory_space<vmem>>, vector<16x64xf32>
    %8 = arith.addf %6, %7 : vector<16x64xf32>
    %cst = arith.constant 0.000000e+00 : f32
    %9 = vector.broadcast %cst : f32 to vector<16x64xf32>
    %10 = arith.maximumf %8, %9 : vector<16x64xf32>
    %c0_7 = arith.constant 0 : index
    %c0_8 = arith.constant 0 : index
    %11 = vector.load %arg5[%c0_7, %c0_8] : memref<16x64xf32, #tpu.memory_space<vmem>>, vector<16x64xf32>
    tpu.vector_store %arg5[%c0_7, %c0_8], %10 {strides = array<i32>} : memref<16x64xf32, #tpu.memory_space<vmem>>, vector<16x64xf32>,
    return
  }
  func.func @transform_0(%arg0: i32) -> (i32, i32) {
    %c0_i32 = arith.constant 0 : i32
    %c0_i32_0 = arith.constant 0 : i32
    return %arg0, %c0_i32 : i32, i32
  }
  func.func @transform_1(%arg0: i32) -> (i32, i32) {
    %c0_i32 = arith.constant 0 : i32
    %c0_i32_0 = arith.constant 0 : i32
    %c0_i32_1 = arith.constant 0 : i32
    return %c0_i32, %c0_i32_0 : i32, i32
  }
  func.func @transform_2(%arg0: i32) -> (i32, i32) {
    %c0_i32 = arith.constant 0 : i32
    %c0_i32_0 = arith.constant 0 : i32
    %c0_i32_1 = arith.constant 0 : i32
    return %c0_i32, %c0_i32_0 : i32, i32
  }
  func.func @transform_3(%arg0: i32) -> (i32, i32) {
    %c0_i32 = arith.constant 0 : i32
    %c0_i32_0 = arith.constant 0 : i32
    return %arg0, %c0_i32 : i32, i32
  }
  func.func @transform_4(%arg0: i32) -> (i32, i32) {
    %c0_i32 = arith.constant 0 : i32
    %c0_i32_0 = arith.constant 0 : i32
    return %arg0, %c0_i32 : i32, i32
  }
}

module attributes {stable_mosaic.version = 11 : i64} {
  func.func @_conv3x3_kernel(%arg0: i32, %arg1: i32, %arg2: memref<1x1x10x10x8xbf16, #tpu.memory_space<vmem>>, %arg3: memref<72x8xbf16, #tpu.memory_space<vmem>>, %arg4: memref<1x64x8xf32, #tpu.memory_space<vmem>>, %arg5: memref<1x2x8xf32, #tpu.memory_space<vmem>>) attributes {dimension_semantics = [#tpu.dimension_semantics<parallel>, #tpu.dimension_semantics<parallel>], iteration_bounds = array<i64: 2, 1>, scalar_prefetch = 0 : i64, scratch_operands = 0 : i64, tpu.core_type = #tpu.core_type<tc>, window_params = [{transform_indices = @transform_0, window_bounds = array<i64: 1, 1, 10, 10, 8>}, {transform_indices = @transform_1, window_bounds = array<i64: 72, 8>}, {transform_indices = @transform_2, window_bounds = array<i64: 1, 64, 8>}, {transform_indices = @transform_3, window_bounds = array<i64: 1, 2, 8>}]} {
    %c0 = arith.constant 0 : index
    %c0_0 = arith.constant 0 : index
    %c0_1 = arith.constant 0 : index
    %c0_2 = arith.constant 0 : index
    %c0_3 = arith.constant 0 : index
    %0 = vector.load %arg2[%c0, %c0_0, %c0_1, %c0_2, %c0_3] : memref<1x1x10x10x8xbf16, #tpu.memory_space<vmem>>, vector<1x1x8x8x8xbf16>
    %1 = vector.shape_cast %0 : vector<1x1x8x8x8xbf16> to vector<8x8x8xbf16>
    %2 = arith.extf %1 : vector<8x8x8xbf16> to vector<8x8x8xf32>
    %c0_4 = arith.constant 0 : index
    %c0_5 = arith.constant 0 : index
    %c0_6 = arith.constant 0 : index
    %c1 = arith.constant 1 : index
    %c0_7 = arith.constant 0 : index
    %3 = vector.load %arg2[%c0_4, %c0_5, %c0_6, %c1, %c0_7] : memref<1x1x10x10x8xbf16, #tpu.memory_space<vmem>>, vector<1x1x8x8x8xbf16>
    %4 = vector.shape_cast %3 : vector<1x1x8x8x8xbf16> to vector<8x8x8xbf16>
    %5 = arith.extf %4 : vector<8x8x8xbf16> to vector<8x8x8xf32>
    %c0_8 = arith.constant 0 : index
    %c0_9 = arith.constant 0 : index
    %c0_10 = arith.constant 0 : index
    %c2 = arith.constant 2 : index
    %c0_11 = arith.constant 0 : index
    %6 = vector.load %arg2[%c0_8, %c0_9, %c0_10, %c2, %c0_11] : memref<1x1x10x10x8xbf16, #tpu.memory_space<vmem>>, vector<1x1x8x8x8xbf16>
    %7 = vector.shape_cast %6 : vector<1x1x8x8x8xbf16> to vector<8x8x8xbf16>
    %8 = arith.extf %7 : vector<8x8x8xbf16> to vector<8x8x8xf32>
    %c0_12 = arith.constant 0 : index
    %c0_13 = arith.constant 0 : index
    %c1_14 = arith.constant 1 : index
    %c0_15 = arith.constant 0 : index
    %c0_16 = arith.constant 0 : index
    %9 = vector.load %arg2[%c0_12, %c0_13, %c1_14, %c0_15, %c0_16] : memref<1x1x10x10x8xbf16, #tpu.memory_space<vmem>>, vector<1x1x8x8x8xbf16>
    %10 = vector.shape_cast %9 : vector<1x1x8x8x8xbf16> to vector<8x8x8xbf16>
    %11 = arith.extf %10 : vector<8x8x8xbf16> to vector<8x8x8xf32>
    %c0_17 = arith.constant 0 : index
    %c0_18 = arith.constant 0 : index
    %c1_19 = arith.constant 1 : index
    %c1_20 = arith.constant 1 : index
    %c0_21 = arith.constant 0 : index
    %12 = vector.load %arg2[%c0_17, %c0_18, %c1_19, %c1_20, %c0_21] : memref<1x1x10x10x8xbf16, #tpu.memory_space<vmem>>, vector<1x1x8x8x8xbf16>
    %13 = vector.shape_cast %12 : vector<1x1x8x8x8xbf16> to vector<8x8x8xbf16>
    %14 = arith.extf %13 : vector<8x8x8xbf16> to vector<8x8x8xf32>
    %c0_22 = arith.constant 0 : index
    %c0_23 = arith.constant 0 : index
    %c1_24 = arith.constant 1 : index
    %c2_25 = arith.constant 2 : index
    %c0_26 = arith.constant 0 : index
    %15 = vector.load %arg2[%c0_22, %c0_23, %c1_24, %c2_25, %c0_26] : memref<1x1x10x10x8xbf16, #tpu.memory_space<vmem>>, vector<1x1x8x8x8xbf16>
    %16 = vector.shape_cast %15 : vector<1x1x8x8x8xbf16> to vector<8x8x8xbf16>
    %17 = arith.extf %16 : vector<8x8x8xbf16> to vector<8x8x8xf32>
    %c0_27 = arith.constant 0 : index
    %c0_28 = arith.constant 0 : index
    %c2_29 = arith.constant 2 : index
    %c0_30 = arith.constant 0 : index
    %c0_31 = arith.constant 0 : index
    %18 = vector.load %arg2[%c0_27, %c0_28, %c2_29, %c0_30, %c0_31] : memref<1x1x10x10x8xbf16, #tpu.memory_space<vmem>>, vector<1x1x8x8x8xbf16>
    %19 = vector.shape_cast %18 : vector<1x1x8x8x8xbf16> to vector<8x8x8xbf16>
    %20 = arith.extf %19 : vector<8x8x8xbf16> to vector<8x8x8xf32>
    %c0_32 = arith.constant 0 : index
    %c0_33 = arith.constant 0 : index
    %c2_34 = arith.constant 2 : index
    %c1_35 = arith.constant 1 : index
    %c0_36 = arith.constant 0 : index
    %21 = vector.load %arg2[%c0_32, %c0_33, %c2_34, %c1_35, %c0_36] : memref<1x1x10x10x8xbf16, #tpu.memory_space<vmem>>, vector<1x1x8x8x8xbf16>
    %22 = vector.shape_cast %21 : vector<1x1x8x8x8xbf16> to vector<8x8x8xbf16>
    %23 = arith.extf %22 : vector<8x8x8xbf16> to vector<8x8x8xf32>
    %c0_37 = arith.constant 0 : index
    %c0_38 = arith.constant 0 : index
    %c2_39 = arith.constant 2 : index
    %c2_40 = arith.constant 2 : index
    %c0_41 = arith.constant 0 : index
    %24 = vector.load %arg2[%c0_37, %c0_38, %c2_39, %c2_40, %c0_41] : memref<1x1x10x10x8xbf16, #tpu.memory_space<vmem>>, vector<1x1x8x8x8xbf16>
    %25 = vector.shape_cast %24 : vector<1x1x8x8x8xbf16> to vector<8x8x8xbf16>
    %26 = arith.extf %25 : vector<8x8x8xbf16> to vector<8x8x8xf32>
    %27 = tpu.concatenate %2, %5, %8, %11, %14, %17, %20, %23, %26 in 2 : vector<8x8x8xf32>, vector<8x8x8xf32>, vector<8x8x8xf32>, vector<8x8x8xf32>, vector<8x8x8xf32>, vector<8x8x8xf32>, vector<8x8x8xf32>, vector<8x8x8xf32>, vector<8x8x8xf32> -> vector<8x8x72xf32>
    %28 = vector.shape_cast %27 : vector<8x8x72xf32> to vector<64x72xf32>
    %29 = arith.truncf %28 : vector<64x72xf32> to vector<64x72xbf16>
    %c0_42 = arith.constant 0 : index
    %c0_43 = arith.constant 0 : index
    %30 = vector.load %arg3[%c0_42, %c0_43] : memref<72x8xbf16, #tpu.memory_space<vmem>>, vector<72x8xbf16>
    %cst = arith.constant dense<0.000000e+00> : vector<64x8xf32>
    %31 = tpu.matmul %29, %30, %cst {dimension_numbers = #tpu.dot_dimension_numbers<[1], [0], [0], [1], [0, 0, 1, 1], [], []>} : vector<64x72xbf16>, vector<72x8xbf16>, vector<64x8xf32> -> vector<64x8xf32>
    %c0_44 = arith.constant 0 : index
    %c0_45 = arith.constant 0 : index
    %c0_46 = arith.constant 0 : index
    %32 = vector.load %arg4[%c0_44, %c0_45, %c0_46] : memref<1x64x8xf32, #tpu.memory_space<vmem>>, vector<1x64x8xf32>
    %33 = vector.shape_cast %32 : vector<1x64x8xf32> to vector<64x8xf32>
    %34 = vector.shape_cast %31 : vector<64x8xf32> to vector<1x64x8xf32>
    tpu.vector_store %arg4[%c0_44, %c0_45, %c0_46], %34 {strides = array<i32>} : memref<1x64x8xf32, #tpu.memory_space<vmem>>, vector<1x64x8xf32>,
    %cst_47 = arith.constant dense<0.000000e+00> : vector<8xf32>
    %35 = vector.multi_reduction <add>, %31, %cst_47 [0] : vector<64x8xf32> to vector<8xf32>
    %36 = vector.shape_cast %35 : vector<8xf32> to vector<1x8xf32>
    %37 = arith.mulf %31, %31 : vector<64x8xf32>
    %cst_48 = arith.constant dense<0.000000e+00> : vector<8xf32>
    %38 = vector.multi_reduction <add>, %37, %cst_48 [0] : vector<64x8xf32> to vector<8xf32>
    %39 = vector.shape_cast %38 : vector<8xf32> to vector<1x8xf32>
    %40 = tpu.concatenate %36, %39 in 0 : vector<1x8xf32>, vector<1x8xf32> -> vector<2x8xf32>
    %c0_49 = arith.constant 0 : index
    %c0_50 = arith.constant 0 : index
    %c0_51 = arith.constant 0 : index
    %41 = vector.load %arg5[%c0_49, %c0_50, %c0_51] : memref<1x2x8xf32, #tpu.memory_space<vmem>>, vector<1x2x8xf32>
    %42 = vector.shape_cast %41 : vector<1x2x8xf32> to vector<2x8xf32>
    %43 = vector.shape_cast %40 : vector<2x8xf32> to vector<1x2x8xf32>
    tpu.vector_store %arg5[%c0_49, %c0_50, %c0_51], %43 {strides = array<i32>} : memref<1x2x8xf32, #tpu.memory_space<vmem>>, vector<1x2x8xf32>,
    return
  }
  func.func @transform_0(%arg0: i32, %arg1: i32) -> (i32, i32, i32, i32, i32) {
    %c0_i32 = arith.constant 0 : i32
    %c0_i32_0 = arith.constant 0 : i32
    %c0_i32_1 = arith.constant 0 : i32
    %c0_i32_2 = arith.constant 0 : i32
    %c0_i32_3 = arith.constant 0 : i32
    return %arg0, %c0_i32, %c0_i32_0, %c0_i32_1, %c0_i32_2 : i32, i32, i32, i32, i32
  }
  func.func @transform_1(%arg0: i32, %arg1: i32) -> (i32, i32) {
    %c0_i32 = arith.constant 0 : i32
    %c0_i32_0 = arith.constant 0 : i32
    return %c0_i32, %arg1 : i32, i32
  }
  func.func @transform_2(%arg0: i32, %arg1: i32) -> (i32, i32, i32) {
    %c0_i32 = arith.constant 0 : i32
    %c0_i32_0 = arith.constant 0 : i32
    return %arg0, %c0_i32, %arg1 : i32, i32, i32
  }
  func.func @transform_3(%arg0: i32, %arg1: i32) -> (i32, i32, i32) {
    %c0_i32 = arith.constant 0 : i32
    %c0_i32_0 = arith.constant 0 : i32
    return %arg0, %c0_i32, %arg1 : i32, i32, i32
  }
}

</mosaic_0001>

<llo_original>
// kernel: tile.43
$region0: #{tile.43}
  #allocation0 [shape = 's32[1]{0}', space=sflag, size = 0x4, scoped, tag = 'scoped memory for tile.43']
  %s0 = inlined_call_operand.vmem [shape: f32[8], index: 0, kind: input, shape index: {}]
  %s1 = inlined_call_operand.vmem [shape: f32[8,8], index: 1, kind: output, shape index: {}]
  // Predicated region
  $region2: #{tile.43} parent=0 // pred_check
    _
  $region3: #{tile.43} parent=0 // pred_check_branch
    %3 = sbr.rel (0) target = $region5
  $region4: #{tile.43} parent=0 // pred_region
    _
  $region5: #{tile.43} parent=0 // pred_fallthru
    _
  %v4 = vld [vmem:[%s0] ss:$0 sm:$0xff]
  %5 = vst [vmem:[%s1] sm:$0xff] %v4

// kernel: tile.44
$region0: #{tile.44}
  %s0 = inlined_call_operand.vmem [shape: f32[8,8], index: 0, kind: input, shape index: {}]
  %s1 = inlined_call_operand.hbm [shape: f32[1,64], index: 1, kind: output, shape index: {}]
  $region1: #{tile.44} parent=0
    #allocation0 [shape = 'u8[512]{0}', space=vmem, size = 0x400, scoped, tag = 'operand span for operand 1']
    #allocation1 [shape = 's32[1]{0}', space=sflag, size = 0x4, scoped, tag = 'scoped memory for tile.44']
    #allocation2 [shape = 'u8[4096]{0}', space=vmem, size = 0x1000, scoped, tag = 'scoped mem for output reshape']
    %2 = vsyncpa [#allocation1], 0
    %v3 = vld [vmem:[%s0] sm:$0x1]
    %vm4 = vcmask 64512
    %5 = vst.msk [vmem:[#allocation2] sm:$0x1] %vm4, %v3
    %s6 = scalar_lea.vmem %s0, 7
    %v7 = vld [vmem:[%s6] sm:$0x1]
    %8 = vrot.lane.b32.xlu0 %v7, 56
    %v9 = vpop.permute.xlu0 %8
    %vm10 = vcmask 523712
    %11 = vst.msk [vmem:[#allocation2] sm:$0x1] %vm10, %v9
    %s12 = scalar_lea.vmem %s0, 6
    %v13 = vld [vmem:[%s12] sm:$0x1]
    %14 = vrot.lane.b32.xlu0 %v13, 48
    %v15 = vpop.permute.xlu0 %14
    %vm16 = vcmask 458112
    %17 = vst.msk [vmem:[#allocation2] sm:$0x1] %vm16, %v15
    %s18 = scalar_lea.vmem %s0, 5
    %v19 = vld [vmem:[%s18] sm:$0x1]
    %20 = vrot.lane.b32.xlu0 %v19, 40
    %v21 = vpop.permute.xlu0 %20
    %vm22 = vcmask 392512
    %23 = vst.msk [vmem:[#allocation2] sm:$0x1] %vm22, %v21
    %s24 = scalar_lea.vmem %s0, 4
    %v25 = vld [vmem:[%s24] sm:$0x1]
    %26 = vrot.lane.b32.xlu0 %v25, 32
    %v27 = vpop.permute.xlu0 %26
    %vm28 = vcmask 326912
    %29 = vst.msk [vmem:[#allocation2] sm:$0x1] %vm28, %v27
    %s30 = scalar_lea.vmem %s0, 3
    %v31 = vld [vmem:[%s30] sm:$0x1]
    %32 = vrot.lane.b32.xlu0 %v31, 24
    %v33 = vpop.permute.xlu0 %32
    %vm34 = vcmask 261312
    %35 = vst.msk [vmem:[#allocation2] sm:$0x1] %vm34, %v33
    %s36 = scalar_lea.vmem %s0, 2
    %v37 = vld [vmem:[%s36] sm:$0x1]
    %38 = vrot.lane.b32.xlu0 %v37, 16
    %v39 = vpop.permute.xlu0 %38
    %vm40 = vcmask 195712
    %41 = vst.msk [vmem:[#allocation2] sm:$0x1] %vm40, %v39
    %s42 = scalar_lea.vmem %s0, 1
    %v43 = vld [vmem:[%s42] sm:$0x1]
    %44 = vrot.lane.b32.xlu0 %v43, 8
    %v45 = vpop.permute.xlu0 %44
    %vm46 = vcmask 130112
    %47 = vst.msk [vmem:[#allocation2] sm:$0x1] %vm46, %v45
    %s49 = sshllo.u32 0, 1
    %v51 = vld [vmem:[#allocation2] sm:%s49]
    %s52 = sshllo.u32 0, 1
    %53 = vst [vmem:[#allocation0] sm:%s52] %v51
    %s55 = ssub.s32 16, 16
    %56 = vsyncadd [#allocation1], %s55
    %s58 = sshll.u32 [#allocation0], 4
    %s59 = int_to_ptr.vmem [resolvable:$true] %s58
    %61 = dma.vmem_to_hbm [thread:$0]  %s59, 16, %s1, [#allocation1]
    %62 = dma.done [#allocation1], 16
    %63 = vsyncpa [#allocation1], 1

// kernel: basic_block_forward.10
$region0: #{basic_block_forward.10}
  #allocation0 [shape = 'u32[]', space=smem, size = 0x4, offset = 0x4, fixed_abs, tag = 'smem constant byte address 0x4 - core index']
  #allocation1 [shape = 'u32[144,128]{1,0:T(1,128)}', space=vmem, size = 0x12000, scoped, tag = 'internal scratch']
  %s0 = inlined_call_operand.hbm [shape: f32[16,64], index: 0, kind: input, shape index: {}, may-alias: {0,3}]
  %s1 = inlined_call_operand.hbm [shape: f32[1,64], index: 1, kind: input, shape index: {}]
  %s2 = inlined_call_operand.hbm [shape: f32[1,64], index: 2, kind: input, shape index: {}]
  %s3 = inlined_call_operand.hbm [shape: f32[16,64], index: 3, kind: output, shape index: {}, may-alias: {0,3}]
  %s4 = sld [smem:[#allocation0]]
  $region34: #{basic_block_forward.10} parent=0
    _
  %s6 = ssub.s32 1, %s4
  %s7 = scalar_select 0, %s6, %s4
  $region1: #{basic_block_forward.10} parent=0
    #allocation2 [shape = 'u8[8192]{0}', space=vmem, size = 0x2000, scoped, tag = 'input window, operand 0, single buffered']
    #allocation3 [shape = 's32[1]{0}', space=sflag, size = 0x4, scoped, tag = 'scoped memory for basic_block_forward.10']
    #allocation4 [shape = 's32[1]{0}', space=sflag, size = 0x4, scoped, tag = 'scoped memory for basic_block_forward.10']
    #allocation5 [shape = 'u8[512]{0}', space=vmem, size = 0x400, scoped, tag = 'input window, operand 1, single buffered']
    #allocation6 [shape = 's32[1]{0}', space=sflag, size = 0x4, scoped, tag = 'scoped memory for basic_block_forward.10']
    #allocation7 [shape = 'u8[512]{0}', space=vmem, size = 0x400, scoped, tag = 'input window, operand 2, single buffered']
    #allocation8 [shape = 'u8[8192]{0}', space=vmem, size = 0x2000, scoped, tag = 'output window, operand 0, single buffered']
    %8 = vsyncpa [#allocation3], 0
    %9 = vsyncpa [#allocation6], 0
    %10 = vsyncpa [#allocation4], 0
    // Predicated region
    $region2: #{basic_block_forward.10} parent=1 // pred_check
      _
    $region3: #{basic_block_forward.10} parent=1 // pred_check_branch
      %12 = sbr.rel (0) target = $region5
    $region4: #{basic_block_forward.10} parent=1 // pred_region
      %s14 = ssub.s32 256, 256
      %15 = vsyncadd [#allocation3], %s14
      %s16 = sshll.u32 [#allocation2], 4
      %s17 = int_to_ptr.vmem [resolvable:$true] %s16
      %22 = dma.hbm_to_vmem [thread:$0]  %s0, 256, %s17, [#allocation3], 128, 128, 8
    $region5: #{basic_block_forward.10} parent=1 // pred_fallthru
      _
    // Predicated region
    $region6: #{basic_block_forward.10} parent=1 // pred_check
      _
    $region7: #{basic_block_forward.10} parent=1 // pred_check_branch
      %24 = sbr.rel (0) target = $region9
    $region8: #{basic_block_forward.10} parent=1 // pred_region
      %s26 = ssub.s32 16, 16
      %27 = vsyncadd [#allocation6], %s26
      %s29 = sshll.u32 [#allocation5], 4
      %s30 = int_to_ptr.vmem [resolvable:$true] %s29
      %32 = dma.hbm_to_vmem [thread:$0]  %s1, 16, %s30, [#allocation6]
    $region9: #{basic_block_forward.10} parent=1 // pred_fallthru
      _
    // Predicated region
    $region10: #{basic_block_forward.10} parent=1 // pred_check
      _
    $region11: #{basic_block_forward.10} parent=1 // pred_check_branch
      %34 = sbr.rel (0) target = $region13
    $region12: #{basic_block_forward.10} parent=1 // pred_region
      %s36 = ssub.s32 16, 16
      %37 = vsyncadd [#allocation6], %s36
      %s39 = sshll.u32 [#allocation7], 4
      %s40 = int_to_ptr.vmem [resolvable:$true] %s39
      %42 = dma.hbm_to_vmem [thread:$0]  %s2, 16, %s40, [#allocation6]
    $region13: #{basic_block_forward.10} parent=1 // pred_fallthru
      _
    // Predicated region
    $region14: #{basic_block_forward.10} parent=1 // pred_check
      _
    $region15: #{basic_block_forward.10} parent=1 // pred_check_branch
      %44 = sbr.rel (0) target = $region17
    $region16: #{basic_block_forward.10} parent=1 // pred_region
      %45 = dma.done [#allocation3], 256
    $region17: #{basic_block_forward.10} parent=1 // pred_fallthru
      _
    // Predicated region
    $region18: #{basic_block_forward.10} parent=1 // pred_check
      _
    $region19: #{basic_block_forward.10} parent=1 // pred_check_branch
      %47 = sbr.rel (0) target = $region21
    $region20: #{basic_block_forward.10} parent=1 // pred_region
      %48 = dma.done [#allocation6], 16
    $region21: #{basic_block_forward.10} parent=1 // pred_fallthru
      _
    // Predicated region
    $region22: #{basic_block_forward.10} parent=1 // pred_check
      _
    $region23: #{basic_block_forward.10} parent=1 // pred_check_branch
      %50 = sbr.rel (0) target = $region25
    $region24: #{basic_block_forward.10} parent=1 // pred_region
      %51 = dma.done [#allocation6], 16
    $region25: #{basic_block_forward.10} parent=1 // pred_fallthru
      _
    %v52 = vld [vmem:[#allocation2] sm:$0xff]
    %v53 = vld [vmem:[#allocation2 + $0x8] sm:$0xff]
    %v54 = vld [vmem:[#allocation5] sm:$0x1]
    %v56 = vlaneseq
    %v57 = vshrl.u32 %v56, 7
    %v58 = vsub.s32 0, %v57
    %v59 = vrot.slane %v54, %v58
    %v61 = vmul.f32 %v52, %v59
    %v62 = vmul.f32 %v53, %v59
    %v63 = vld [vmem:[#allocation7] sm:$0x1]
    %v65 = vlaneseq
    %v66 = vshrl.u32 %v65, 7
    %v67 = vsub.s32 0, %v66
    %v68 = vrot.slane %v63, %v67
    %v70 = vadd.f32 %v61, %v68
    %v71 = vadd.f32 %v62, %v68
    %vm72 = vcmask 523264
    %73 = vst.msk [vmem:[#allocation8] sm:$0xff] %vm72, %v70
    %74 = vst.msk [vmem:[#allocation8 + $0x8] sm:$0xff] %vm72, %v71
    // Predicated region
    $region26: #{basic_block_forward.10} parent=1 // pred_check
      _
    $region27: #{basic_block_forward.10} parent=1 // pred_check_branch
      %76 = sbr.rel (0) target = $region29
    $region28: #{basic_block_forward.10} parent=1 // pred_region
      %s78 = ssub.s32 256, 256
      %79 = vsyncadd [#allocation4], %s78
      %s80 = sshll.u32 [#allocation8], 4
      %s81 = int_to_ptr.vmem [resolvable:$true] %s80
      %86 = dma.vmem_to_hbm [thread:$0]  %s81, 256, %s3, [#allocation4], 128, 128, 8
    $region29: #{basic_block_forward.10} parent=1 // pred_fallthru
      _
    // Predicated region
    $region30: #{basic_block_forward.10} parent=1 // pred_check
      _
    $region31: #{basic_block_forward.10} parent=1 // pred_check_branch
      %88 = sbr.rel (0) target = $region33
    $region32: #{basic_block_forward.10} parent=1 // pred_region
      %89 = dma.done [#allocation4], 256
    $region33: #{basic_block_forward.10} parent=1 // pred_fallthru
      _
    %90 = vsyncpa [#allocation3], 1
    %91 = vsyncpa [#allocation6], 1
    %92 = vsyncpa [#allocation4], 1

// kernel: basic_block_forward.9
$region0: #{basic_block_forward.9}
  #allocation0 [shape = 'u32[]', space=smem, size = 0x4, offset = 0x4, fixed_abs, tag = 'smem constant byte address 0x4 - core index']
  #allocation1 [shape = 'u32[144,128]{1,0:T(1,128)}', space=vmem, size = 0x12000, scoped, tag = 'internal scratch']
  %s0 = inlined_call_operand.hbm [shape: bf16[128,4], index: 0, kind: input, shape index: {}]
  %s1 = inlined_call_operand.hbm [shape: bf16[4,8], index: 1, kind: input, shape index: {}]
  %s2 = inlined_call_operand.hbm [shape: f32[128,8], index: 2, kind: output, shape index: {0}]
  %s3 = inlined_call_operand.hbm [shape: f32[1,2,8], index: 3, kind: output, shape index: {1}]
  %4 = xla_tuple %s2, %s3
  %s5 = sld [smem:[#allocation0]]
  $region34: #{basic_block_forward.9} parent=0
    _
  %s7 = ssub.s32 1, %s5
  %s8 = scalar_select 0, %s7, %s5
  $region1: #{basic_block_forward.9} parent=0
    #allocation2 [shape = 'u8[32768]{0}', space=vmem, size = 0x8000, scoped, tag = 'input window, operand 0, single buffered']
    #allocation3 [shape = 's32[1]{0}', space=sflag, size = 0x4, scoped, tag = 'scoped memory for basic_block_forward.9']
    #allocation4 [shape = 's32[1]{0}', space=sflag, size = 0x4, scoped, tag = 'scoped memory for basic_block_forward.9']
    #allocation5 [shape = 'u8[1024]{0}', space=vmem, size = 0x400, scoped, tag = 'input window, operand 1, single buffered']
    #allocation6 [shape = 's32[1]{0}', space=sflag, size = 0x4, scoped, tag = 'scoped memory for basic_block_forward.9']
    #allocation7 [shape = 'u8[65536]{0}', space=vmem, size = 0x10000, scoped, tag = 'output window, operand 0, single buffered']
    #allocation8 [shape = 'u8[1024]{0}', space=vmem, size = 0x400, scoped, tag = 'output window, operand 1, single buffered']
    #allocation9 [shape = 's32[1]{0}', space=sflag, size = 0x4, scoped, tag = 'scoped memory for basic_block_forward.9']
    %9 = vsyncpa [#allocation3], 0
    %10 = vsyncpa [#allocation6], 0
    %11 = vsyncpa [#allocation4], 0
    %12 = vsyncpa [#allocation9], 0
    // Predicated region
    $region2: #{basic_block_forward.9} parent=1 // pred_check
      _
    $region3: #{basic_block_forward.9} parent=1 // pred_check_branch
      %14 = sbr.rel (0) target = $region5
    $region4: #{basic_block_forward.9} parent=1 // pred_region
      %s16 = ssub.s32 1024, 1024
      %17 = vsyncadd [#allocation3], %s16
      %s18 = sshll.u32 [#allocation2], 4
      %s19 = int_to_ptr.vmem [resolvable:$true] %s18
      %24 = dma.hbm_to_vmem [thread:$0]  %s0, 1024, %s19, [#allocation3], 64, 64, 4
    $region5: #{basic_block_forward.9} parent=1 // pred_fallthru
      _
    // Predicated region
    $region6: #{basic_block_forward.9} parent=1 // pred_check
      _
    $region7: #{basic_block_forward.9} parent=1 // pred_check_branch
      %26 = sbr.rel (0) target = $region9
    $region8: #{basic_block_forward.9} parent=1 // pred_region
      %s28 = ssub.s32 32, 32
      %29 = vsyncadd [#allocation6], %s28
      %s31 = sshll.u32 [#allocation5], 4
      %s32 = int_to_ptr.vmem [resolvable:$true] %s31
      %34 = dma.hbm_to_vmem [thread:$0]  %s1, 32, %s32, [#allocation6]
    $region9: #{basic_block_forward.9} parent=1 // pred_fallthru
      _
    // Predicated region
    $region10: #{basic_block_forward.9} parent=1 // pred_check
      _
    $region11: #{basic_block_forward.9} parent=1 // pred_check_branch
      %36 = sbr.rel (0) target = $region13
    $region12: #{basic_block_forward.9} parent=1 // pred_region
      %37 = dma.done [#allocation3], 1024
    $region13: #{basic_block_forward.9} parent=1 // pred_fallthru
      _
    // Predicated region
    $region14: #{basic_block_forward.9} parent=1 // pred_check
      _
    $region15: #{basic_block_forward.9} parent=1 // pred_check_branch
      %39 = sbr.rel (0) target = $region17
    $region16: #{basic_block_forward.9} parent=1 // pred_region
      %40 = dma.done [#allocation6], 32
    $region17: #{basic_block_forward.9} parent=1 // pred_fallthru
      _
    %v42 = vld [vmem:[#allocation2] sm:$0xf]
    %v43 = vld [vmem:[#allocation2 + $0x4] sm:$0xf]
    %v44 = vld [vmem:[#allocation2 + $0x8] sm:$0xf]
    %v45 = vld [vmem:[#allocation2 + $0xc] sm:$0xf]
    %v46 = vld [vmem:[#allocation2 + $0x10] sm:$0xf]
    %v47 = vld [vmem:[#allocation2 + $0x14] sm:$0xf]
    %v48 = vld [vmem:[#allocation2 + $0x18] sm:$0xf]
    %v49 = vld [vmem:[#allocation2 + $0x1c] sm:$0xf]
    %v50 = vld [vmem:[#allocation2 + $0x20] sm:$0xf]
    %v51 = vld [vmem:[#allocation2 + $0x24] sm:$0xf]
    %v52 = vld [vmem:[#allocation2 + $0x28] sm:$0xf]
    %v53 = vld [vmem:[#allocation2 + $0x2c] sm:$0xf]
    %v54 = vld [vmem:[#allocation2 + $0x30] sm:$0xf]
    %v55 = vld [vmem:[#allocation2 + $0x34] sm:$0xf]
    %v56 = vld [vmem:[#allocation2 + $0x38] sm:$0xf]
    %v57 = vld [vmem:[#allocation2 + $0x3c] sm:$0xf]
    %v58 = vld [vmem:[#allocation5] sm:$0x3]
    %v75 = vunpack.c.l.b16 %v42
    %v76 = vunpack.c.l.b16 %v43
    %v77 = vunpack.c.l.b16 %v44
    %v78 = vunpack.c.l.b16 %v45
    %v79 = vunpack.c.l.b16 %v46
    %v80 = vunpack.c.l.b16 %v47
    %v81 = vunpack.c.l.b16 %v48
    %v82 = vunpack.c.l.b16 %v49
    %v83 = vunpack.c.l.b16 %v50
    %v84 = vunpack.c.l.b16 %v51
    %v85 = vunpack.c.l.b16 %v52
    %v86 = vunpack.c.l.b16 %v53
    %v87 = vunpack.c.l.b16 %v54
    %v88 = vunpack.c.l.b16 %v55
    %v89 = vunpack.c.l.b16 %v56
    %v90 = vunpack.c.l.b16 %v57
    %v91 = vpack.c.b16 %v76, %v75
    %v92 = vpack.c.b16 %v78, %v77
    %v93 = vpack.c.b16 %v80, %v79
    %v94 = vpack.c.b16 %v82, %v81
    %v95 = vpack.c.b16 %v84, %v83
    %v96 = vpack.c.b16 %v86, %v85
    %v97 = vpack.c.b16 %v88, %v87
    %v98 = vpack.c.b16 %v90, %v89
    %vm99 = vcmask 31744
    %v101 = vsel %vm99, %v91, 0
    %v104 = vsel %vm99, %v92, 0
    %v107 = vsel %vm99, %v93, 0
    %v110 = vsel %vm99, %v94, 0
    %v113 = vsel %vm99, %v95, 0
    %v116 = vsel %vm99, %v96, 0
    %v119 = vsel %vm99, %v97, 0
    %v122 = vsel %vm99, %v98, 0
    %vm124 = vcmask 1041408
    %v126 = vsel %vm124, %v58, 0
    %128 = vmatprep.subr.bf16.mxu0 0
    %129 = vmatpush1.bf16.msra.mxu0 %v126
    %130 = vmatprep.subr.bf16.mxu0 0
    %131 = vmatpush1.bf16.msra.mxu0 0
    %132 = vmatprep.subr.bf16.mxu0 0
    %133 = vmatpush1.bf16.msra.mxu0 0
    %134 = vmatprep.subr.bf16.mxu0 0
    %135 = vmatpush1.bf16.msra.mxu0 0
    %136 = vmatprep.subr.bf16.mxu0 0
    %137 = vmatpush1.bf16.msra.mxu0 0
    %138 = vmatprep.subr.bf16.mxu0 0
    %139 = vmatpush1.bf16.msra.mxu0 0
    %140 = vmatprep.subr.bf16.mxu0 0
    %141 = vmatpush1.bf16.msra.mxu0 0
    %142 = vmatprep.subr.bf16.mxu0 0
    %143 = vmatpush1.bf16.msra.mxu0 0
    %144 = vmatprep.subr.bf16.mxu0 0
    %145 = vmatpush1.bf16.msra.mxu0 0
    %146 = vmatprep.subr.bf16.mxu0 0
    %147 = vmatpush1.bf16.msra.mxu0 0
    %148 = vmatprep.subr.bf16.mxu0 0
    %149 = vmatpush1.bf16.msra.mxu0 0
    %150 = vmatprep.subr.bf16.mxu0 0
    %151 = vmatpush1.bf16.msra.mxu0 0
    %152 = vmatprep.subr.bf16.mxu0 0
    %153 = vmatpush1.bf16.msra.mxu0 0
    %154 = vmatprep.subr.bf16.mxu0 0
    %155 = vmatpush1.bf16.msra.mxu0 0
    %156 = vmatprep.subr.bf16.mxu0 0
    %157 = vmatpush1.bf16.msra.mxu0 0
    %158 = vmatprep.subr.bf16.mxu0 0
    %159 = vmatpush1.bf16.msra.mxu0 0
    %160 = vmatprep.mubr.bf16.mxu0 0
    %161 = vmatmul.mubr.bf16.gmra.mrb[0].mxu0 %v101
    %v162 = vpop.f32.mrb[0].mxu0
    %v163 = vadd.f32 0.0, %v162
    %v164 = vpop.f32.mrb[0].mxu0
    %v165 = vpop.f32.mrb[0].mxu0
    %v166 = vadd.f32 0.0, %v165
    %v167 = vpop.f32.mrb[0].mxu0
    %168 = vmatprep.mubr.bf16.mxu0 0
    %169 = vmatmul.mubr.bf16.gmra.mrb[0].mxu0 %v104
    %v170 = vpop.f32.mrb[0].mxu0
    %v171 = vadd.f32 0.0, %v170
    %v172 = vpop.f32.mrb[0].mxu0
    %v173 = vpop.f32.mrb[0].mxu0
    %v174 = vadd.f32 0.0, %v173
    %v175 = vpop.f32.mrb[0].mxu0
    %176 = vmatprep.mubr.bf16.mxu0 0
    %177 = vmatmul.mubr.bf16.gmra.mrb[0].mxu0 %v107
    %v178 = vpop.f32.mrb[0].mxu0
    %v179 = vadd.f32 0.0, %v178
    %v180 = vpop.f32.mrb[0].mxu0
    %v181 = vpop.f32.mrb[0].mxu0
    %v182 = vadd.f32 0.0, %v181
    %v183 = vpop.f32.mrb[0].mxu0
    %184 = vmatprep.mubr.bf16.mxu0 0
    %185 = vmatmul.mubr.bf16.gmra.mrb[0].mxu0 %v110
    %v186 = vpop.f32.mrb[0].mxu0
    %v187 = vadd.f32 0.0, %v186
    %v188 = vpop.f32.mrb[0].mxu0
    %v189 = vpop.f32.mrb[0].mxu0
    %v190 = vadd.f32 0.0, %v189
    %v191 = vpop.f32.mrb[0].mxu0
    %192 = vmatprep.mubr.bf16.mxu0 0
    %193 = vmatmul.mubr.bf16.gmra.mrb[0].mxu0 %v113
    %v194 = vpop.f32.mrb[0].mxu0
    %v195 = vadd.f32 0.0, %v194
    %v196 = vpop.f32.mrb[0].mxu0
    %v197 = vpop.f32.mrb[0].mxu0
    %v198 = vadd.f32 0.0, %v197
    %v199 = vpop.f32.mrb[0].mxu0
    %200 = vmatprep.mubr.bf16.mxu0 0
    %201 = vmatmul.mubr.bf16.gmra.mrb[0].mxu0 %v116
    %v202 = vpop.f32.mrb[0].mxu0
    %v203 = vadd.f32 0.0, %v202
    %v204 = vpop.f32.mrb[0].mxu0
    %v205 = vpop.f32.mrb[0].mxu0
    %v206 = vadd.f32 0.0, %v205
    %v207 = vpop.f32.mrb[0].mxu0
    %208 = vmatprep.mubr.bf16.mxu0 0
    %209 = vmatmul.mubr.bf16.gmra.mrb[0].mxu0 %v119
    %v210 = vpop.f32.mrb[0].mxu0
    %v211 = vadd.f32 0.0, %v210
    %v212 = vpop.f32.mrb[0].mxu0
    %v213 = vpop.f32.mrb[0].mxu0
    %v214 = vadd.f32 0.0, %v213
    %v215 = vpop.f32.mrb[0].mxu0
    %216 = vmatprep.mubr.bf16.mxu0 0
    %217 = vmatmul.mubr.bf16.gmra.mrb[0].mxu0 %v122
    %v218 = vpop.f32.mrb[0].mxu0
    %v219 = vadd.f32 0.0, %v218
    %v220 = vpop.f32.mrb[0].mxu0
    %v221 = vpop.f32.mrb[0].mxu0
    %v222 = vadd.f32 0.0, %v221
    %v223 = vpop.f32.mrb[0].mxu0
    %224 = vdwg.mxu0
    %vm225 = vcmask 64512
    %226 = vst.msk [vmem:[#allocation7] sm:$0xff] %vm225, %v163
    %227 = vst.msk [vmem:[#allocation7 + $0x8] sm:$0xff] %vm225, %v166
    %228 = vst.msk [vmem:[#allocation7 + $0x10] sm:$0xff] %vm225, %v171
    %229 = vst.msk [vmem:[#allocation7 + $0x18] sm:$0xff] %vm225, %v174
    %230 = vst.msk [vmem:[#allocation7 + $0x20] sm:$0xff] %vm225, %v179
    %231 = vst.msk [vmem:[#allocation7 + $0x28] sm:$0xff] %vm225, %v182
    %232 = vst.msk [vmem:[#allocation7 + $0x30] sm:$0xff] %vm225, %v187
    %233 = vst.msk [vmem:[#allocation7 + $0x38] sm:$0xff] %vm225, %v190
    %234 = vst.msk [vmem:[#allocation7 + $0x40] sm:$0xff] %vm225, %v195
    %235 = vst.msk [vmem:[#allocation7 + $0x48] sm:$0xff] %vm225, %v198
    %236 = vst.msk [vmem:[#allocation7 + $0x50] sm:$0xff] %vm225, %v203
    %237 = vst.msk [vmem:[#allocation7 + $0x58] sm:$0xff] %vm225, %v206
    %238 = vst.msk [vmem:[#allocation7 + $0x60] sm:$0xff] %vm225, %v211
    %239 = vst.msk [vmem:[#allocation7 + $0x68] sm:$0xff] %vm225, %v214
    %240 = vst.msk [vmem:[#allocation7 + $0x70] sm:$0xff] %vm225, %v219
    %241 = vst.msk [vmem:[#allocation7 + $0x78] sm:$0xff] %vm225, %v222
    %v242 = vsel %vm225, %v163, 0.0
    %v243 = vsel %vm225, %v166, 0.0
    %v244 = vadd.f32 %v242, %v243
    %v245 = vsel %vm225, %v171, 0.0
    %v246 = vadd.f32 %v244, %v245
    %v247 = vsel %vm225, %v174, 0.0
    %v248 = vadd.f32 %v246, %v247
    %v249 = vsel %vm225, %v179, 0.0
    %v250 = vadd.f32 %v248, %v249
    %v251 = vsel %vm225, %v182, 0.0
    %v252 = vadd.f32 %v250, %v251
    %v253 = vsel %vm225, %v187, 0.0
    %v254 = vadd.f32 %v252, %v253
    %v255 = vsel %vm225, %v190, 0.0
    %v256 = vadd.f32 %v254, %v255
    %v257 = vsel %vm225, %v195, 0.0
    %v258 = vadd.f32 %v256, %v257
    %v259 = vsel %vm225, %v198, 0.0
    %v260 = vadd.f32 %v258, %v259
    %v261 = vsel %vm225, %v203, 0.0
    %v262 = vadd.f32 %v260, %v261
    %v263 = vsel %vm225, %v206, 0.0
    %v264 = vadd.f32 %v262, %v263
    %v265 = vsel %vm225, %v211, 0.0
    %v266 = vadd.f32 %v264, %v265
    %v267 = vsel %vm225, %v214, 0.0
    %v268 = vadd.f32 %v266, %v267
    %v269 = vsel %vm225, %v219, 0.0
    %v270 = vadd.f32 %v268, %v269
    %v271 = vsel %vm225, %v222, 0.0
    %v272 = vadd.f32 %v270, %v271
    %v273 = vrot.slane %v272, 4
    %v274 = vadd.f32 %v272, %v273
    %v275 = vrot.slane %v274, 2
    %v276 = vadd.f32 %v274, %v275
    %v277 = vrot.slane %v276, 1
    %v278 = vadd.f32 %v276, %v277
    %v279 = vmul.f32 %v163, %v163
    %v280 = vmul.f32 %v166, %v166
    %v281 = vmul.f32 %v171, %v171
    %v282 = vmul.f32 %v174, %v174
    %v283 = vmul.f32 %v179, %v179
    %v284 = vmul.f32 %v182, %v182
    %v285 = vmul.f32 %v187, %v187
    %v286 = vmul.f32 %v190, %v190
    %v287 = vmul.f32 %v195, %v195
    %v288 = vmul.f32 %v198, %v198
    %v289 = vmul.f32 %v203, %v203
    %v290 = vmul.f32 %v206, %v206
    %v291 = vmul.f32 %v211, %v211
    %v292 = vmul.f32 %v214, %v214
    %v293 = vmul.f32 %v219, %v219
    %v294 = vmul.f32 %v222, %v222
    %v295 = vsel %vm225, %v279, 0.0
    %v296 = vsel %vm225, %v280, 0.0
    %v297 = vadd.f32 %v295, %v296
    %v298 = vsel %vm225, %v281, 0.0
    %v299 = vadd.f32 %v297, %v298
    %v300 = vsel %vm225, %v282, 0.0
    %v301 = vadd.f32 %v299, %v300
    %v302 = vsel %vm225, %v283, 0.0
    %v303 = vadd.f32 %v301, %v302
    %v304 = vsel %vm225, %v284, 0.0
    %v305 = vadd.f32 %v303, %v304
    %v306 = vsel %vm225, %v285, 0.0
    %v307 = vadd.f32 %v305, %v306
    %v308 = vsel %vm225, %v286, 0.0
    %v309 = vadd.f32 %v307, %v308
    %v310 = vsel %vm225, %v287, 0.0
    %v311 = vadd.f32 %v309, %v310
    %v312 = vsel %vm225, %v288, 0.0
    %v313 = vadd.f32 %v311, %v312
    %v314 = vsel %vm225, %v289, 0.0
    %v315 = vadd.f32 %v313, %v314
    %v316 = vsel %vm225, %v290, 0.0
    %v317 = vadd.f32 %v315, %v316
    %v318 = vsel %vm225, %v291, 0.0
    %v319 = vadd.f32 %v317, %v318
    %v320 = vsel %vm225, %v292, 0.0
    %v321 = vadd.f32 %v319, %v320
    %v322 = vsel %vm225, %v293, 0.0
    %v323 = vadd.f32 %v321, %v322
    %v324 = vsel %vm225, %v294, 0.0
    %v325 = vadd.f32 %v323, %v324
    %v326 = vrot.slane %v325, 4
    %v327 = vadd.f32 %v325, %v326
    %v328 = vrot.slane %v327, 2
    %v329 = vadd.f32 %v327, %v328
    %v330 = vrot.slane %v329, 1
    %v331 = vadd.f32 %v329, %v330
    %vm332 = vcmask 1040384
    %v333 = vsel %vm332, %v278, %v331
    %vm334 = vcmask 58368
    %335 = vst.msk [vmem:[#allocation8] sm:$0x3] %vm334, %v333
    // Predicated region
    $region18: #{basic_block_forward.9} parent=1 // pred_check
      _
    $region19: #{basic_block_forward.9} parent=1 // pred_check_branch
      %337 = sbr.rel (0) target = $region21
    $region20: #{basic_block_forward.9} parent=1 // pred_region
      %s339 = ssub.s32 2048, 2048
      %340 = vsyncadd [#allocation4], %s339
      %s341 = sshll.u32 [#allocation7], 4
      %s342 = int_to_ptr.vmem [resolvable:$true] %s341
      %347 = dma.vmem_to_hbm [thread:$0]  %s342, 2048, %s2, [#allocation4], 128, 128, 8
    $region21: #{basic_block_forward.9} parent=1 // pred_fallthru
      _
    // Predicated region
    $region22: #{basic_block_forward.9} parent=1 // pred_check
      _
    $region23: #{basic_block_forward.9} parent=1 // pred_check_branch
      %349 = sbr.rel (0) target = $region25
    $region24: #{basic_block_forward.9} parent=1 // pred_region
      %s351 = ssub.s32 32, 32
      %352 = vsyncadd [#allocation9], %s351
      %s354 = sshll.u32 [#allocation8], 4
      %s355 = int_to_ptr.vmem [resolvable:$true] %s354
      %357 = dma.vmem_to_hbm [thread:$0]  %s355, 32, %s3, [#allocation9]
    $region25: #{basic_block_forward.9} parent=1 // pred_fallthru
      _
    // Predicated region
    $region26: #{basic_block_forward.9} parent=1 // pred_check
      _
    $region27: #{basic_block_forward.9} parent=1 // pred_check_branch
      %359 = sbr.rel (0) target = $region29
    $region28: #{basic_block_forward.9} parent=1 // pred_region
      %360 = dma.done [#allocation4], 2048
    $region29: #{basic_block_forward.9} parent=1 // pred_fallthru
      _
    // Predicated region
    $region30: #{basic_block_forward.9} parent=1 // pred_check
      _
    $region31: #{basic_block_forward.9} parent=1 // pred_check_branch
      %362 = sbr.rel (0) target = $region33
    $region32: #{basic_block_forward.9} parent=1 // pred_region
      %363 = dma.done [#allocation9], 32
    $region33: #{basic_block_forward.9} parent=1 // pred_fallthru
      _
    %364 = vsyncpa [#allocation3], 1
    %365 = vsyncpa [#allocation6], 1
    %366 = vsyncpa [#allocation4], 1
    %367 = vsyncpa [#allocation9], 1

// kernel: basic_block_forward.7
$region0: #{basic_block_forward.7}
  #allocation0 [shape = 'u32[]', space=smem, size = 0x4, offset = 0x4, fixed_abs, tag = 'smem constant byte address 0x4 - core index']
  #allocation1 [shape = 'u32[144,128]{1,0:T(1,128)}', space=vmem, size = 0x12000, scoped, tag = 'internal scratch']
  %s0 = inlined_call_operand.hbm [shape: f32[16,64], index: 0, kind: input, shape index: {}, may-alias: {0,3}]
  %s1 = inlined_call_operand.hbm [shape: f32[1,64], index: 1, kind: input, shape index: {}]
  %s2 = inlined_call_operand.hbm [shape: f32[1,64], index: 2, kind: input, shape index: {}]
  %s3 = inlined_call_operand.hbm [shape: f32[16,64], index: 3, kind: output, shape index: {}, may-alias: {0,3}]
  %s4 = sld [smem:[#allocation0]]
  $region34: #{basic_block_forward.7} parent=0
    _
  %s6 = ssub.s32 1, %s4
  %s7 = scalar_select 0, %s6, %s4
  $region1: #{basic_block_forward.7} parent=0
    #allocation2 [shape = 'u8[8192]{0}', space=vmem, size = 0x2000, scoped, tag = 'input window, operand 0, single buffered']
    #allocation3 [shape = 's32[1]{0}', space=sflag, size = 0x4, scoped, tag = 'scoped memory for basic_block_forward.7']
    #allocation4 [shape = 's32[1]{0}', space=sflag, size = 0x4, scoped, tag = 'scoped memory for basic_block_forward.7']
    #allocation5 [shape = 'u8[512]{0}', space=vmem, size = 0x400, scoped, tag = 'input window, operand 1, single buffered']
    #allocation6 [shape = 's32[1]{0}', space=sflag, size = 0x4, scoped, tag = 'scoped memory for basic_block_forward.7']
    #allocation7 [shape = 'u8[512]{0}', space=vmem, size = 0x400, scoped, tag = 'input window, operand 2, single buffered']
    #allocation8 [shape = 'u8[8192]{0}', space=vmem, size = 0x2000, scoped, tag = 'output window, operand 0, single buffered']
    %8 = vsyncpa [#allocation3], 0
    %9 = vsyncpa [#allocation6], 0
    %10 = vsyncpa [#allocation4], 0
    // Predicated region
    $region2: #{basic_block_forward.7} parent=1 // pred_check
      _
    $region3: #{basic_block_forward.7} parent=1 // pred_check_branch
      %12 = sbr.rel (0) target = $region5
    $region4: #{basic_block_forward.7} parent=1 // pred_region
      %s14 = ssub.s32 256, 256
      %15 = vsyncadd [#allocation3], %s14
      %s16 = sshll.u32 [#allocation2], 4
      %s17 = int_to_ptr.vmem [resolvable:$true] %s16
      %22 = dma.hbm_to_vmem [thread:$0]  %s0, 256, %s17, [#allocation3], 128, 128, 8
    $region5: #{basic_block_forward.7} parent=1 // pred_fallthru
      _
    // Predicated region
    $region6: #{basic_block_forward.7} parent=1 // pred_check
      _
    $region7: #{basic_block_forward.7} parent=1 // pred_check_branch
      %24 = sbr.rel (0) target = $region9
    $region8: #{basic_block_forward.7} parent=1 // pred_region
      %s26 = ssub.s32 16, 16
      %27 = vsyncadd [#allocation6], %s26
      %s29 = sshll.u32 [#allocation5], 4
      %s30 = int_to_ptr.vmem [resolvable:$true] %s29
      %32 = dma.hbm_to_vmem [thread:$0]  %s1, 16, %s30, [#allocation6]
    $region9: #{basic_block_forward.7} parent=1 // pred_fallthru
      _
    // Predicated region
    $region10: #{basic_block_forward.7} parent=1 // pred_check
      _
    $region11: #{basic_block_forward.7} parent=1 // pred_check_branch
      %34 = sbr.rel (0) target = $region13
    $region12: #{basic_block_forward.7} parent=1 // pred_region
      %s36 = ssub.s32 16, 16
      %37 = vsyncadd [#allocation6], %s36
      %s39 = sshll.u32 [#allocation7], 4
      %s40 = int_to_ptr.vmem [resolvable:$true] %s39
      %42 = dma.hbm_to_vmem [thread:$0]  %s2, 16, %s40, [#allocation6]
    $region13: #{basic_block_forward.7} parent=1 // pred_fallthru
      _
    // Predicated region
    $region14: #{basic_block_forward.7} parent=1 // pred_check
      _
    $region15: #{basic_block_forward.7} parent=1 // pred_check_branch
      %44 = sbr.rel (0) target = $region17
    $region16: #{basic_block_forward.7} parent=1 // pred_region
      %45 = dma.done [#allocation3], 256
    $region17: #{basic_block_forward.7} parent=1 // pred_fallthru
      _
    // Predicated region
    $region18: #{basic_block_forward.7} parent=1 // pred_check
      _
    $region19: #{basic_block_forward.7} parent=1 // pred_check_branch
      %47 = sbr.rel (0) target = $region21
    $region20: #{basic_block_forward.7} parent=1 // pred_region
      %48 = dma.done [#allocation6], 16
    $region21: #{basic_block_forward.7} parent=1 // pred_fallthru
      _
    // Predicated region
    $region22: #{basic_block_forward.7} parent=1 // pred_check
      _
    $region23: #{basic_block_forward.7} parent=1 // pred_check_branch
      %50 = sbr.rel (0) target = $region25
    $region24: #{basic_block_forward.7} parent=1 // pred_region
      %51 = dma.done [#allocation6], 16
    $region25: #{basic_block_forward.7} parent=1 // pred_fallthru
      _
    %v52 = vld [vmem:[#allocation2] sm:$0xff]
    %v53 = vld [vmem:[#allocation2 + $0x8] sm:$0xff]
    %v54 = vld [vmem:[#allocation5] sm:$0x1]
    %v56 = vlaneseq
    %v57 = vshrl.u32 %v56, 7
    %v58 = vsub.s32 0, %v57
    %v59 = vrot.slane %v54, %v58
    %v61 = vmul.f32 %v52, %v59
    %v62 = vmul.f32 %v53, %v59
    %v63 = vld [vmem:[#allocation7] sm:$0x1]
    %v65 = vlaneseq
    %v66 = vshrl.u32 %v65, 7
    %v67 = vsub.s32 0, %v66
    %v68 = vrot.slane %v63, %v67
    %v70 = vadd.f32 %v61, %v68
    %v71 = vadd.f32 %v62, %v68
    %v72 = vmax.f32 %v70, 0.0
    %v73 = vmax.f32 %v71, 0.0
    %vm74 = vcmask 523264
    %75 = vst.msk [vmem:[#allocation8] sm:$0xff] %vm74, %v72
    %76 = vst.msk [vmem:[#allocation8 + $0x8] sm:$0xff] %vm74, %v73
    // Predicated region
    $region26: #{basic_block_forward.7} parent=1 // pred_check
      _
    $region27: #{basic_block_forward.7} parent=1 // pred_check_branch
      %78 = sbr.rel (0) target = $region29
    $region28: #{basic_block_forward.7} parent=1 // pred_region
      %s80 = ssub.s32 256, 256
      %81 = vsyncadd [#allocation4], %s80
      %s82 = sshll.u32 [#allocation8], 4
      %s83 = int_to_ptr.vmem [resolvable:$true] %s82
      %88 = dma.vmem_to_hbm [thread:$0]  %s83, 256, %s3, [#allocation4], 128, 128, 8
    $region29: #{basic_block_forward.7} parent=1 // pred_fallthru
      _
    // Predicated region
    $region30: #{basic_block_forward.7} parent=1 // pred_check
      _
    $region31: #{basic_block_forward.7} parent=1 // pred_check_branch
      %90 = sbr.rel (0) target = $region33
    $region32: #{basic_block_forward.7} parent=1 // pred_region
      %91 = dma.done [#allocation4], 256
    $region33: #{basic_block_forward.7} parent=1 // pred_fallthru
      _
    %92 = vsyncpa [#allocation3], 1
    %93 = vsyncpa [#allocation6], 1
    %94 = vsyncpa [#allocation4], 1

// kernel: basic_block_forward.6
$region0: #{basic_block_forward.6}
  #allocation0 [shape = 'u32[]', space=smem, size = 0x4, offset = 0x4, fixed_abs, tag = 'smem constant byte address 0x4 - core index']
  #allocation1 [shape = 'u32[144,128]{1,0:T(1,128)}', space=vmem, size = 0x12000, scoped, tag = 'internal scratch']
  %s0 = inlined_call_operand.hbm [shape: bf16[2,4,9,9,4], index: 0, kind: input, shape index: {}]
  %s1 = inlined_call_operand.hbm [shape: bf16[36,8], index: 1, kind: input, shape index: {}]
  %s2 = inlined_call_operand.hbm [shape: f32[2,64,8], index: 2, kind: output, shape index: {0}]
  %s3 = inlined_call_operand.hbm [shape: f32[2,2,8], index: 3, kind: output, shape index: {1}]
  %4 = xla_tuple %s2, %s3
  %s5 = sld [smem:[#allocation0]]
  $region57: #{basic_block_forward.6} parent=0
    _
  %s7 = ssub.s32 1, %s5
  %s8 = scalar_select 0, %s7, %s5
  $region1: #{basic_block_forward.6} parent=0
    #allocation2 [shape = 'u8[294912]{0}', space=vmem, size = 0x48000, scoped, tag = 'input window, operand 0']
    #allocation3 [shape = 's32[2]{0}', space=sflag, size = 0x8, scoped, tag = 'scoped memory for basic_block_forward.6']
    #allocation4 [shape = 's32[2]{0}', space=sflag, size = 0x8, scoped, tag = 'scoped memory for basic_block_forward.6']
    #allocation5 [shape = 'u8[10240]{0}', space=vmem, size = 0x2800, scoped, tag = 'input window, operand 1, single buffered']
    #allocation6 [shape = 's32[1]{0}', space=sflag, size = 0x4, scoped, tag = 'scoped memory for basic_block_forward.6']
    #allocation7 [shape = 'u8[65536]{0}', space=vmem, size = 0x10000, scoped, tag = 'output window, operand 0']
    #allocation8 [shape = 'u8[2048]{0}', space=vmem, size = 0x800, scoped, tag = 'output window, operand 1']
    #allocation9 [shape = 's32[2]{0}', space=sflag, size = 0x8, scoped, tag = 'scoped memory for basic_block_forward.6']
    %9 = vsyncpa [#allocation3], 0
    %s10 = scalar_lea.sflag [#allocation3], 1
    %11 = vsyncpa %s10, 0
    %12 = vsyncpa [#allocation6], 0
    %13 = vsyncpa [#allocation4], 0
    %s14 = scalar_lea.sflag [#allocation4], 1
    %15 = vsyncpa %s14, 0
    %16 = vsyncpa [#allocation9], 0
    %s17 = scalar_lea.sflag [#allocation9], 1
    %18 = vsyncpa %s17, 0
    loop: start=0, step=1, limit=4
    $region2: #{basic_block_forward.6} parent=1 // loop_pre_header
      _
    $region3: #{basic_block_forward.6} parent=1 // loop_header
      %s20 = sphi 0, %s24
      %p21 = scmp.ge.s32.totalorder %s20, 4
      %s27 = sphi 0, %s39
      %s28 = sphi 0, %s35
      %s29 = sphi 0, %s27
      %s30 = sphi 0, %s28
      %s31 = sphi 0, %s29
      %s32 = sphi 0, %s30
      %s42 = sphi 0, %s44
      %s45 = sphi 0, %s42
      %s46 = sphi 0, %s45
      %s62 = sphi 0, %s46
      %s68 = sphi 0, %s70
      %s71 = sphi 0, %s68
      %s72 = sphi 0, %s71
      %s88 = sphi 0, %s72
      %s96 = sphi 0, %s98
      %s99 = sphi 0, %s96
      %s100 = sphi 0, %s99
      %s116 = sphi 0, %s100
      %s124 = sphi 0, %s126
      %s127 = sphi 0, %s124
      %s128 = sphi 0, %s127
      %s144 = sphi 0, %s128
    $region4: #{basic_block_forward.6} parent=1 // loop_header_branch
      %23 = sbr.rel (%p21) target = $region8
    $region5: #{basic_block_forward.6} parent=1 // loop_body
      %s25 = ssub.s32 %s20, 1
      %s26 = ssub.s32 %s20, 2
      %s33 = sadd.s32 1, %s28
      %p34 = scmp.ge.s32.totalorder %s33, 1
      %s35 = scalar_select %p34, 0, %s33
      %s36 = sadd.s32 1, %s27
      %s37 = scalar_select %p34, %s36, %s27
      %p38 = scmp.ge.s32.totalorder %s37, 2
      %s39 = scalar_select %p38, 0, %s37
      %s40 = ssub.s32 %s27, %s39
      %p41 = scmp.eq.s32.totalorder %s40, 0
      %s43 = sadd.s32 %s42, 1
      %s44 = scalar_select %p41, %s42, %s43
      %p47 = pneg %p41
      %p48 = scmp.eq.s32.totalorder %s20, 1
      %p49 = por %p47, %p48
      %p50 = scmp.ne.s32.totalorder %s42, %s45
      %p51 = scmp.eq.s32.totalorder %s20, 0
      %p52 = por %p50, %p51
      %p53 = scmp.ne.s32.totalorder %s42, %s45
      %p54 = scmp.eq.s32.totalorder %s25, 1
      %p55 = por %p53, %p54
      %p56 = scmp.ne.s32.totalorder %s45, %s46
      %p57 = scmp.eq.s32.totalorder %s25, 0
      %p58 = por %p56, %p57
      %p59 = scmp.ne.s32.totalorder %s45, %s46
      %p60 = scmp.eq.s32.totalorder %s26, 1
      %p61 = por %p59, %p60
      %p63 = scmp.ne.s32.totalorder %s46, %s62
      %p64 = scmp.eq.s32.totalorder %s26, 0
      %p65 = por %p63, %p64
      %s66 = ssub.s32 %s28, %s35
      %p67 = scmp.eq.s32.totalorder %s66, 0
      %s69 = sadd.s32 %s68, 1
      %s70 = scalar_select %p67, %s68, %s69
      %p73 = pneg %p67
      %p74 = scmp.eq.s32.totalorder %s20, 1
      %p75 = por %p73, %p74
      %p76 = scmp.ne.s32.totalorder %s68, %s71
      %p77 = scmp.eq.s32.totalorder %s20, 0
      %p78 = por %p76, %p77
      %p79 = scmp.ne.s32.totalorder %s68, %s71
      %p80 = scmp.eq.s32.totalorder %s25, 1
      %p81 = por %p79, %p80
      %p82 = scmp.ne.s32.totalorder %s71, %s72
      %p83 = scmp.eq.s32.totalorder %s25, 0
      %p84 = por %p82, %p83
      %p85 = scmp.ne.s32.totalorder %s71, %s72
      %p86 = scmp.eq.s32.totalorder %s26, 1
      %p87 = por %p85, %p86
      %p89 = scmp.ne.s32.totalorder %s72, %s88
      %p90 = scmp.eq.s32.totalorder %s26, 0
      %p91 = por %p89, %p90
      %s92 = ssub.s32 %s27, %s39
      %s93 = ssub.s32 %s28, %s35
      %s94 = sor.u32 %s92, %s93
      %p95 = scmp.eq.s32.totalorder %s94, 0
      %s97 = sadd.s32 %s96, 1
      %s98 = scalar_select %p95, %s96, %s97
      %p101 = pneg %p95
      %p102 = scmp.eq.s32.totalorder %s20, 1
      %p103 = por %p101, %p102
      %p104 = scmp.ne.s32.totalorder %s96, %s99
      %p105 = scmp.eq.s32.totalorder %s20, 0
      %p106 = por %p104, %p105
      %p107 = scmp.ne.s32.totalorder %s96, %s99
      %p108 = scmp.eq.s32.totalorder %s25, 1
      %p109 = por %p107, %p108
      %p110 = scmp.ne.s32.totalorder %s99, %s100
      %p111 = scmp.eq.s32.totalorder %s25, 0
      %p112 = por %p110, %p111
      %p113 = scmp.ne.s32.totalorder %s99, %s100
      %p114 = scmp.eq.s32.totalorder %s26, 1
      %p115 = por %p113, %p114
      %p117 = scmp.ne.s32.totalorder %s100, %s116
      %p118 = scmp.eq.s32.totalorder %s26, 0
      %p119 = por %p117, %p118
      %s120 = ssub.s32 %s27, %s39
      %s121 = ssub.s32 %s28, %s35
      %s122 = sor.u32 %s120, %s121
      %p123 = scmp.eq.s32.totalorder %s122, 0
      %s125 = sadd.s32 %s124, 1
      %s126 = scalar_select %p123, %s124, %s125
      %p129 = pneg %p123
      %p130 = scmp.eq.s32.totalorder %s20, 1
      %p131 = por %p129, %p130
      %p132 = scmp.ne.s32.totalorder %s124, %s127
      %p133 = scmp.eq.s32.totalorder %s20, 0
      %p134 = por %p132, %p133
      %p135 = scmp.ne.s32.totalorder %s124, %s127
      %p136 = scmp.eq.s32.totalorder %s25, 1
      %p137 = por %p135, %p136
      %p138 = scmp.ne.s32.totalorder %s127, %s128
      %p139 = scmp.eq.s32.totalorder %s25, 0
      %p140 = por %p138, %p139
      %p141 = scmp.ne.s32.totalorder %s127, %s128
      %p142 = scmp.eq.s32.totalorder %s26, 1
      %p143 = por %p141, %p142
      %p145 = scmp.ne.s32.totalorder %s128, %s144
      %p146 = scmp.eq.s32.totalorder %s26, 0
      %p147 = por %p145, %p146
      %p148 = scmp.le.s32.totalorder 1, %s20
      %p149 = scmp.lt.s32.totalorder %s20, 3
      %p150 = pnand %p148, %p149
      %p151 = pneg %p150
      // Predicated region
      $region9: #{basic_block_forward.6} parent=5 // pred_check
        _
      $region10: #{basic_block_forward.6} parent=5 // pred_check_branch
        %153 = sbr.rel (%p150) target = $region12
      $region11: #{basic_block_forward.6} parent=5 // pred_region
        %s154 = ssub.s32 %s20, 1
        // Predicated region
        $region13: #{basic_block_forward.6} parent=11 // pred_check
          %p155 = pneg %p84
        $region14: #{basic_block_forward.6} parent=11 // pred_check_branch
          %157 = sbr.rel (%p155) target = $region16
        $region15: #{basic_block_forward.6} parent=11 // pred_region
          %s159 = ssub.s32 320, 320
          %160 = vsyncadd [#allocation6], %s159
          %s161 = smul.addr %s30, 64
          %s162 = scalar_lea.hbm %s1, %s161
          %s163 = sshll.u32 [#allocation5], 4
          %s164 = int_to_ptr.vmem [resolvable:$true] %s163
          %169 = dma.hbm_to_vmem [thread:$0]  %s162, 320, %s164, [#allocation6], 64, 64, 4
        $region16: #{basic_block_forward.6} parent=11 // pred_fallthru
          _
      $region12: #{basic_block_forward.6} parent=5 // pred_fallthru
        _
      %p170 = scmp.lt.s32.totalorder %s20, 2
      // Predicated region
      $region17: #{basic_block_forward.6} parent=5 // pred_check
        %p171 = pneg %p170
      $region18: #{basic_block_forward.6} parent=5 // pred_check_branch
        %173 = sbr.rel (%p171) target = $region20
      $region19: #{basic_block_forward.6} parent=5 // pred_region
        // Predicated region
        $region21: #{basic_block_forward.6} parent=19 // pred_check
          %p174 = pneg %p52
        $region22: #{basic_block_forward.6} parent=19 // pred_check_branch
          %176 = sbr.rel (%p174) target = $region24
        $region23: #{basic_block_forward.6} parent=19 // pred_region
          %s177 = sand.u32 %s42, 1
          %s178 = scalar_lea.sflag [#allocation3], %s177
          %s179 = sand.u32 %s42, 1
          %s180 = smul.addr %s179, 288
          %s181 = scalar_lea.vmem [#allocation2], %s180
          %s183 = ssub.s32 4608, 4608
          %184 = vsyncadd %s178, %s183
          %s185 = smul.addr %s27, 72
          %s186 = smul.addr %s185, 64
          %s187 = scalar_lea.hbm %s0, %s186
          %s188 = sshll.u32 %s181, 4
          %s189 = int_to_ptr.vmem [resolvable:$true] %s188
          %194 = dma.hbm_to_vmem [thread:$0]  %s187, 4608, %s189, %s178, 64, 64, 4
        $region24: #{basic_block_forward.6} parent=19 // pred_fallthru
          _
      $region20: #{basic_block_forward.6} parent=5 // pred_fallthru
        _
      %p195 = scmp.le.s32.totalorder 1, %s20
      %p196 = scmp.lt.s32.totalorder %s20, 3
      %p197 = pnand %p195, %p196
      %p198 = pneg %p197
      // Predicated region
      $region25: #{basic_block_forward.6} parent=5 // pred_check
        _
      $region26: #{basic_block_forward.6} parent=5 // pred_check_branch
        %200 = sbr.rel (%p197) target = $region28
      $region27: #{basic_block_forward.6} parent=5 // pred_region
        %s201 = ssub.s32 %s20, 1
        %s202 = sand.u32 %s45, 1
        %s203 = scalar_lea.sflag [#allocation3], %s202
        %s204 = sand.u32 %s45, 1
        %s205 = smul.addr %s204, 288
        %s206 = scalar_lea.vmem [#allocation2], %s205
        // Predicated region
        $region29: #{basic_block_forward.6} parent=27 // pred_check
          %p207 = pneg %p58
        $region30: #{basic_block_forward.6} parent=27 // pred_check_branch
          %209 = sbr.rel (%p207) target = $region32
        $region31: #{basic_block_forward.6} parent=27 // pred_region
          %210 = dma.done %s203, 4608
        $region32: #{basic_block_forward.6} parent=27 // pred_fallthru
          _
        // Predicated region
        $region33: #{basic_block_forward.6} parent=27 // pred_check
          %p211 = pneg %p84
        $region34: #{basic_block_forward.6} parent=27 // pred_check_branch
          %213 = sbr.rel (%p211) target = $region36
        $region35: #{basic_block_forward.6} parent=27 // pred_region
          %214 = dma.done [#allocation6], 320
        $region36: #{basic_block_forward.6} parent=27 // pred_fallthru
          _
        %s215 = sand.u32 %s45, 1
        %s216 = scalar_lea.sflag [#allocation3], %s215
        %s217 = sand.u32 %s45, 1
        %s218 = smul.addr %s217, 288
        %s219 = scalar_lea.vmem [#allocation2], %s218
        %p220 = pneg %p58
        %p221 = pneg %p55
        %p222 = pneg %p84
        %p223 = pneg %p81
        %p224 = pneg %p112
        %p225 = pneg %p109
        %s226 = sand.u32 %s99, 1
        %s227 = scalar_lea.sflag [#allocation4], %s226
        %s228 = sand.u32 %s99, 1
        %s229 = smul.addr %s228, 64
        %s230 = scalar_lea.vmem [#allocation7], %s229
        %p231 = pneg %p140
        %p232 = pneg %p137
        %s233 = sand.u32 %s127, 1
        %s234 = scalar_lea.sflag [#allocation9], %s233
        %s235 = sand.u32 %s127, 1
        %s236 = smul.addr %s235, 2
        %s237 = scalar_lea.vmem [#allocation8], %s236
        %v239 = vld [vmem:[%s206] sm:$0xf]
        %v240 = vld [vmem:[%s206 + $0x8] sm:$0xf]
        %v241 = vld [vmem:[%s206 + $0x10] sm:$0xf]
        %v242 = vld [vmem:[%s206 + $0x18] sm:$0xf]
        %v243 = vld [vmem:[%s206 + $0x20] sm:$0xf]
        %v244 = vld [vmem:[%s206 + $0x28] sm:$0xf]
        %v245 = vld [vmem:[%s206 + $0x30] sm:$0xf]
        %v246 = vld [vmem:[%s206 + $0x38] sm:$0xf]
        %v247 = vunpack.c.l.bf16 %v239
        %v248 = vunpack.c.l.bf16 %v240
        %v249 = vunpack.c.l.bf16 %v241
        %v250 = vunpack.c.l.bf16 %v242
        %v251 = vunpack.c.l.bf16 %v243
        %v252 = vunpack.c.l.bf16 %v244
        %v253 = vunpack.c.l.bf16 %v245
        %v254 = vunpack.c.l.bf16 %v246
        %s255 = scalar_lea.vmem %s206, 72 [#allocation2]
        %v256 = vld [vmem:[%s255] sm:$0xf]
        %v257 = vld [vmem:[%s255 + $0x8] sm:$0xf]
        %v258 = vld [vmem:[%s255 + $0x10] sm:$0xf]
        %v259 = vld [vmem:[%s255 + $0x18] sm:$0xf]
        %v260 = vld [vmem:[%s255 + $0x20] sm:$0xf]
        %v261 = vld [vmem:[%s255 + $0x28] sm:$0xf]
        %v262 = vld [vmem:[%s255 + $0x30] sm:$0xf]
        %v263 = vld [vmem:[%s255 + $0x38] sm:$0xf]
        %v264 = vunpack.c.l.bf16 %v256
        %v265 = vunpack.c.l.bf16 %v257
        %v266 = vunpack.c.l.bf16 %v258
        %v267 = vunpack.c.l.bf16 %v259
        %v268 = vunpack.c.l.bf16 %v260
        %v269 = vunpack.c.l.bf16 %v261
        %v270 = vunpack.c.l.bf16 %v262
        %v271 = vunpack.c.l.bf16 %v263
        %v272 = vld [vmem:[%s206 + $0x4] sm:$0x1]
        %v273 = vld [vmem:[%s206 + $0xc] sm:$0x1]
        %v274 = vld [vmem:[%s206 + $0x14] sm:$0x1]
        %v275 = vld [vmem:[%s206 + $0x1c] sm:$0x1]
        %v276 = vld [vmem:[%s206 + $0x24] sm:$0x1]
        %v277 = vld [vmem:[%s206 + $0x2c] sm:$0x1]
        %v278 = vld [vmem:[%s206 + $0x34] sm:$0x1]
        %v279 = vld [vmem:[%s206 + $0x3c] sm:$0x1]
        %v280 = vunpack.c.l.bf16 %v272
        %v281 = vunpack.c.l.bf16 %v273
        %v282 = vunpack.c.l.bf16 %v274
        %v283 = vunpack.c.l.bf16 %v275
        %v284 = vunpack.c.l.bf16 %v276
        %v285 = vunpack.c.l.bf16 %v277
        %v286 = vunpack.c.l.bf16 %v278
        %v287 = vunpack.c.l.bf16 %v279
        %s288 = scalar_lea.vmem %s206, 144 [#allocation2]
        %v289 = vld [vmem:[%s288] sm:$0xf]
        %v290 = vld [vmem:[%s288 + $0x8] sm:$0xf]
        %v291 = vld [vmem:[%s288 + $0x10] sm:$0xf]
        %v292 = vld [vmem:[%s288 + $0x18] sm:$0xf]
        %v293 = vld [vmem:[%s288 + $0x20] sm:$0xf]
        %v294 = vld [vmem:[%s288 + $0x28] sm:$0xf]
        %v295 = vld [vmem:[%s288 + $0x30] sm:$0xf]
        %v296 = vld [vmem:[%s288 + $0x38] sm:$0xf]
        %v297 = vunpack.c.l.bf16 %v289
        %v298 = vunpack.c.l.bf16 %v290
        %v299 = vunpack.c.l.bf16 %v291
        %v300 = vunpack.c.l.bf16 %v292
        %v301 = vunpack.c.l.bf16 %v293
        %v302 = vunpack.c.l.bf16 %v294
        %v303 = vunpack.c.l.bf16 %v295
        %v304 = vunpack.c.l.bf16 %v296
        %s305 = scalar_lea.vmem %s206, 216 [#allocation2]
        %v306 = vld [vmem:[%s305] sm:$0xf]
        %v307 = vld [vmem:[%s305 + $0x8] sm:$0xf]
        %v308 = vld [vmem:[%s305 + $0x10] sm:$0xf]
        %v309 = vld [vmem:[%s305 + $0x18] sm:$0xf]
        %v310 = vld [vmem:[%s305 + $0x20] sm:$0xf]
        %v311 = vld [vmem:[%s305 + $0x28] sm:$0xf]
        %v312 = vld [vmem:[%s305 + $0x30] sm:$0xf]
        %v313 = vld [vmem:[%s305 + $0x38] sm:$0xf]
        %v314 = vunpack.c.l.bf16 %v306
        %v315 = vunpack.c.l.bf16 %v307
        %v316 = vunpack.c.l.bf16 %v308
        %v317 = vunpack.c.l.bf16 %v309
        %v318 = vunpack.c.l.bf16 %v310
        %v319 = vunpack.c.l.bf16 %v311
        %v320 = vunpack.c.l.bf16 %v312
        %v321 = vunpack.c.l.bf16 %v313
        %v322 = vld [vmem:[%s288 + $0x4] sm:$0x1]
        %v323 = vld [vmem:[%s288 + $0xc] sm:$0x1]
        %v324 = vld [vmem:[%s288 + $0x14] sm:$0x1]
        %v325 = vld [vmem:[%s288 + $0x1c] sm:$0x1]
        %v326 = vld [vmem:[%s288 + $0x24] sm:$0x1]
        %v327 = vld [vmem:[%s288 + $0x2c] sm:$0x1]
        %v328 = vld [vmem:[%s288 + $0x34] sm:$0x1]
        %v329 = vld [vmem:[%s288 + $0x3c] sm:$0x1]
        %v330 = vunpack.c.l.bf16 %v322
        %v331 = vunpack.c.l.bf16 %v323
        %v332 = vunpack.c.l.bf16 %v324
        %v333 = vunpack.c.l.bf16 %v325
        %v334 = vunpack.c.l.bf16 %v326
        %v335 = vunpack.c.l.bf16 %v327
        %v336 = vunpack.c.l.bf16 %v328
        %v337 = vunpack.c.l.bf16 %v329
        %s338 = scalar_lea.vmem %s206, 8 [#allocation2]
        %v339 = vld [vmem:[%s338] sm:$0xf]
        %v340 = vld [vmem:[%s338 + $0x8] sm:$0xf]
        %v341 = vld [vmem:[%s338 + $0x10] sm:$0xf]
        %v342 = vld [vmem:[%s338 + $0x18] sm:$0xf]
        %v343 = vld [vmem:[%s338 + $0x20] sm:$0xf]
        %v344 = vld [vmem:[%s338 + $0x28] sm:$0xf]
        %v345 = vld [vmem:[%s338 + $0x30] sm:$0xf]
        %v346 = vld [vmem:[%s338 + $0x38] sm:$0xf]
        %v347 = vunpack.c.l.bf16 %v339
        %v348 = vunpack.c.l.bf16 %v340
        %v349 = vunpack.c.l.bf16 %v341
        %v350 = vunpack.c.l.bf16 %v342
        %v351 = vunpack.c.l.bf16 %v343
        %v352 = vunpack.c.l.bf16 %v344
        %v353 = vunpack.c.l.bf16 %v345
        %v354 = vunpack.c.l.bf16 %v346
        %s355 = scalar_lea.vmem %s206, 80 [#allocation2]
        %v356 = vld [vmem:[%s355] sm:$0xf]
        %v357 = vld [vmem:[%s355 + $0x8] sm:$0xf]
        %v358 = vld [vmem:[%s355 + $0x10] sm:$0xf]
        %v359 = vld [vmem:[%s355 + $0x18] sm:$0xf]
        %v360 = vld [vmem:[%s355 + $0x20] sm:$0xf]
        %v361 = vld [vmem:[%s355 + $0x28] sm:$0xf]
        %v362 = vld [vmem:[%s355 + $0x30] sm:$0xf]
        %v363 = vld [vmem:[%s355 + $0x38] sm:$0xf]
        %v364 = vunpack.c.l.bf16 %v356
        %v365 = vunpack.c.l.bf16 %v357
        %v366 = vunpack.c.l.bf16 %v358
        %v367 = vunpack.c.l.bf16 %v359
        %v368 = vunpack.c.l.bf16 %v360
        %v369 = vunpack.c.l.bf16 %v361
        %v370 = vunpack.c.l.bf16 %v362
        %v371 = vunpack.c.l.bf16 %v363
        %v372 = vld [vmem:[%s338 + $0x4] sm:$0x1]
        %v373 = vld [vmem:[%s338 + $0xc] sm:$0x1]
        %v374 = vld [vmem:[%s338 + $0x14] sm:$0x1]
        %v375 = vld [vmem:[%s338 + $0x1c] sm:$0x1]
        %v376 = vld [vmem:[%s338 + $0x24] sm:$0x1]
        %v377 = vld [vmem:[%s338 + $0x2c] sm:$0x1]
        %v378 = vld [vmem:[%s338 + $0x34] sm:$0x1]
        %v379 = vld [vmem:[%s338 + $0x3c] sm:$0x1]
        %v380 = vunpack.c.l.bf16 %v372
        %v381 = vunpack.c.l.bf16 %v373
        %v382 = vunpack.c.l.bf16 %v374
        %v383 = vunpack.c.l.bf16 %v375
        %v384 = vunpack.c.l.bf16 %v376
        %v385 = vunpack.c.l.bf16 %v377
        %v386 = vunpack.c.l.bf16 %v378
        %v387 = vunpack.c.l.bf16 %v379
        %396 = vrot.lane.b32.xlu0 %v264, 4
        %v397 = vpop.permute.xlu0 %396
        %398 = vrot.lane.b32.xlu0 %v265, 4
        %v399 = vpop.permute.xlu0 %398
        %400 = vrot.lane.b32.xlu0 %v266, 4
        %v401 = vpop.permute.xlu0 %400
        %402 = vrot.lane.b32.xlu0 %v267, 4
        %v403 = vpop.permute.xlu0 %402
        %404 = vrot.lane.b32.xlu0 %v268, 4
        %v405 = vpop.permute.xlu0 %404
        %406 = vrot.lane.b32.xlu0 %v269, 4
        %v407 = vpop.permute.xlu0 %406
        %408 = vrot.lane.b32.xlu0 %v270, 4
        %v409 = vpop.permute.xlu0 %408
        %410 = vrot.lane.b32.xlu0 %v271, 4
        %v411 = vpop.permute.xlu0 %410
        %vm436 = vcmask 1046528
        %v437 = vrot.slane %v247, 1
        %v438 = vrot.slane %v280, 1
        %v439 = vsel %vm436, %v437, %v438
        %v440 = vrot.slane %v248, 1
        %v441 = vrot.slane %v281, 1
        %v442 = vsel %vm436, %v440, %v441
        %v443 = vrot.slane %v249, 1
        %v444 = vrot.slane %v282, 1
        %v445 = vsel %vm436, %v443, %v444
        %v446 = vrot.slane %v250, 1
        %v447 = vrot.slane %v283, 1
        %v448 = vsel %vm436, %v446, %v447
        %v449 = vrot.slane %v251, 1
        %v450 = vrot.slane %v284, 1
        %v451 = vsel %vm436, %v449, %v450
        %v452 = vrot.slane %v252, 1
        %v453 = vrot.slane %v285, 1
        %v454 = vsel %vm436, %v452, %v453
        %v455 = vrot.slane %v253, 1
        %v456 = vrot.slane %v286, 1
        %v457 = vsel %vm436, %v455, %v456
        %v458 = vrot.slane %v254, 1
        %v459 = vrot.slane %v287, 1
        %v460 = vsel %vm436, %v458, %v459
        %461 = vrot.lane.b32.xlu0 %v439, 8
        %v462 = vpop.permute.xlu0 %461
        %463 = vrot.lane.b32.xlu0 %v442, 8
        %v464 = vpop.permute.xlu0 %463
        %465 = vrot.lane.b32.xlu0 %v445, 8
        %v466 = vpop.permute.xlu0 %465
        %467 = vrot.lane.b32.xlu0 %v448, 8
        %v468 = vpop.permute.xlu0 %467
        %469 = vrot.lane.b32.xlu0 %v451, 8
        %v470 = vpop.permute.xlu0 %469
        %471 = vrot.lane.b32.xlu0 %v454, 8
        %v472 = vpop.permute.xlu0 %471
        %473 = vrot.lane.b32.xlu0 %v457, 8
        %v474 = vpop.permute.xlu0 %473
        %475 = vrot.lane.b32.xlu0 %v460, 8
        %v476 = vpop.permute.xlu0 %475
        %493 = vrot.lane.b32.xlu0 %v297, 12
        %v494 = vpop.permute.xlu0 %493
        %495 = vrot.lane.b32.xlu0 %v298, 12
        %v496 = vpop.permute.xlu0 %495
        %497 = vrot.lane.b32.xlu0 %v299, 12
        %v498 = vpop.permute.xlu0 %497
        %499 = vrot.lane.b32.xlu0 %v300, 12
        %v500 = vpop.permute.xlu0 %499
        %501 = vrot.lane.b32.xlu0 %v301, 12
        %v502 = vpop.permute.xlu0 %501
        %503 = vrot.lane.b32.xlu0 %v302, 12
        %v504 = vpop.permute.xlu0 %503
        %505 = vrot.lane.b32.xlu0 %v303, 12
        %v506 = vpop.permute.xlu0 %505
        %507 = vrot.lane.b32.xlu0 %v304, 12
        %v508 = vpop.permute.xlu0 %507
        %525 = vrot.lane.b32.xlu0 %v314, 16
        %v526 = vpop.permute.xlu0 %525
        %527 = vrot.lane.b32.xlu0 %v315, 16
        %v528 = vpop.permute.xlu0 %527
        %529 = vrot.lane.b32.xlu0 %v316, 16
        %v530 = vpop.permute.xlu0 %529
        %531 = vrot.lane.b32.xlu0 %v317, 16
        %v532 = vpop.permute.xlu0 %531
        %533 = vrot.lane.b32.xlu0 %v318, 16
        %v534 = vpop.permute.xlu0 %533
        %535 = vrot.lane.b32.xlu0 %v319, 16
        %v536 = vpop.permute.xlu0 %535
        %537 = vrot.lane.b32.xlu0 %v320, 16
        %v538 = vpop.permute.xlu0 %537
        %539 = vrot.lane.b32.xlu0 %v321, 16
        %v540 = vpop.permute.xlu0 %539
        %v557 = vrot.slane %v297, 1
        %v558 = vrot.slane %v330, 1
        %v559 = vsel %vm436, %v557, %v558
        %v560 = vrot.slane %v298, 1
        %v561 = vrot.slane %v331, 1
        %v562 = vsel %vm436, %v560, %v561
        %v563 = vrot.slane %v299, 1
        %v564 = vrot.slane %v332, 1
        %v565 = vsel %vm436, %v563, %v564
        %v566 = vrot.slane %v300, 1
        %v567 = vrot.slane %v333, 1
        %v568 = vsel %vm436, %v566, %v567
        %v569 = vrot.slane %v301, 1
        %v570 = vrot.slane %v334, 1
        %v571 = vsel %vm436, %v569, %v570
        %v572 = vrot.slane %v302, 1
        %v573 = vrot.slane %v335, 1
        %v574 = vsel %vm436, %v572, %v573
        %v575 = vrot.slane %v303, 1
        %v576 = vrot.slane %v336, 1
        %v577 = vsel %vm436, %v575, %v576
        %v578 = vrot.slane %v304, 1
        %v579 = vrot.slane %v337, 1
        %v580 = vsel %vm436, %v578, %v579
        %581 = vrot.lane.b32.xlu0 %v559, 20
        %v582 = vpop.permute.xlu0 %581
        %583 = vrot.lane.b32.xlu0 %v562, 20
        %v584 = vpop.permute.xlu0 %583
        %585 = vrot.lane.b32.xlu0 %v565, 20
        %v586 = vpop.permute.xlu0 %585
        %587 = vrot.lane.b32.xlu0 %v568, 20
        %v588 = vpop.permute.xlu0 %587
        %589 = vrot.lane.b32.xlu0 %v571, 20
        %v590 = vpop.permute.xlu0 %589
        %591 = vrot.lane.b32.xlu0 %v574, 20
        %v592 = vpop.permute.xlu0 %591
        %593 = vrot.lane.b32.xlu0 %v577, 20
        %v594 = vpop.permute.xlu0 %593
        %595 = vrot.lane.b32.xlu0 %v580, 20
        %v596 = vpop.permute.xlu0 %595
        %613 = vrot.lane.b32.xlu0 %v347, 24
        %v614 = vpop.permute.xlu0 %613
        %615 = vrot.lane.b32.xlu0 %v348, 24
        %v616 = vpop.permute.xlu0 %615
        %617 = vrot.lane.b32.xlu0 %v349, 24
        %v618 = vpop.permute.xlu0 %617
        %619 = vrot.lane.b32.xlu0 %v350, 24
        %v620 = vpop.permute.xlu0 %619
        %621 = vrot.lane.b32.xlu0 %v351, 24
        %v622 = vpop.permute.xlu0 %621
        %623 = vrot.lane.b32.xlu0 %v352, 24
        %v624 = vpop.permute.xlu0 %623
        %625 = vrot.lane.b32.xlu0 %v353, 24
        %v626 = vpop.permute.xlu0 %625
        %627 = vrot.lane.b32.xlu0 %v354, 24
        %v628 = vpop.permute.xlu0 %627
        %645 = vrot.lane.b32.xlu0 %v364, 28
        %v646 = vpop.permute.xlu0 %645
        %647 = vrot.lane.b32.xlu0 %v365, 28
        %v648 = vpop.permute.xlu0 %647
        %649 = vrot.lane.b32.xlu0 %v366, 28
        %v650 = vpop.permute.xlu0 %649
        %651 = vrot.lane.b32.xlu0 %v367, 28
        %v652 = vpop.permute.xlu0 %651
        %653 = vrot.lane.b32.xlu0 %v368, 28
        %v654 = vpop.permute.xlu0 %653
        %655 = vrot.lane.b32.xlu0 %v369, 28
        %v656 = vpop.permute.xlu0 %655
        %657 = vrot.lane.b32.xlu0 %v370, 28
        %v658 = vpop.permute.xlu0 %657
        %659 = vrot.lane.b32.xlu0 %v371, 28
        %v660 = vpop.permute.xlu0 %659
        %v677 = vrot.slane %v347, 1
        %v678 = vrot.slane %v380, 1
        %v679 = vsel %vm436, %v677, %v678
        %v680 = vrot.slane %v348, 1
        %v681 = vrot.slane %v381, 1
        %v682 = vsel %vm436, %v680, %v681
        %v683 = vrot.slane %v349, 1
        %v684 = vrot.slane %v382, 1
        %v685 = vsel %vm436, %v683, %v684
        %v686 = vrot.slane %v350, 1
        %v687 = vrot.slane %v383, 1
        %v688 = vsel %vm436, %v686, %v687
        %v689 = vrot.slane %v351, 1
        %v690 = vrot.slane %v384, 1
        %v691 = vsel %vm436, %v689, %v690
        %v692 = vrot.slane %v352, 1
        %v693 = vrot.slane %v385, 1
        %v694 = vsel %vm436, %v692, %v693
        %v695 = vrot.slane %v353, 1
        %v696 = vrot.slane %v386, 1
        %v697 = vsel %vm436, %v695, %v696
        %v698 = vrot.slane %v354, 1
        %v699 = vrot.slane %v387, 1
        %v700 = vsel %vm436, %v698, %v699
        %701 = vrot.lane.b32.xlu0 %v679, 32
        %v702 = vpop.permute.xlu0 %701
        %703 = vrot.lane.b32.xlu0 %v682, 32
        %v704 = vpop.permute.xlu0 %703
        %705 = vrot.lane.b32.xlu0 %v685, 32
        %v706 = vpop.permute.xlu0 %705
        %707 = vrot.lane.b32.xlu0 %v688, 32
        %v708 = vpop.permute.xlu0 %707
        %709 = vrot.lane.b32.xlu0 %v691, 32
        %v710 = vpop.permute.xlu0 %709
        %711 = vrot.lane.b32.xlu0 %v694, 32
        %v712 = vpop.permute.xlu0 %711
        %713 = vrot.lane.b32.xlu0 %v697, 32
        %v714 = vpop.permute.xlu0 %713
        %715 = vrot.lane.b32.xlu0 %v700, 32
        %v716 = vpop.permute.xlu0 %715
        %vm725 = vcmask 31744
        %v726 = vsel %vm725, %v247, %v397
        %v727 = vsel %vm725, %v248, %v399
        %v728 = vsel %vm725, %v249, %v401
        %v729 = vsel %vm725, %v250, %v403
        %v730 = vsel %vm725, %v251, %v405
        %v731 = vsel %vm725, %v252, %v407
        %v732 = vsel %vm725, %v253, %v409
        %v733 = vsel %vm725, %v254, %v411
        %vm734 = vcmask 64512
        %v735 = vsel %vm734, %v726, %v462
        %v736 = vsel %vm734, %v727, %v464
        %v737 = vsel %vm734, %v728, %v466
        %v738 = vsel %vm734, %v729, %v468
        %v739 = vsel %vm734, %v730, %v470
        %v740 = vsel %vm734, %v731, %v472
        %v741 = vsel %vm734, %v732, %v474
        %v742 = vsel %vm734, %v733, %v476
        %vm743 = vcmask 97280
        %v744 = vsel %vm743, %v735, %v494
        %v745 = vsel %vm743, %v736, %v496
        %v746 = vsel %vm743, %v737, %v498
        %v747 = vsel %vm743, %v738, %v500
        %v748 = vsel %vm743, %v739, %v502
        %v749 = vsel %vm743, %v740, %v504
        %v750 = vsel %vm743, %v741, %v506
        %v751 = vsel %vm743, %v742, %v508
        %vm752 = vcmask 130048
        %v753 = vsel %vm752, %v744, %v526
        %v754 = vsel %vm752, %v745, %v528
        %v755 = vsel %vm752, %v746, %v530
        %v756 = vsel %vm752, %v747, %v532
        %v757 = vsel %vm752, %v748, %v534
        %v758 = vsel %vm752, %v749, %v536
        %v759 = vsel %vm752, %v750, %v538
        %v760 = vsel %vm752, %v751, %v540
        %vm761 = vcmask 162816
        %v762 = vsel %vm761, %v753, %v582
        %v763 = vsel %vm761, %v754, %v584
        %v764 = vsel %vm761, %v755, %v586
        %v765 = vsel %vm761, %v756, %v588
        %v766 = vsel %vm761, %v757, %v590
        %v767 = vsel %vm761, %v758, %v592
        %v768 = vsel %vm761, %v759, %v594
        %v769 = vsel %vm761, %v760, %v596
        %vm770 = vcmask 195584
        %v771 = vsel %vm770, %v762, %v614
        %v772 = vsel %vm770, %v763, %v616
        %v773 = vsel %vm770, %v764, %v618
        %v774 = vsel %vm770, %v765, %v620
        %v775 = vsel %vm770, %v766, %v622
        %v776 = vsel %vm770, %v767, %v624
        %v777 = vsel %vm770, %v768, %v626
        %v778 = vsel %vm770, %v769, %v628
        %vm779 = vcmask 228352
        %v780 = vsel %vm779, %v771, %v646
        %v781 = vsel %vm779, %v772, %v648
        %v782 = vsel %vm779, %v773, %v650
        %v783 = vsel %vm779, %v774, %v652
        %v784 = vsel %vm779, %v775, %v654
        %v785 = vsel %vm779, %v776, %v656
        %v786 = vsel %vm779, %v777, %v658
        %v787 = vsel %vm779, %v778, %v660
        %vm788 = vcmask 261120
        %v789 = vsel %vm788, %v780, %v702
        %v790 = vsel %vm788, %v781, %v704
        %v791 = vsel %vm788, %v782, %v706
        %v792 = vsel %vm788, %v783, %v708
        %v793 = vsel %vm788, %v784, %v710
        %v794 = vsel %vm788, %v785, %v712
        %v795 = vsel %vm788, %v786, %v714
        %v796 = vsel %vm788, %v787, %v716
        %v797 = vpack.c.bf16 %v790, %v789
        %v798 = vpack.c.bf16 %v792, %v791
        %v799 = vpack.c.bf16 %v794, %v793
        %v800 = vpack.c.bf16 %v796, %v795
        %v801 = vld [vmem:[#allocation5] sm:$0xf]
        %v802 = vld [vmem:[#allocation5 + $0x4] sm:$0xf]
        %v803 = vld [vmem:[#allocation5 + $0x8] sm:$0xf]
        %v804 = vld [vmem:[#allocation5 + $0xc] sm:$0xf]
        %v805 = vld [vmem:[#allocation5 + $0x10] sm:$0x3]
        %v811 = vunpack.c.l.b16 %v801
        %v812 = vunpack.c.l.b16 %v802
        %v813 = vunpack.c.l.b16 %v803
        %v814 = vunpack.c.l.b16 %v804
        %v815 = vunpack.c.l.b16 %v805
        %v816 = vpack.c.b16 %v812, %v811
        %v817 = vpack.c.b16 %v814, %v813
        %v818 = vpack.c.b16 %v815, %v815
        %vm821 = vcmask 293888
        %v823 = vsel %vm821, %v797, 0
        %v826 = vsel %vm821, %v798, 0
        %v829 = vsel %vm821, %v799, 0
        %v832 = vsel %vm821, %v800, 0
        %vm834 = vcmask 1041408
        %v836 = vsel %vm834, %v818, 0
        %838 = vmatprep.subr.bf16.mxu0 0
        %839 = vmatpush1.bf16.msra.mxu0 %v816
        %840 = vmatprep.subr.bf16.mxu0 0
        %841 = vmatpush1.bf16.msra.mxu0 %v817
        %842 = vmatprep.subr.bf16.mxu0 0
        %843 = vmatpush1.bf16.msra.mxu0 %v836
        %844 = vmatprep.subr.bf16.mxu0 0
        %845 = vmatpush1.bf16.msra.mxu0 0
        %846 = vmatprep.subr.bf16.mxu0 0
        %847 = vmatpush1.bf16.msra.mxu0 0
        %848 = vmatprep.subr.bf16.mxu0 0
        %849 = vmatpush1.bf16.msra.mxu0 0
        %850 = vmatprep.subr.bf16.mxu0 0
        %851 = vmatpush1.bf16.msra.mxu0 0
        %852 = vmatprep.subr.bf16.mxu0 0
        %853 = vmatpush1.bf16.msra.mxu0 0
        %854 = vmatprep.subr.bf16.mxu0 0
        %855 = vmatpush1.bf16.msra.mxu0 0
        %856 = vmatprep.subr.bf16.mxu0 0
        %857 = vmatpush1.bf16.msra.mxu0 0
        %858 = vmatprep.subr.bf16.mxu0 0
        %859 = vmatpush1.bf16.msra.mxu0 0
        %860 = vmatprep.subr.bf16.mxu0 0
        %861 = vmatpush1.bf16.msra.mxu0 0
        %862 = vmatprep.subr.bf16.mxu0 0
        %863 = vmatpush1.bf16.msra.mxu0 0
        %864 = vmatprep.subr.bf16.mxu0 0
        %865 = vmatpush1.bf16.msra.mxu0 0
        %866 = vmatprep.subr.bf16.mxu0 0
        %867 = vmatpush1.bf16.msra.mxu0 0
        %868 = vmatprep.subr.bf16.mxu0 0
        %869 = vmatpush1.bf16.msra.mxu0 0
        %870 = vmatprep.mubr.bf16.mxu0 0
        %871 = vmatmul.mubr.bf16.gmra.mrb[0].mxu0 %v823
        %v872 = vpop.f32.mrb[0].mxu0
        %v873 = vadd.f32 0.0, %v872
        %v874 = vpop.f32.mrb[0].mxu0
        %v875 = vpop.f32.mrb[0].mxu0
        %v876 = vadd.f32 0.0, %v875
        %v877 = vpop.f32.mrb[0].mxu0
        %878 = vmatprep.mubr.bf16.mxu0 0
        %879 = vmatmul.mubr.bf16.gmra.mrb[0].mxu0 %v826
        %v880 = vpop.f32.mrb[0].mxu0
        %v881 = vadd.f32 0.0, %v880
        %v882 = vpop.f32.mrb[0].mxu0
        %v883 = vpop.f32.mrb[0].mxu0
        %v884 = vadd.f32 0.0, %v883
        %v885 = vpop.f32.mrb[0].mxu0
        %886 = vmatprep.mubr.bf16.mxu0 0
        %887 = vmatmul.mubr.bf16.gmra.mrb[0].mxu0 %v829
        %v888 = vpop.f32.mrb[0].mxu0
        %v889 = vadd.f32 0.0, %v888
        %v890 = vpop.f32.mrb[0].mxu0
        %v891 = vpop.f32.mrb[0].mxu0
        %v892 = vadd.f32 0.0, %v891
        %v893 = vpop.f32.mrb[0].mxu0
        %894 = vmatprep.mubr.bf16.mxu0 0
        %895 = vmatmul.mubr.bf16.gmra.mrb[0].mxu0 %v832
        %v896 = vpop.f32.mrb[0].mxu0
        %v897 = vadd.f32 0.0, %v896
        %v898 = vpop.f32.mrb[0].mxu0
        %v899 = vpop.f32.mrb[0].mxu0
        %v900 = vadd.f32 0.0, %v899
        %v901 = vpop.f32.mrb[0].mxu0
        %902 = vdwg.mxu0
        %903 = vst.msk [vmem:[%s230] sm:$0xff] %vm734, %v873
        %904 = vst.msk [vmem:[%s230 + $0x8] sm:$0xff] %vm734, %v876
        %905 = vst.msk [vmem:[%s230 + $0x10] sm:$0xff] %vm734, %v881
        %906 = vst.msk [vmem:[%s230 + $0x18] sm:$0xff] %vm734, %v884
        %907 = vst.msk [vmem:[%s230 + $0x20] sm:$0xff] %vm734, %v889
        %908 = vst.msk [vmem:[%s230 + $0x28] sm:$0xff] %vm734, %v892
        %909 = vst.msk [vmem:[%s230 + $0x30] sm:$0xff] %vm734, %v897
        %910 = vst.msk [vmem:[%s230 + $0x38] sm:$0xff] %vm734, %v900
        %v911 = vsel %vm734, %v873, 0.0
        %v912 = vsel %vm734, %v876, 0.0
        %v913 = vadd.f32 %v911, %v912
        %v914 = vsel %vm734, %v881, 0.0
        %v915 = vadd.f32 %v913, %v914
        %v916 = vsel %vm734, %v884, 0.0
        %v917 = vadd.f32 %v915, %v916
        %v918 = vsel %vm734, %v889, 0.0
        %v919 = vadd.f32 %v917, %v918
        %v920 = vsel %vm734, %v892, 0.0
        %v921 = vadd.f32 %v919, %v920
        %v922 = vsel %vm734, %v897, 0.0
        %v923 = vadd.f32 %v921, %v922
        %v924 = vsel %vm734, %v900, 0.0
        %v925 = vadd.f32 %v923, %v924
        %v926 = vrot.slane %v925, 4
        %v927 = vadd.f32 %v925, %v926
        %v928 = vrot.slane %v927, 2
        %v929 = vadd.f32 %v927, %v928
        %v930 = vrot.slane %v929, 1
        %v931 = vadd.f32 %v929, %v930
        %v932 = vmul.f32 %v873, %v873
        %v933 = vmul.f32 %v876, %v876
        %v934 = vmul.f32 %v881, %v881
        %v935 = vmul.f32 %v884, %v884
        %v936 = vmul.f32 %v889, %v889
        %v937 = vmul.f32 %v892, %v892
        %v938 = vmul.f32 %v897, %v897
        %v939 = vmul.f32 %v900, %v900
        %v940 = vsel %vm734, %v932, 0.0
        %v941 = vsel %vm734, %v933, 0.0
        %v942 = vadd.f32 %v940, %v941
        %v943 = vsel %vm734, %v934, 0.0
        %v944 = vadd.f32 %v942, %v943
        %v945 = vsel %vm734, %v935, 0.0
        %v946 = vadd.f32 %v944, %v945
        %v947 = vsel %vm734, %v936, 0.0
        %v948 = vadd.f32 %v946, %v947
        %v949 = vsel %vm734, %v937, 0.0
        %v950 = vadd.f32 %v948, %v949
        %v951 = vsel %vm734, %v938, 0.0
        %v952 = vadd.f32 %v950, %v951
        %v953 = vsel %vm734, %v939, 0.0
        %v954 = vadd.f32 %v952, %v953
        %v955 = vrot.slane %v954, 4
        %v956 = vadd.f32 %v954, %v955
        %v957 = vrot.slane %v956, 2
        %v958 = vadd.f32 %v956, %v957
        %v959 = vrot.slane %v958, 1
        %v960 = vadd.f32 %v958, %v959
        %vm961 = vcmask 1040384
        %v962 = vsel %vm961, %v931, %v960
        %vm963 = vcmask 58368
        %964 = vst.msk [vmem:[%s237] sm:$0x3] %vm963, %v962
        %s965 = sand.u32 %s99, 1
        %s966 = scalar_lea.sflag [#allocation4], %s965
        %s967 = sand.u32 %s99, 1
        %s968 = smul.addr %s967, 64
        %s969 = scalar_lea.vmem [#allocation7], %s968
        %s970 = sand.u32 %s127, 1
        %s971 = scalar_lea.sflag [#allocation9], %s970
        %s972 = sand.u32 %s127, 1
        %s973 = smul.addr %s972, 2
        %s974 = scalar_lea.vmem [#allocation8], %s973
        // Predicated region
        $region37: #{basic_block_forward.6} parent=27 // pred_check
          %p975 = pneg %p109
        $region38: #{basic_block_forward.6} parent=27 // pred_check_branch
          %977 = sbr.rel (%p975) target = $region40
        $region39: #{basic_block_forward.6} parent=27 // pred_region
          %s979 = ssub.s32 1024, 1024
          %980 = vsyncadd %s966, %s979
          %s981 = smul.addr %s29, 8
          %s982 = sadd.s32 %s30, %s981
          %s983 = smul.addr %s982, 128
          %s984 = scalar_lea.hbm %s2, %s983
          %s985 = sshll.u32 %s969, 4
          %s986 = int_to_ptr.vmem [resolvable:$true] %s985
          %991 = dma.vmem_to_hbm [thread:$0]  %s986, 1024, %s984, %s966, 128, 128, 8
        $region40: #{basic_block_forward.6} parent=27 // pred_fallthru
          _
        // Predicated region
        $region41: #{basic_block_forward.6} parent=27 // pred_check
          %p992 = pneg %p137
        $region42: #{basic_block_forward.6} parent=27 // pred_check_branch
          %994 = sbr.rel (%p992) target = $region44
        $region43: #{basic_block_forward.6} parent=27 // pred_region
          %s996 = ssub.s32 32, 32
          %997 = vsyncadd %s971, %s996
          %s998 = sadd.s32 %s30, %s29
          %s999 = smul.addr %s998, 32
          %s1000 = scalar_lea.hbm %s3, %s999
          %s1002 = sshll.u32 %s974, 4
          %s1003 = int_to_ptr.vmem [resolvable:$true] %s1002
          %1005 = dma.vmem_to_hbm [thread:$0]  %s1003, 32, %s1000, %s971
        $region44: #{basic_block_forward.6} parent=27 // pred_fallthru
          _
      $region28: #{basic_block_forward.6} parent=5 // pred_fallthru
        _
      %p1006 = scmp.le.s32.totalorder 2, %s20
      // Predicated region
      $region45: #{basic_block_forward.6} parent=5 // pred_check
        %p1007 = pneg %p1006
      $region46: #{basic_block_forward.6} parent=5 // pred_check_branch
        %1009 = sbr.rel (%p1007) target = $region48
      $region47: #{basic_block_forward.6} parent=5 // pred_region
        %s1010 = ssub.s32 %s20, 2
        // Predicated region
        $region49: #{basic_block_forward.6} parent=47 // pred_check
          %p1011 = pneg %p115
        $region50: #{basic_block_forward.6} parent=47 // pred_check_branch
          %1013 = sbr.rel (%p1011) target = $region52
        $region51: #{basic_block_forward.6} parent=47 // pred_region
          %s1014 = sand.u32 %s100, 1
          %s1015 = scalar_lea.sflag [#allocation4], %s1014
          %s1016 = sand.u32 %s100, 1
          %s1017 = smul.addr %s1016, 64
          %s1018 = scalar_lea.vmem [#allocation7], %s1017
          %1019 = dma.done %s1015, 1024
        $region52: #{basic_block_forward.6} parent=47 // pred_fallthru
          _
        // Predicated region
        $region53: #{basic_block_forward.6} parent=47 // pred_check
          %p1020 = pneg %p143
        $region54: #{basic_block_forward.6} parent=47 // pred_check_branch
          %1022 = sbr.rel (%p1020) target = $region56
        $region55: #{basic_block_forward.6} parent=47 // pred_region
          %s1023 = sand.u32 %s128, 1
          %s1024 = scalar_lea.sflag [#allocation9], %s1023
          %s1025 = sand.u32 %s128, 1
          %s1026 = smul.addr %s1025, 2
          %s1027 = scalar_lea.vmem [#allocation8], %s1026
          %1028 = dma.done %s1024, 32
        $region56: #{basic_block_forward.6} parent=47 // pred_fallthru
          _
      $region48: #{basic_block_forward.6} parent=5 // pred_fallthru
        _
    $region6: #{basic_block_forward.6} parent=1 // loop_footer
      %s24 = sadd.s32 1, %s20
    $region7: #{basic_block_forward.6} parent=1 // loop_footer_branch
      %19 = sbr.rel target = $region3
    $region8: #{basic_block_forward.6} parent=1 // loop_exit
      _
    %1029 = vsyncpa [#allocation3], 1
    %s1030 = scalar_lea.sflag [#allocation3], 1
    %1031 = vsyncpa %s1030, 1
    %1032 = vsyncpa [#allocation6], 1
    %1033 = vsyncpa [#allocation4], 1
    %s1034 = scalar_lea.sflag [#allocation4], 1
    %1035 = vsyncpa %s1034, 1
    %1036 = vsyncpa [#allocation9], 1
    %s1037 = scalar_lea.sflag [#allocation9], 1
    %1038 = vsyncpa %s1037, 1

// kernel: basic_block_forward.11
$region0: #{basic_block_forward.11}
  #allocation0 [shape = 'u32[]', space=smem, size = 0x4, offset = 0x4, fixed_abs, tag = 'smem constant byte address 0x4 - core index']
  #allocation1 [shape = 'u32[144,128]{1,0:T(1,128)}', space=vmem, size = 0x12000, scoped, tag = 'internal scratch']
  %s0 = inlined_call_operand.hbm [shape: f32[16,64], index: 0, kind: input, shape index: {}, may-alias: {0,4}]
  %s1 = inlined_call_operand.hbm [shape: f32[1,64], index: 1, kind: input, shape index: {}]
  %s2 = inlined_call_operand.hbm [shape: f32[1,64], index: 2, kind: input, shape index: {}]
  %s3 = inlined_call_operand.hbm [shape: f32[16,64], index: 3, kind: input, shape index: {}]
  %s4 = inlined_call_operand.hbm [shape: f32[16,64], index: 4, kind: output, shape index: {}, may-alias: {0,4}]
  %s5 = sld [smem:[#allocation0]]
  $region42: #{basic_block_forward.11} parent=0
    _
  %s7 = ssub.s32 1, %s5
  %s8 = scalar_select 0, %s7, %s5
  $region1: #{basic_block_forward.11} parent=0
    #allocation2 [shape = 'u8[8192]{0}', space=vmem, size = 0x2000, scoped, tag = 'input window, operand 0, single buffered']
    #allocation3 [shape = 's32[1]{0}', space=sflag, size = 0x4, scoped, tag = 'scoped memory for basic_block_forward.11']
    #allocation4 [shape = 's32[1]{0}', space=sflag, size = 0x4, scoped, tag = 'scoped memory for basic_block_forward.11']
    #allocation5 [shape = 'u8[512]{0}', space=vmem, size = 0x400, scoped, tag = 'input window, operand 1, single buffered']
    #allocation6 [shape = 's32[1]{0}', space=sflag, size = 0x4, scoped, tag = 'scoped memory for basic_block_forward.11']
    #allocation7 [shape = 'u8[512]{0}', space=vmem, size = 0x400, scoped, tag = 'input window, operand 2, single buffered']
    #allocation8 [shape = 'u8[8192]{0}', space=vmem, size = 0x2000, scoped, tag = 'input window, operand 3, single buffered']
    #allocation9 [shape = 's32[1]{0}', space=sflag, size = 0x4, scoped, tag = 'scoped memory for basic_block_forward.11']
    #allocation10 [shape = 'u8[8192]{0}', space=vmem, size = 0x2000, scoped, tag = 'output window, operand 0, single buffered']
    %9 = vsyncpa [#allocation3], 0
    %10 = vsyncpa [#allocation6], 0
    %11 = vsyncpa [#allocation9], 0
    %12 = vsyncpa [#allocation4], 0
    // Predicated region
    $region2: #{basic_block_forward.11} parent=1 // pred_check
      _
    $region3: #{basic_block_forward.11} parent=1 // pred_check_branch
      %14 = sbr.rel (0) target = $region5
    $region4: #{basic_block_forward.11} parent=1 // pred_region
      %s16 = ssub.s32 256, 256
      %17 = vsyncadd [#allocation3], %s16
      %s18 = sshll.u32 [#allocation2], 4
      %s19 = int_to_ptr.vmem [resolvable:$true] %s18
      %24 = dma.hbm_to_vmem [thread:$0]  %s0, 256, %s19, [#allocation3], 128, 128, 8
    $region5: #{basic_block_forward.11} parent=1 // pred_fallthru
      _
    // Predicated region
    $region6: #{basic_block_forward.11} parent=1 // pred_check
      _
    $region7: #{basic_block_forward.11} parent=1 // pred_check_branch
      %26 = sbr.rel (0) target = $region9
    $region8: #{basic_block_forward.11} parent=1 // pred_region
      %s28 = ssub.s32 16, 16
      %29 = vsyncadd [#allocation6], %s28
      %s31 = sshll.u32 [#allocation5], 4
      %s32 = int_to_ptr.vmem [resolvable:$true] %s31
      %34 = dma.hbm_to_vmem [thread:$0]  %s1, 16, %s32, [#allocation6]
    $region9: #{basic_block_forward.11} parent=1 // pred_fallthru
      _
    // Predicated region
    $region10: #{basic_block_forward.11} parent=1 // pred_check
      _
    $region11: #{basic_block_forward.11} parent=1 // pred_check_branch
      %36 = sbr.rel (0) target = $region13
    $region12: #{basic_block_forward.11} parent=1 // pred_region
      %s38 = ssub.s32 16, 16
      %39 = vsyncadd [#allocation6], %s38
      %s41 = sshll.u32 [#allocation7], 4
      %s42 = int_to_ptr.vmem [resolvable:$true] %s41
      %44 = dma.hbm_to_vmem [thread:$0]  %s2, 16, %s42, [#allocation6]
    $region13: #{basic_block_forward.11} parent=1 // pred_fallthru
      _
    // Predicated region
    $region14: #{basic_block_forward.11} parent=1 // pred_check
      _
    $region15: #{basic_block_forward.11} parent=1 // pred_check_branch
      %46 = sbr.rel (0) target = $region17
    $region16: #{basic_block_forward.11} parent=1 // pred_region
      %s48 = ssub.s32 256, 256
      %49 = vsyncadd [#allocation9], %s48
      %s50 = sshll.u32 [#allocation8], 4
      %s51 = int_to_ptr.vmem [resolvable:$true] %s50
      %56 = dma.hbm_to_vmem [thread:$0]  %s3, 256, %s51, [#allocation9], 128, 128, 8
    $region17: #{basic_block_forward.11} parent=1 // pred_fallthru
      _
    // Predicated region
    $region18: #{basic_block_forward.11} parent=1 // pred_check
      _
    $region19: #{basic_block_forward.11} parent=1 // pred_check_branch
      %58 = sbr.rel (0) target = $region21
    $region20: #{basic_block_forward.11} parent=1 // pred_region
      %59 = dma.done [#allocation3], 256
    $region21: #{basic_block_forward.11} parent=1 // pred_fallthru
      _
    // Predicated region
    $region22: #{basic_block_forward.11} parent=1 // pred_check
      _
    $region23: #{basic_block_forward.11} parent=1 // pred_check_branch
      %61 = sbr.rel (0) target = $region25
    $region24: #{basic_block_forward.11} parent=1 // pred_region
      %62 = dma.done [#allocation6], 16
    $region25: #{basic_block_forward.11} parent=1 // pred_fallthru
      _
    // Predicated region
    $region26: #{basic_block_forward.11} parent=1 // pred_check
      _
    $region27: #{basic_block_forward.11} parent=1 // pred_check_branch
      %64 = sbr.rel (0) target = $region29
    $region28: #{basic_block_forward.11} parent=1 // pred_region
      %65 = dma.done [#allocation6], 16
    $region29: #{basic_block_forward.11} parent=1 // pred_fallthru
      _
    // Predicated region
    $region30: #{basic_block_forward.11} parent=1 // pred_check
      _
    $region31: #{basic_block_forward.11} parent=1 // pred_check_branch
      %67 = sbr.rel (0) target = $region33
    $region32: #{basic_block_forward.11} parent=1 // pred_region
      %68 = dma.done [#allocation9], 256
    $region33: #{basic_block_forward.11} parent=1 // pred_fallthru
      _
    %v69 = vld [vmem:[#allocation2] sm:$0xff]
    %v70 = vld [vmem:[#allocation2 + $0x8] sm:$0xff]
    %v71 = vld [vmem:[#allocation5] sm:$0x1]
    %v73 = vlaneseq
    %v74 = vshrl.u32 %v73, 7
    %v75 = vsub.s32 0, %v74
    %v76 = vrot.slane %v71, %v75
    %v78 = vmul.f32 %v69, %v76
    %v79 = vmul.f32 %v70, %v76
    %v80 = vld [vmem:[#allocation7] sm:$0x1]
    %v82 = vlaneseq
    %v83 = vshrl.u32 %v82, 7
    %v84 = vsub.s32 0, %v83
    %v85 = vrot.slane %v80, %v84
    %v87 = vadd.f32 %v78, %v85
    %v88 = vadd.f32 %v79, %v85
    %v89 = vld [vmem:[#allocation8] sm:$0xff]
    %v90 = vld [vmem:[#allocation8 + $0x8] sm:$0xff]
    %v91 = vadd.f32 %v87, %v89
    %v92 = vadd.f32 %v88, %v90
    %v93 = vmax.f32 %v91, 0.0
    %v94 = vmax.f32 %v92, 0.0
    %vm95 = vcmask 523264
    %96 = vst.msk [vmem:[#allocation10] sm:$0xff] %vm95, %v93
    %97 = vst.msk [vmem:[#allocation10 + $0x8] sm:$0xff] %vm95, %v94
    // Predicated region
    $region34: #{basic_block_forward.11} parent=1 // pred_check
      _
    $region35: #{basic_block_forward.11} parent=1 // pred_check_branch
      %99 = sbr.rel (0) target = $region37
    $region36: #{basic_block_forward.11} parent=1 // pred_region
      %s101 = ssub.s32 256, 256
      %102 = vsyncadd [#allocation4], %s101
      %s103 = sshll.u32 [#allocation10], 4
      %s104 = int_to_ptr.vmem [resolvable:$true] %s103
      %109 = dma.vmem_to_hbm [thread:$0]  %s104, 256, %s4, [#allocation4], 128, 128, 8
    $region37: #{basic_block_forward.11} parent=1 // pred_fallthru
      _
    // Predicated region
    $region38: #{basic_block_forward.11} parent=1 // pred_check
      _
    $region39: #{basic_block_forward.11} parent=1 // pred_check_branch
      %111 = sbr.rel (0) target = $region41
    $region40: #{basic_block_forward.11} parent=1 // pred_region
      %112 = dma.done [#allocation4], 256
    $region41: #{basic_block_forward.11} parent=1 // pred_fallthru
      _
    %113 = vsyncpa [#allocation3], 1
    %114 = vsyncpa [#allocation6], 1
    %115 = vsyncpa [#allocation9], 1
    %116 = vsyncpa [#allocation4], 1

// kernel: basic_block_forward.8
$region0: #{basic_block_forward.8}
  #allocation0 [shape = 'u32[]', space=smem, size = 0x4, offset = 0x4, fixed_abs, tag = 'smem constant byte address 0x4 - core index']
  #allocation1 [shape = 'u32[144,128]{1,0:T(1,128)}', space=vmem, size = 0x12000, scoped, tag = 'internal scratch']
  %s0 = inlined_call_operand.hbm [shape: bf16[2,1,10,10,8], index: 0, kind: input, shape index: {}]
  %s1 = inlined_call_operand.hbm [shape: bf16[72,8], index: 1, kind: input, shape index: {}]
  %s2 = inlined_call_operand.hbm [shape: f32[2,64,8], index: 2, kind: output, shape index: {0}]
  %s3 = inlined_call_operand.hbm [shape: f32[2,2,8], index: 3, kind: output, shape index: {1}]
  %4 = xla_tuple %s2, %s3
  %s5 = sld [smem:[#allocation0]]
  $region57: #{basic_block_forward.8} parent=0
    _
  %s7 = ssub.s32 1, %s5
  %s8 = scalar_select 0, %s7, %s5
  $region1: #{basic_block_forward.8} parent=0
    #allocation2 [shape = 'u8[81920]{0}', space=vmem, size = 0x14000, scoped, tag = 'input window, operand 0']
    #allocation3 [shape = 's32[2]{0}', space=sflag, size = 0x8, scoped, tag = 'scoped memory for basic_block_forward.8']
    #allocation4 [shape = 's32[2]{0}', space=sflag, size = 0x8, scoped, tag = 'scoped memory for basic_block_forward.8']
    #allocation5 [shape = 'u8[18432]{0}', space=vmem, size = 0x4800, scoped, tag = 'input window, operand 1, single buffered']
    #allocation6 [shape = 's32[1]{0}', space=sflag, size = 0x4, scoped, tag = 'scoped memory for basic_block_forward.8']
    #allocation7 [shape = 'u8[65536]{0}', space=vmem, size = 0x10000, scoped, tag = 'output window, operand 0']
    #allocation8 [shape = 'u8[2048]{0}', space=vmem, size = 0x800, scoped, tag = 'output window, operand 1']
    #allocation9 [shape = 's32[2]{0}', space=sflag, size = 0x8, scoped, tag = 'scoped memory for basic_block_forward.8']
    %9 = vsyncpa [#allocation3], 0
    %s10 = scalar_lea.sflag [#allocation3], 1
    %11 = vsyncpa %s10, 0
    %12 = vsyncpa [#allocation6], 0
    %13 = vsyncpa [#allocation4], 0
    %s14 = scalar_lea.sflag [#allocation4], 1
    %15 = vsyncpa %s14, 0
    %16 = vsyncpa [#allocation9], 0
    %s17 = scalar_lea.sflag [#allocation9], 1
    %18 = vsyncpa %s17, 0
    loop: start=0, step=1, limit=4
    $region2: #{basic_block_forward.8} parent=1 // loop_pre_header
      _
    $region3: #{basic_block_forward.8} parent=1 // loop_header
      %s20 = sphi 0, %s24
      %p21 = scmp.ge.s32.totalorder %s20, 4
      %s27 = sphi 0, %s39
      %s28 = sphi 0, %s35
      %s29 = sphi 0, %s27
      %s30 = sphi 0, %s28
      %s31 = sphi 0, %s29
      %s32 = sphi 0, %s30
      %s42 = sphi 0, %s44
      %s45 = sphi 0, %s42
      %s46 = sphi 0, %s45
      %s62 = sphi 0, %s46
      %s68 = sphi 0, %s70
      %s71 = sphi 0, %s68
      %s72 = sphi 0, %s71
      %s88 = sphi 0, %s72
      %s96 = sphi 0, %s98
      %s99 = sphi 0, %s96
      %s100 = sphi 0, %s99
      %s116 = sphi 0, %s100
      %s124 = sphi 0, %s126
      %s127 = sphi 0, %s124
      %s128 = sphi 0, %s127
      %s144 = sphi 0, %s128
    $region4: #{basic_block_forward.8} parent=1 // loop_header_branch
      %23 = sbr.rel (%p21) target = $region8
    $region5: #{basic_block_forward.8} parent=1 // loop_body
      %s25 = ssub.s32 %s20, 1
      %s26 = ssub.s32 %s20, 2
      %s33 = sadd.s32 1, %s28
      %p34 = scmp.ge.s32.totalorder %s33, 1
      %s35 = scalar_select %p34, 0, %s33
      %s36 = sadd.s32 1, %s27
      %s37 = scalar_select %p34, %s36, %s27
      %p38 = scmp.ge.s32.totalorder %s37, 2
      %s39 = scalar_select %p38, 0, %s37
      %s40 = ssub.s32 %s27, %s39
      %p41 = scmp.eq.s32.totalorder %s40, 0
      %s43 = sadd.s32 %s42, 1
      %s44 = scalar_select %p41, %s42, %s43
      %p47 = pneg %p41
      %p48 = scmp.eq.s32.totalorder %s20, 1
      %p49 = por %p47, %p48
      %p50 = scmp.ne.s32.totalorder %s42, %s45
      %p51 = scmp.eq.s32.totalorder %s20, 0
      %p52 = por %p50, %p51
      %p53 = scmp.ne.s32.totalorder %s42, %s45
      %p54 = scmp.eq.s32.totalorder %s25, 1
      %p55 = por %p53, %p54
      %p56 = scmp.ne.s32.totalorder %s45, %s46
      %p57 = scmp.eq.s32.totalorder %s25, 0
      %p58 = por %p56, %p57
      %p59 = scmp.ne.s32.totalorder %s45, %s46
      %p60 = scmp.eq.s32.totalorder %s26, 1
      %p61 = por %p59, %p60
      %p63 = scmp.ne.s32.totalorder %s46, %s62
      %p64 = scmp.eq.s32.totalorder %s26, 0
      %p65 = por %p63, %p64
      %s66 = ssub.s32 %s28, %s35
      %p67 = scmp.eq.s32.totalorder %s66, 0
      %s69 = sadd.s32 %s68, 1
      %s70 = scalar_select %p67, %s68, %s69
      %p73 = pneg %p67
      %p74 = scmp.eq.s32.totalorder %s20, 1
      %p75 = por %p73, %p74
      %p76 = scmp.ne.s32.totalorder %s68, %s71
      %p77 = scmp.eq.s32.totalorder %s20, 0
      %p78 = por %p76, %p77
      %p79 = scmp.ne.s32.totalorder %s68, %s71
      %p80 = scmp.eq.s32.totalorder %s25, 1
      %p81 = por %p79, %p80
      %p82 = scmp.ne.s32.totalorder %s71, %s72
      %p83 = scmp.eq.s32.totalorder %s25, 0
      %p84 = por %p82, %p83
      %p85 = scmp.ne.s32.totalorder %s71, %s72
      %p86 = scmp.eq.s32.totalorder %s26, 1
      %p87 = por %p85, %p86
      %p89 = scmp.ne.s32.totalorder %s72, %s88
      %p90 = scmp.eq.s32.totalorder %s26, 0
      %p91 = por %p89, %p90
      %s92 = ssub.s32 %s27, %s39
      %s93 = ssub.s32 %s28, %s35
      %s94 = sor.u32 %s92, %s93
      %p95 = scmp.eq.s32.totalorder %s94, 0
      %s97 = sadd.s32 %s96, 1
      %s98 = scalar_select %p95, %s96, %s97
      %p101 = pneg %p95
      %p102 = scmp.eq.s32.totalorder %s20, 1
      %p103 = por %p101, %p102
      %p104 = scmp.ne.s32.totalorder %s96, %s99
      %p105 = scmp.eq.s32.totalorder %s20, 0
      %p106 = por %p104, %p105
      %p107 = scmp.ne.s32.totalorder %s96, %s99
      %p108 = scmp.eq.s32.totalorder %s25, 1
      %p109 = por %p107, %p108
      %p110 = scmp.ne.s32.totalorder %s99, %s100
      %p111 = scmp.eq.s32.totalorder %s25, 0
      %p112 = por %p110, %p111
      %p113 = scmp.ne.s32.totalorder %s99, %s100
      %p114 = scmp.eq.s32.totalorder %s26, 1
      %p115 = por %p113, %p114
      %p117 = scmp.ne.s32.totalorder %s100, %s116
      %p118 = scmp.eq.s32.totalorder %s26, 0
      %p119 = por %p117, %p118
      %s120 = ssub.s32 %s27, %s39
      %s121 = ssub.s32 %s28, %s35
      %s122 = sor.u32 %s120, %s121
      %p123 = scmp.eq.s32.totalorder %s122, 0
      %s125 = sadd.s32 %s124, 1
      %s126 = scalar_select %p123, %s124, %s125
      %p129 = pneg %p123
      %p130 = scmp.eq.s32.totalorder %s20, 1
      %p131 = por %p129, %p130
      %p132 = scmp.ne.s32.totalorder %s124, %s127
      %p133 = scmp.eq.s32.totalorder %s20, 0
      %p134 = por %p132, %p133
      %p135 = scmp.ne.s32.totalorder %s124, %s127
      %p136 = scmp.eq.s32.totalorder %s25, 1
      %p137 = por %p135, %p136
      %p138 = scmp.ne.s32.totalorder %s127, %s128
      %p139 = scmp.eq.s32.totalorder %s25, 0
      %p140 = por %p138, %p139
      %p141 = scmp.ne.s32.totalorder %s127, %s128
      %p142 = scmp.eq.s32.totalorder %s26, 1
      %p143 = por %p141, %p142
      %p145 = scmp.ne.s32.totalorder %s128, %s144
      %p146 = scmp.eq.s32.totalorder %s26, 0
      %p147 = por %p145, %p146
      %p148 = scmp.le.s32.totalorder 1, %s20
      %p149 = scmp.lt.s32.totalorder %s20, 3
      %p150 = pnand %p148, %p149
      %p151 = pneg %p150
      // Predicated region
      $region9: #{basic_block_forward.8} parent=5 // pred_check
        _
      $region10: #{basic_block_forward.8} parent=5 // pred_check_branch
        %153 = sbr.rel (%p150) target = $region12
      $region11: #{basic_block_forward.8} parent=5 // pred_region
        %s154 = ssub.s32 %s20, 1
        // Predicated region
        $region13: #{basic_block_forward.8} parent=11 // pred_check
          %p155 = pneg %p84
        $region14: #{basic_block_forward.8} parent=11 // pred_check_branch
          %157 = sbr.rel (%p155) target = $region16
        $region15: #{basic_block_forward.8} parent=11 // pred_region
          %s159 = ssub.s32 576, 576
          %160 = vsyncadd [#allocation6], %s159
          %s161 = smul.addr %s30, 64
          %s162 = scalar_lea.hbm %s1, %s161
          %s163 = sshll.u32 [#allocation5], 4
          %s164 = int_to_ptr.vmem [resolvable:$true] %s163
          %169 = dma.hbm_to_vmem [thread:$0]  %s162, 576, %s164, [#allocation6], 64, 64, 4
        $region16: #{basic_block_forward.8} parent=11 // pred_fallthru
          _
      $region12: #{basic_block_forward.8} parent=5 // pred_fallthru
        _
      %p170 = scmp.lt.s32.totalorder %s20, 2
      // Predicated region
      $region17: #{basic_block_forward.8} parent=5 // pred_check
        %p171 = pneg %p170
      $region18: #{basic_block_forward.8} parent=5 // pred_check_branch
        %173 = sbr.rel (%p171) target = $region20
      $region19: #{basic_block_forward.8} parent=5 // pred_region
        // Predicated region
        $region21: #{basic_block_forward.8} parent=19 // pred_check
          %p174 = pneg %p52
        $region22: #{basic_block_forward.8} parent=19 // pred_check_branch
          %176 = sbr.rel (%p174) target = $region24
        $region23: #{basic_block_forward.8} parent=19 // pred_region
          %s177 = sand.u32 %s42, 1
          %s178 = scalar_lea.sflag [#allocation3], %s177
          %s179 = sand.u32 %s42, 1
          %s180 = smul.addr %s179, 80
          %s181 = scalar_lea.vmem [#allocation2], %s180
          %s183 = ssub.s32 1280, 1280
          %184 = vsyncadd %s178, %s183
          %s185 = smul.addr %s27, 20
          %s186 = smul.addr %s185, 64
          %s187 = scalar_lea.hbm %s0, %s186
          %s188 = sshll.u32 %s181, 4
          %s189 = int_to_ptr.vmem [resolvable:$true] %s188
          %194 = dma.hbm_to_vmem [thread:$0]  %s187, 1280, %s189, %s178, 64, 64, 4
        $region24: #{basic_block_forward.8} parent=19 // pred_fallthru
          _
      $region20: #{basic_block_forward.8} parent=5 // pred_fallthru
        _
      %p195 = scmp.le.s32.totalorder 1, %s20
      %p196 = scmp.lt.s32.totalorder %s20, 3
      %p197 = pnand %p195, %p196
      %p198 = pneg %p197
      // Predicated region
      $region25: #{basic_block_forward.8} parent=5 // pred_check
        _
      $region26: #{basic_block_forward.8} parent=5 // pred_check_branch
        %200 = sbr.rel (%p197) target = $region28
      $region27: #{basic_block_forward.8} parent=5 // pred_region
        %s201 = ssub.s32 %s20, 1
        %s202 = sand.u32 %s45, 1
        %s203 = scalar_lea.sflag [#allocation3], %s202
        %s204 = sand.u32 %s45, 1
        %s205 = smul.addr %s204, 80
        %s206 = scalar_lea.vmem [#allocation2], %s205
        // Predicated region
        $region29: #{basic_block_forward.8} parent=27 // pred_check
          %p207 = pneg %p58
        $region30: #{basic_block_forward.8} parent=27 // pred_check_branch
          %209 = sbr.rel (%p207) target = $region32
        $region31: #{basic_block_forward.8} parent=27 // pred_region
          %210 = dma.done %s203, 1280
        $region32: #{basic_block_forward.8} parent=27 // pred_fallthru
          _
        // Predicated region
        $region33: #{basic_block_forward.8} parent=27 // pred_check
          %p211 = pneg %p84
        $region34: #{basic_block_forward.8} parent=27 // pred_check_branch
          %213 = sbr.rel (%p211) target = $region36
        $region35: #{basic_block_forward.8} parent=27 // pred_region
          %214 = dma.done [#allocation6], 576
        $region36: #{basic_block_forward.8} parent=27 // pred_fallthru
          _
        %s215 = sand.u32 %s45, 1
        %s216 = scalar_lea.sflag [#allocation3], %s215
        %s217 = sand.u32 %s45, 1
        %s218 = smul.addr %s217, 80
        %s219 = scalar_lea.vmem [#allocation2], %s218
        %p220 = pneg %p58
        %p221 = pneg %p55
        %p222 = pneg %p84
        %p223 = pneg %p81
        %p224 = pneg %p112
        %p225 = pneg %p109
        %s226 = sand.u32 %s99, 1
        %s227 = scalar_lea.sflag [#allocation4], %s226
        %s228 = sand.u32 %s99, 1
        %s229 = smul.addr %s228, 64
        %s230 = scalar_lea.vmem [#allocation7], %s229
        %p231 = pneg %p140
        %p232 = pneg %p137
        %s233 = sand.u32 %s127, 1
        %s234 = scalar_lea.sflag [#allocation9], %s233
        %s235 = sand.u32 %s127, 1
        %s236 = smul.addr %s235, 2
        %s237 = scalar_lea.vmem [#allocation8], %s236
        %v239 = vld [vmem:[%s206] sm:$0xf]
        %v240 = vld [vmem:[%s206 + $0x8] sm:$0xf]
        %v241 = vld [vmem:[%s206 + $0x10] sm:$0xf]
        %v242 = vld [vmem:[%s206 + $0x18] sm:$0xf]
        %v243 = vld [vmem:[%s206 + $0x20] sm:$0xf]
        %v244 = vld [vmem:[%s206 + $0x28] sm:$0xf]
        %v245 = vld [vmem:[%s206 + $0x30] sm:$0xf]
        %v246 = vld [vmem:[%s206 + $0x38] sm:$0xf]
        %v247 = vunpack.c.l.bf16 %v239
        %v248 = vunpack.c.l.bf16 %v240
        %v249 = vunpack.c.l.bf16 %v241
        %v250 = vunpack.c.l.bf16 %v242
        %v251 = vunpack.c.l.bf16 %v243
        %v252 = vunpack.c.l.bf16 %v244
        %v253 = vunpack.c.l.bf16 %v245
        %v254 = vunpack.c.l.bf16 %v246
        %v255 = vld [vmem:[%s206 + $0x4] sm:$0x1]
        %v256 = vld [vmem:[%s206 + $0xc] sm:$0x1]
        %v257 = vld [vmem:[%s206 + $0x14] sm:$0x1]
        %v258 = vld [vmem:[%s206 + $0x1c] sm:$0x1]
        %v259 = vld [vmem:[%s206 + $0x24] sm:$0x1]
        %v260 = vld [vmem:[%s206 + $0x2c] sm:$0x1]
        %v261 = vld [vmem:[%s206 + $0x34] sm:$0x1]
        %v262 = vld [vmem:[%s206 + $0x3c] sm:$0x1]
        %v263 = vunpack.c.l.bf16 %v255
        %v264 = vunpack.c.l.bf16 %v256
        %v265 = vunpack.c.l.bf16 %v257
        %v266 = vunpack.c.l.bf16 %v258
        %v267 = vunpack.c.l.bf16 %v259
        %v268 = vunpack.c.l.bf16 %v260
        %v269 = vunpack.c.l.bf16 %v261
        %v270 = vunpack.c.l.bf16 %v262
        %v271 = vld [vmem:[%s206] sm:$0xe]
        %v272 = vld [vmem:[%s206 + $0x8] sm:$0xe]
        %v273 = vld [vmem:[%s206 + $0x10] sm:$0xe]
        %v274 = vld [vmem:[%s206 + $0x18] sm:$0xe]
        %v275 = vld [vmem:[%s206 + $0x20] sm:$0xe]
        %v276 = vld [vmem:[%s206 + $0x28] sm:$0xe]
        %v277 = vld [vmem:[%s206 + $0x30] sm:$0xe]
        %v278 = vld [vmem:[%s206 + $0x38] sm:$0xe]
        %v279 = vunpack.c.l.bf16 %v271
        %v280 = vunpack.c.l.bf16 %v272
        %v281 = vunpack.c.l.bf16 %v273
        %v282 = vunpack.c.l.bf16 %v274
        %v283 = vunpack.c.l.bf16 %v275
        %v284 = vunpack.c.l.bf16 %v276
        %v285 = vunpack.c.l.bf16 %v277
        %v286 = vunpack.c.l.bf16 %v278
        %s287 = scalar_lea.vmem %s206, 8 [#allocation2]
        %v288 = vld [vmem:[%s287] sm:$0xf]
        %v289 = vld [vmem:[%s287 + $0x8] sm:$0xf]
        %v290 = vld [vmem:[%s287 + $0x10] sm:$0xf]
        %v291 = vld [vmem:[%s287 + $0x18] sm:$0xf]
        %v292 = vld [vmem:[%s287 + $0x20] sm:$0xf]
        %v293 = vld [vmem:[%s287 + $0x28] sm:$0xf]
        %v294 = vld [vmem:[%s287 + $0x30] sm:$0xf]
        %v295 = vld [vmem:[%s287 + $0x38] sm:$0xf]
        %v296 = vunpack.c.l.bf16 %v288
        %v297 = vunpack.c.l.bf16 %v289
        %v298 = vunpack.c.l.bf16 %v290
        %v299 = vunpack.c.l.bf16 %v291
        %v300 = vunpack.c.l.bf16 %v292
        %v301 = vunpack.c.l.bf16 %v293
        %v302 = vunpack.c.l.bf16 %v294
        %v303 = vunpack.c.l.bf16 %v295
        %v304 = vld [vmem:[%s287 + $0x4] sm:$0x1]
        %v305 = vld [vmem:[%s287 + $0xc] sm:$0x1]
        %v306 = vld [vmem:[%s287 + $0x14] sm:$0x1]
        %v307 = vld [vmem:[%s287 + $0x1c] sm:$0x1]
        %v308 = vld [vmem:[%s287 + $0x24] sm:$0x1]
        %v309 = vld [vmem:[%s287 + $0x2c] sm:$0x1]
        %v310 = vld [vmem:[%s287 + $0x34] sm:$0x1]
        %v311 = vld [vmem:[%s287 + $0x3c] sm:$0x1]
        %v312 = vunpack.c.l.bf16 %v304
        %v313 = vunpack.c.l.bf16 %v305
        %v314 = vunpack.c.l.bf16 %v306
        %v315 = vunpack.c.l.bf16 %v307
        %v316 = vunpack.c.l.bf16 %v308
        %v317 = vunpack.c.l.bf16 %v309
        %v318 = vunpack.c.l.bf16 %v310
        %v319 = vunpack.c.l.bf16 %v311
        %v320 = vld [vmem:[%s287] sm:$0xe]
        %v321 = vld [vmem:[%s287 + $0x8] sm:$0xe]
        %v322 = vld [vmem:[%s287 + $0x10] sm:$0xe]
        %v323 = vld [vmem:[%s287 + $0x18] sm:$0xe]
        %v324 = vld [vmem:[%s287 + $0x20] sm:$0xe]
        %v325 = vld [vmem:[%s287 + $0x28] sm:$0xe]
        %v326 = vld [vmem:[%s287 + $0x30] sm:$0xe]
        %v327 = vld [vmem:[%s287 + $0x38] sm:$0xe]
        %v328 = vunpack.c.l.bf16 %v320
        %v329 = vunpack.c.l.bf16 %v321
        %v330 = vunpack.c.l.bf16 %v322
        %v331 = vunpack.c.l.bf16 %v323
        %v332 = vunpack.c.l.bf16 %v324
        %v333 = vunpack.c.l.bf16 %v325
        %v334 = vunpack.c.l.bf16 %v326
        %v335 = vunpack.c.l.bf16 %v327
        %s336 = scalar_lea.vmem %s206, 16 [#allocation2]
        %v337 = vld [vmem:[%s336] sm:$0xf]
        %v338 = vld [vmem:[%s336 + $0x8] sm:$0xf]
        %v339 = vld [vmem:[%s336 + $0x10] sm:$0xf]
        %v340 = vld [vmem:[%s336 + $0x18] sm:$0xf]
        %v341 = vld [vmem:[%s336 + $0x20] sm:$0xf]
        %v342 = vld [vmem:[%s336 + $0x28] sm:$0xf]
        %v343 = vld [vmem:[%s336 + $0x30] sm:$0xf]
        %v344 = vld [vmem:[%s336 + $0x38] sm:$0xf]
        %v345 = vunpack.c.l.bf16 %v337
        %v346 = vunpack.c.l.bf16 %v338
        %v347 = vunpack.c.l.bf16 %v339
        %v348 = vunpack.c.l.bf16 %v340
        %v349 = vunpack.c.l.bf16 %v341
        %v350 = vunpack.c.l.bf16 %v342
        %v351 = vunpack.c.l.bf16 %v343
        %v352 = vunpack.c.l.bf16 %v344
        %v353 = vld [vmem:[%s336 + $0x4] sm:$0x1]
        %v354 = vld [vmem:[%s336 + $0xc] sm:$0x1]
        %v355 = vld [vmem:[%s336 + $0x14] sm:$0x1]
        %v356 = vld [vmem:[%s336 + $0x1c] sm:$0x1]
        %v357 = vld [vmem:[%s336 + $0x24] sm:$0x1]
        %v358 = vld [vmem:[%s336 + $0x2c] sm:$0x1]
        %v359 = vld [vmem:[%s336 + $0x34] sm:$0x1]
        %v360 = vld [vmem:[%s336 + $0x3c] sm:$0x1]
        %v361 = vunpack.c.l.bf16 %v353
        %v362 = vunpack.c.l.bf16 %v354
        %v363 = vunpack.c.l.bf16 %v355
        %v364 = vunpack.c.l.bf16 %v356
        %v365 = vunpack.c.l.bf16 %v357
        %v366 = vunpack.c.l.bf16 %v358
        %v367 = vunpack.c.l.bf16 %v359
        %v368 = vunpack.c.l.bf16 %v360
        %v369 = vld [vmem:[%s336] sm:$0xe]
        %v370 = vld [vmem:[%s336 + $0x8] sm:$0xe]
        %v371 = vld [vmem:[%s336 + $0x10] sm:$0xe]
        %v372 = vld [vmem:[%s336 + $0x18] sm:$0xe]
        %v373 = vld [vmem:[%s336 + $0x20] sm:$0xe]
        %v374 = vld [vmem:[%s336 + $0x28] sm:$0xe]
        %v375 = vld [vmem:[%s336 + $0x30] sm:$0xe]
        %v376 = vld [vmem:[%s336 + $0x38] sm:$0xe]
        %v377 = vunpack.c.l.bf16 %v369
        %v378 = vunpack.c.l.bf16 %v370
        %v379 = vunpack.c.l.bf16 %v371
        %v380 = vunpack.c.l.bf16 %v372
        %v381 = vunpack.c.l.bf16 %v373
        %v382 = vunpack.c.l.bf16 %v374
        %v383 = vunpack.c.l.bf16 %v375
        %v384 = vunpack.c.l.bf16 %v376
        %vm401 = vcmask 1046528
        %v402 = vrot.slane %v247, 1
        %v403 = vrot.slane %v263, 1
        %v404 = vsel %vm401, %v402, %v403
        %v405 = vrot.slane %v248, 1
        %v406 = vrot.slane %v264, 1
        %v407 = vsel %vm401, %v405, %v406
        %v408 = vrot.slane %v249, 1
        %v409 = vrot.slane %v265, 1
        %v410 = vsel %vm401, %v408, %v409
        %v411 = vrot.slane %v250, 1
        %v412 = vrot.slane %v266, 1
        %v413 = vsel %vm401, %v411, %v412
        %v414 = vrot.slane %v251, 1
        %v415 = vrot.slane %v267, 1
        %v416 = vsel %vm401, %v414, %v415
        %v417 = vrot.slane %v252, 1
        %v418 = vrot.slane %v268, 1
        %v419 = vsel %vm401, %v417, %v418
        %v420 = vrot.slane %v253, 1
        %v421 = vrot.slane %v269, 1
        %v422 = vsel %vm401, %v420, %v421
        %v423 = vrot.slane %v254, 1
        %v424 = vrot.slane %v270, 1
        %v425 = vsel %vm401, %v423, %v424
        %426 = vrot.lane.b32.xlu0 %v404, 8
        %v427 = vpop.permute.xlu0 %426
        %428 = vrot.lane.b32.xlu0 %v407, 8
        %v429 = vpop.permute.xlu0 %428
        %430 = vrot.lane.b32.xlu0 %v410, 8
        %v431 = vpop.permute.xlu0 %430
        %432 = vrot.lane.b32.xlu0 %v413, 8
        %v433 = vpop.permute.xlu0 %432
        %434 = vrot.lane.b32.xlu0 %v416, 8
        %v435 = vpop.permute.xlu0 %434
        %436 = vrot.lane.b32.xlu0 %v419, 8
        %v437 = vpop.permute.xlu0 %436
        %438 = vrot.lane.b32.xlu0 %v422, 8
        %v439 = vpop.permute.xlu0 %438
        %440 = vrot.lane.b32.xlu0 %v425, 8
        %v441 = vpop.permute.xlu0 %440
        %vm458 = vcmask 1045504
        %v459 = vrot.slane %v279, 2
        %v460 = vrot.slane %v263, 2
        %v461 = vsel %vm458, %v459, %v460
        %v462 = vrot.slane %v280, 2
        %v463 = vrot.slane %v264, 2
        %v464 = vsel %vm458, %v462, %v463
        %v465 = vrot.slane %v281, 2
        %v466 = vrot.slane %v265, 2
        %v467 = vsel %vm458, %v465, %v466
        %v468 = vrot.slane %v282, 2
        %v469 = vrot.slane %v266, 2
        %v470 = vsel %vm458, %v468, %v469
        %v471 = vrot.slane %v283, 2
        %v472 = vrot.slane %v267, 2
        %v473 = vsel %vm458, %v471, %v472
        %v474 = vrot.slane %v284, 2
        %v475 = vrot.slane %v268, 2
        %v476 = vsel %vm458, %v474, %v475
        %v477 = vrot.slane %v285, 2
        %v478 = vrot.slane %v269, 2
        %v479 = vsel %vm458, %v477, %v478
        %v480 = vrot.slane %v286, 2
        %v481 = vrot.slane %v270, 2
        %v482 = vsel %vm458, %v480, %v481
        %483 = vrot.lane.b32.xlu0 %v461, 16
        %v484 = vpop.permute.xlu0 %483
        %485 = vrot.lane.b32.xlu0 %v464, 16
        %v486 = vpop.permute.xlu0 %485
        %487 = vrot.lane.b32.xlu0 %v467, 16
        %v488 = vpop.permute.xlu0 %487
        %489 = vrot.lane.b32.xlu0 %v470, 16
        %v490 = vpop.permute.xlu0 %489
        %491 = vrot.lane.b32.xlu0 %v473, 16
        %v492 = vpop.permute.xlu0 %491
        %493 = vrot.lane.b32.xlu0 %v476, 16
        %v494 = vpop.permute.xlu0 %493
        %495 = vrot.lane.b32.xlu0 %v479, 16
        %v496 = vpop.permute.xlu0 %495
        %497 = vrot.lane.b32.xlu0 %v482, 16
        %v498 = vpop.permute.xlu0 %497
        %515 = vrot.lane.b32.xlu0 %v296, 24
        %v516 = vpop.permute.xlu0 %515
        %517 = vrot.lane.b32.xlu0 %v297, 24
        %v518 = vpop.permute.xlu0 %517
        %519 = vrot.lane.b32.xlu0 %v298, 24
        %v520 = vpop.permute.xlu0 %519
        %521 = vrot.lane.b32.xlu0 %v299, 24
        %v522 = vpop.permute.xlu0 %521
        %523 = vrot.lane.b32.xlu0 %v300, 24
        %v524 = vpop.permute.xlu0 %523
        %525 = vrot.lane.b32.xlu0 %v301, 24
        %v526 = vpop.permute.xlu0 %525
        %527 = vrot.lane.b32.xlu0 %v302, 24
        %v528 = vpop.permute.xlu0 %527
        %529 = vrot.lane.b32.xlu0 %v303, 24
        %v530 = vpop.permute.xlu0 %529
        %v547 = vrot.slane %v296, 1
        %v548 = vrot.slane %v312, 1
        %v549 = vsel %vm401, %v547, %v548
        %v550 = vrot.slane %v297, 1
        %v551 = vrot.slane %v313, 1
        %v552 = vsel %vm401, %v550, %v551
        %v553 = vrot.slane %v298, 1
        %v554 = vrot.slane %v314, 1
        %v555 = vsel %vm401, %v553, %v554
        %v556 = vrot.slane %v299, 1
        %v557 = vrot.slane %v315, 1
        %v558 = vsel %vm401, %v556, %v557
        %v559 = vrot.slane %v300, 1
        %v560 = vrot.slane %v316, 1
        %v561 = vsel %vm401, %v559, %v560
        %v562 = vrot.slane %v301, 1
        %v563 = vrot.slane %v317, 1
        %v564 = vsel %vm401, %v562, %v563
        %v565 = vrot.slane %v302, 1
        %v566 = vrot.slane %v318, 1
        %v567 = vsel %vm401, %v565, %v566
        %v568 = vrot.slane %v303, 1
        %v569 = vrot.slane %v319, 1
        %v570 = vsel %vm401, %v568, %v569
        %571 = vrot.lane.b32.xlu0 %v549, 32
        %v572 = vpop.permute.xlu0 %571
        %573 = vrot.lane.b32.xlu0 %v552, 32
        %v574 = vpop.permute.xlu0 %573
        %575 = vrot.lane.b32.xlu0 %v555, 32
        %v576 = vpop.permute.xlu0 %575
        %577 = vrot.lane.b32.xlu0 %v558, 32
        %v578 = vpop.permute.xlu0 %577
        %579 = vrot.lane.b32.xlu0 %v561, 32
        %v580 = vpop.permute.xlu0 %579
        %581 = vrot.lane.b32.xlu0 %v564, 32
        %v582 = vpop.permute.xlu0 %581
        %583 = vrot.lane.b32.xlu0 %v567, 32
        %v584 = vpop.permute.xlu0 %583
        %585 = vrot.lane.b32.xlu0 %v570, 32
        %v586 = vpop.permute.xlu0 %585
        %v603 = vrot.slane %v328, 2
        %v604 = vrot.slane %v312, 2
        %v605 = vsel %vm458, %v603, %v604
        %v606 = vrot.slane %v329, 2
        %v607 = vrot.slane %v313, 2
        %v608 = vsel %vm458, %v606, %v607
        %v609 = vrot.slane %v330, 2
        %v610 = vrot.slane %v314, 2
        %v611 = vsel %vm458, %v609, %v610
        %v612 = vrot.slane %v331, 2
        %v613 = vrot.slane %v315, 2
        %v614 = vsel %vm458, %v612, %v613
        %v615 = vrot.slane %v332, 2
        %v616 = vrot.slane %v316, 2
        %v617 = vsel %vm458, %v615, %v616
        %v618 = vrot.slane %v333, 2
        %v619 = vrot.slane %v317, 2
        %v620 = vsel %vm458, %v618, %v619
        %v621 = vrot.slane %v334, 2
        %v622 = vrot.slane %v318, 2
        %v623 = vsel %vm458, %v621, %v622
        %v624 = vrot.slane %v335, 2
        %v625 = vrot.slane %v319, 2
        %v626 = vsel %vm458, %v624, %v625
        %627 = vrot.lane.b32.xlu0 %v605, 40
        %v628 = vpop.permute.xlu0 %627
        %629 = vrot.lane.b32.xlu0 %v608, 40
        %v630 = vpop.permute.xlu0 %629
        %631 = vrot.lane.b32.xlu0 %v611, 40
        %v632 = vpop.permute.xlu0 %631
        %633 = vrot.lane.b32.xlu0 %v614, 40
        %v634 = vpop.permute.xlu0 %633
        %635 = vrot.lane.b32.xlu0 %v617, 40
        %v636 = vpop.permute.xlu0 %635
        %637 = vrot.lane.b32.xlu0 %v620, 40
        %v638 = vpop.permute.xlu0 %637
        %639 = vrot.lane.b32.xlu0 %v623, 40
        %v640 = vpop.permute.xlu0 %639
        %641 = vrot.lane.b32.xlu0 %v626, 40
        %v642 = vpop.permute.xlu0 %641
        %659 = vrot.lane.b32.xlu0 %v345, 48
        %v660 = vpop.permute.xlu0 %659
        %661 = vrot.lane.b32.xlu0 %v346, 48
        %v662 = vpop.permute.xlu0 %661
        %663 = vrot.lane.b32.xlu0 %v347, 48
        %v664 = vpop.permute.xlu0 %663
        %665 = vrot.lane.b32.xlu0 %v348, 48
        %v666 = vpop.permute.xlu0 %665
        %667 = vrot.lane.b32.xlu0 %v349, 48
        %v668 = vpop.permute.xlu0 %667
        %669 = vrot.lane.b32.xlu0 %v350, 48
        %v670 = vpop.permute.xlu0 %669
        %671 = vrot.lane.b32.xlu0 %v351, 48
        %v672 = vpop.permute.xlu0 %671
        %673 = vrot.lane.b32.xlu0 %v352, 48
        %v674 = vpop.permute.xlu0 %673
        %v691 = vrot.slane %v345, 1
        %v692 = vrot.slane %v361, 1
        %v693 = vsel %vm401, %v691, %v692
        %v694 = vrot.slane %v346, 1
        %v695 = vrot.slane %v362, 1
        %v696 = vsel %vm401, %v694, %v695
        %v697 = vrot.slane %v347, 1
        %v698 = vrot.slane %v363, 1
        %v699 = vsel %vm401, %v697, %v698
        %v700 = vrot.slane %v348, 1
        %v701 = vrot.slane %v364, 1
        %v702 = vsel %vm401, %v700, %v701
        %v703 = vrot.slane %v349, 1
        %v704 = vrot.slane %v365, 1
        %v705 = vsel %vm401, %v703, %v704
        %v706 = vrot.slane %v350, 1
        %v707 = vrot.slane %v366, 1
        %v708 = vsel %vm401, %v706, %v707
        %v709 = vrot.slane %v351, 1
        %v710 = vrot.slane %v367, 1
        %v711 = vsel %vm401, %v709, %v710
        %v712 = vrot.slane %v352, 1
        %v713 = vrot.slane %v368, 1
        %v714 = vsel %vm401, %v712, %v713
        %715 = vrot.lane.b32.xlu0 %v693, 56
        %v716 = vpop.permute.xlu0 %715
        %717 = vrot.lane.b32.xlu0 %v696, 56
        %v718 = vpop.permute.xlu0 %717
        %719 = vrot.lane.b32.xlu0 %v699, 56
        %v720 = vpop.permute.xlu0 %719
        %721 = vrot.lane.b32.xlu0 %v702, 56
        %v722 = vpop.permute.xlu0 %721
        %723 = vrot.lane.b32.xlu0 %v705, 56
        %v724 = vpop.permute.xlu0 %723
        %725 = vrot.lane.b32.xlu0 %v708, 56
        %v726 = vpop.permute.xlu0 %725
        %727 = vrot.lane.b32.xlu0 %v711, 56
        %v728 = vpop.permute.xlu0 %727
        %729 = vrot.lane.b32.xlu0 %v714, 56
        %v730 = vpop.permute.xlu0 %729
        %v747 = vrot.slane %v377, 2
        %v748 = vrot.slane %v361, 2
        %v749 = vsel %vm458, %v747, %v748
        %v750 = vrot.slane %v378, 2
        %v751 = vrot.slane %v362, 2
        %v752 = vsel %vm458, %v750, %v751
        %v753 = vrot.slane %v379, 2
        %v754 = vrot.slane %v363, 2
        %v755 = vsel %vm458, %v753, %v754
        %v756 = vrot.slane %v380, 2
        %v757 = vrot.slane %v364, 2
        %v758 = vsel %vm458, %v756, %v757
        %v759 = vrot.slane %v381, 2
        %v760 = vrot.slane %v365, 2
        %v761 = vsel %vm458, %v759, %v760
        %v762 = vrot.slane %v382, 2
        %v763 = vrot.slane %v366, 2
        %v764 = vsel %vm458, %v762, %v763
        %v765 = vrot.slane %v383, 2
        %v766 = vrot.slane %v367, 2
        %v767 = vsel %vm458, %v765, %v766
        %v768 = vrot.slane %v384, 2
        %v769 = vrot.slane %v368, 2
        %v770 = vsel %vm458, %v768, %v769
        %771 = vrot.lane.b32.xlu0 %v749, 64
        %v772 = vpop.permute.xlu0 %771
        %773 = vrot.lane.b32.xlu0 %v752, 64
        %v774 = vpop.permute.xlu0 %773
        %775 = vrot.lane.b32.xlu0 %v755, 64
        %v776 = vpop.permute.xlu0 %775
        %777 = vrot.lane.b32.xlu0 %v758, 64
        %v778 = vpop.permute.xlu0 %777
        %779 = vrot.lane.b32.xlu0 %v761, 64
        %v780 = vpop.permute.xlu0 %779
        %781 = vrot.lane.b32.xlu0 %v764, 64
        %v782 = vpop.permute.xlu0 %781
        %783 = vrot.lane.b32.xlu0 %v767, 64
        %v784 = vpop.permute.xlu0 %783
        %785 = vrot.lane.b32.xlu0 %v770, 64
        %v786 = vpop.permute.xlu0 %785
        %vm795 = vcmask 64512
        %v796 = vsel %vm795, %v247, %v427
        %v797 = vsel %vm795, %v248, %v429
        %v798 = vsel %vm795, %v249, %v431
        %v799 = vsel %vm795, %v250, %v433
        %v800 = vsel %vm795, %v251, %v435
        %v801 = vsel %vm795, %v252, %v437
        %v802 = vsel %vm795, %v253, %v439
        %v803 = vsel %vm795, %v254, %v441
        %vm804 = vcmask 130048
        %v805 = vsel %vm804, %v796, %v484
        %v806 = vsel %vm804, %v797, %v486
        %v807 = vsel %vm804, %v798, %v488
        %v808 = vsel %vm804, %v799, %v490
        %v809 = vsel %vm804, %v800, %v492
        %v810 = vsel %vm804, %v801, %v494
        %v811 = vsel %vm804, %v802, %v496
        %v812 = vsel %vm804, %v803, %v498
        %vm813 = vcmask 195584
        %v814 = vsel %vm813, %v805, %v516
        %v815 = vsel %vm813, %v806, %v518
        %v816 = vsel %vm813, %v807, %v520
        %v817 = vsel %vm813, %v808, %v522
        %v818 = vsel %vm813, %v809, %v524
        %v819 = vsel %vm813, %v810, %v526
        %v820 = vsel %vm813, %v811, %v528
        %v821 = vsel %vm813, %v812, %v530
        %vm822 = vcmask 261120
        %v823 = vsel %vm822, %v814, %v572
        %v824 = vsel %vm822, %v815, %v574
        %v825 = vsel %vm822, %v816, %v576
        %v826 = vsel %vm822, %v817, %v578
        %v827 = vsel %vm822, %v818, %v580
        %v828 = vsel %vm822, %v819, %v582
        %v829 = vsel %vm822, %v820, %v584
        %v830 = vsel %vm822, %v821, %v586
        %vm831 = vcmask 326656
        %v832 = vsel %vm831, %v823, %v628
        %v833 = vsel %vm831, %v824, %v630
        %v834 = vsel %vm831, %v825, %v632
        %v835 = vsel %vm831, %v826, %v634
        %v836 = vsel %vm831, %v827, %v636
        %v837 = vsel %vm831, %v828, %v638
        %v838 = vsel %vm831, %v829, %v640
        %v839 = vsel %vm831, %v830, %v642
        %vm840 = vcmask 392192
        %v841 = vsel %vm840, %v832, %v660
        %v842 = vsel %vm840, %v833, %v662
        %v843 = vsel %vm840, %v834, %v664
        %v844 = vsel %vm840, %v835, %v666
        %v845 = vsel %vm840, %v836, %v668
        %v846 = vsel %vm840, %v837, %v670
        %v847 = vsel %vm840, %v838, %v672
        %v848 = vsel %vm840, %v839, %v674
        %vm849 = vcmask 457728
        %v850 = vsel %vm849, %v841, %v716
        %v851 = vsel %vm849, %v842, %v718
        %v852 = vsel %vm849, %v843, %v720
        %v853 = vsel %vm849, %v844, %v722
        %v854 = vsel %vm849, %v845, %v724
        %v855 = vsel %vm849, %v846, %v726
        %v856 = vsel %vm849, %v847, %v728
        %v857 = vsel %vm849, %v848, %v730
        %vm858 = vcmask 523264
        %v859 = vsel %vm858, %v850, %v772
        %v860 = vsel %vm858, %v851, %v774
        %v861 = vsel %vm858, %v852, %v776
        %v862 = vsel %vm858, %v853, %v778
        %v863 = vsel %vm858, %v854, %v780
        %v864 = vsel %vm858, %v855, %v782
        %v865 = vsel %vm858, %v856, %v784
        %v866 = vsel %vm858, %v857, %v786
        %v867 = vpack.c.bf16 %v860, %v859
        %v868 = vpack.c.bf16 %v862, %v861
        %v869 = vpack.c.bf16 %v864, %v863
        %v870 = vpack.c.bf16 %v866, %v865
        %v871 = vld [vmem:[#allocation5] sm:$0xf]
        %v872 = vld [vmem:[#allocation5 + $0x4] sm:$0xf]
        %v873 = vld [vmem:[#allocation5 + $0x8] sm:$0xf]
        %v874 = vld [vmem:[#allocation5 + $0xc] sm:$0xf]
        %v875 = vld [vmem:[#allocation5 + $0x10] sm:$0xf]
        %v876 = vld [vmem:[#allocation5 + $0x14] sm:$0xf]
        %v877 = vld [vmem:[#allocation5 + $0x18] sm:$0xf]
        %v878 = vld [vmem:[#allocation5 + $0x1c] sm:$0xf]
        %v879 = vld [vmem:[#allocation5 + $0x20] sm:$0xf]
        %v889 = vunpack.c.l.b16 %v871
        %v890 = vunpack.c.l.b16 %v872
        %v891 = vunpack.c.l.b16 %v873
        %v892 = vunpack.c.l.b16 %v874
        %v893 = vunpack.c.l.b16 %v875
        %v894 = vunpack.c.l.b16 %v876
        %v895 = vunpack.c.l.b16 %v877
        %v896 = vunpack.c.l.b16 %v878
        %v897 = vunpack.c.l.b16 %v879
        %v898 = vpack.c.b16 %v890, %v889
        %v899 = vpack.c.b16 %v892, %v891
        %v900 = vpack.c.b16 %v894, %v893
        %v901 = vpack.c.b16 %v896, %v895
        %v902 = vpack.c.b16 %v897, %v897
        %vm907 = vcmask 588800
        %v909 = vsel %vm907, %v867, 0
        %v912 = vsel %vm907, %v868, 0
        %v915 = vsel %vm907, %v869, 0
        %v918 = vsel %vm907, %v870, 0
        %vm920 = vcmask 1043456
        %v922 = vsel %vm920, %v902, 0
        %924 = vmatprep.subr.bf16.mxu0 0
        %925 = vmatpush1.bf16.msra.mxu0 %v898
        %926 = vmatprep.subr.bf16.mxu0 0
        %927 = vmatpush1.bf16.msra.mxu0 %v899
        %928 = vmatprep.subr.bf16.mxu0 0
        %929 = vmatpush1.bf16.msra.mxu0 %v900
        %930 = vmatprep.subr.bf16.mxu0 0
        %931 = vmatpush1.bf16.msra.mxu0 %v901
        %932 = vmatprep.subr.bf16.mxu0 0
        %933 = vmatpush1.bf16.msra.mxu0 %v922
        %934 = vmatprep.subr.bf16.mxu0 0
        %935 = vmatpush1.bf16.msra.mxu0 0
        %936 = vmatprep.subr.bf16.mxu0 0
        %937 = vmatpush1.bf16.msra.mxu0 0
        %938 = vmatprep.subr.bf16.mxu0 0
        %939 = vmatpush1.bf16.msra.mxu0 0
        %940 = vmatprep.subr.bf16.mxu0 0
        %941 = vmatpush1.bf16.msra.mxu0 0
        %942 = vmatprep.subr.bf16.mxu0 0
        %943 = vmatpush1.bf16.msra.mxu0 0
        %944 = vmatprep.subr.bf16.mxu0 0
        %945 = vmatpush1.bf16.msra.mxu0 0
        %946 = vmatprep.subr.bf16.mxu0 0
        %947 = vmatpush1.bf16.msra.mxu0 0
        %948 = vmatprep.subr.bf16.mxu0 0
        %949 = vmatpush1.bf16.msra.mxu0 0
        %950 = vmatprep.subr.bf16.mxu0 0
        %951 = vmatpush1.bf16.msra.mxu0 0
        %952 = vmatprep.subr.bf16.mxu0 0
        %953 = vmatpush1.bf16.msra.mxu0 0
        %954 = vmatprep.subr.bf16.mxu0 0
        %955 = vmatpush1.bf16.msra.mxu0 0
        %956 = vmatprep.mubr.bf16.mxu0 0
        %957 = vmatmul.mubr.bf16.gmra.mrb[0].mxu0 %v909
        %v958 = vpop.f32.mrb[0].mxu0
        %v959 = vadd.f32 0.0, %v958
        %v960 = vpop.f32.mrb[0].mxu0
        %v961 = vpop.f32.mrb[0].mxu0
        %v962 = vadd.f32 0.0, %v961
        %v963 = vpop.f32.mrb[0].mxu0
        %964 = vmatprep.mubr.bf16.mxu0 0
        %965 = vmatmul.mubr.bf16.gmra.mrb[0].mxu0 %v912
        %v966 = vpop.f32.mrb[0].mxu0
        %v967 = vadd.f32 0.0, %v966
        %v968 = vpop.f32.mrb[0].mxu0
        %v969 = vpop.f32.mrb[0].mxu0
        %v970 = vadd.f32 0.0, %v969
        %v971 = vpop.f32.mrb[0].mxu0
        %972 = vmatprep.mubr.bf16.mxu0 0
        %973 = vmatmul.mubr.bf16.gmra.mrb[0].mxu0 %v915
        %v974 = vpop.f32.mrb[0].mxu0
        %v975 = vadd.f32 0.0, %v974
        %v976 = vpop.f32.mrb[0].mxu0
        %v977 = vpop.f32.mrb[0].mxu0
        %v978 = vadd.f32 0.0, %v977
        %v979 = vpop.f32.mrb[0].mxu0
        %980 = vmatprep.mubr.bf16.mxu0 0
        %981 = vmatmul.mubr.bf16.gmra.mrb[0].mxu0 %v918
        %v982 = vpop.f32.mrb[0].mxu0
        %v983 = vadd.f32 0.0, %v982
        %v984 = vpop.f32.mrb[0].mxu0
        %v985 = vpop.f32.mrb[0].mxu0
        %v986 = vadd.f32 0.0, %v985
        %v987 = vpop.f32.mrb[0].mxu0
        %988 = vdwg.mxu0
        %989 = vst.msk [vmem:[%s230] sm:$0xff] %vm795, %v959
        %990 = vst.msk [vmem:[%s230 + $0x8] sm:$0xff] %vm795, %v962
        %991 = vst.msk [vmem:[%s230 + $0x10] sm:$0xff] %vm795, %v967
        %992 = vst.msk [vmem:[%s230 + $0x18] sm:$0xff] %vm795, %v970
        %993 = vst.msk [vmem:[%s230 + $0x20] sm:$0xff] %vm795, %v975
        %994 = vst.msk [vmem:[%s230 + $0x28] sm:$0xff] %vm795, %v978
        %995 = vst.msk [vmem:[%s230 + $0x30] sm:$0xff] %vm795, %v983
        %996 = vst.msk [vmem:[%s230 + $0x38] sm:$0xff] %vm795, %v986
        %v997 = vsel %vm795, %v959, 0.0
        %v998 = vsel %vm795, %v962, 0.0
        %v999 = vadd.f32 %v997, %v998
        %v1000 = vsel %vm795, %v967, 0.0
        %v1001 = vadd.f32 %v999, %v1000
        %v1002 = vsel %vm795, %v970, 0.0
        %v1003 = vadd.f32 %v1001, %v1002
        %v1004 = vsel %vm795, %v975, 0.0
        %v1005 = vadd.f32 %v1003, %v1004
        %v1006 = vsel %vm795, %v978, 0.0
        %v1007 = vadd.f32 %v1005, %v1006
        %v1008 = vsel %vm795, %v983, 0.0
        %v1009 = vadd.f32 %v1007, %v1008
        %v1010 = vsel %vm795, %v986, 0.0
        %v1011 = vadd.f32 %v1009, %v1010
        %v1012 = vrot.slane %v1011, 4
        %v1013 = vadd.f32 %v1011, %v1012
        %v1014 = vrot.slane %v1013, 2
        %v1015 = vadd.f32 %v1013, %v1014
        %v1016 = vrot.slane %v1015, 1
        %v1017 = vadd.f32 %v1015, %v1016
        %v1018 = vmul.f32 %v959, %v959
        %v1019 = vmul.f32 %v962, %v962
        %v1020 = vmul.f32 %v967, %v967
        %v1021 = vmul.f32 %v970, %v970
        %v1022 = vmul.f32 %v975, %v975
        %v1023 = vmul.f32 %v978, %v978
        %v1024 = vmul.f32 %v983, %v983
        %v1025 = vmul.f32 %v986, %v986
        %v1026 = vsel %vm795, %v1018, 0.0
        %v1027 = vsel %vm795, %v1019, 0.0
        %v1028 = vadd.f32 %v1026, %v1027
        %v1029 = vsel %vm795, %v1020, 0.0
        %v1030 = vadd.f32 %v1028, %v1029
        %v1031 = vsel %vm795, %v1021, 0.0
        %v1032 = vadd.f32 %v1030, %v1031
        %v1033 = vsel %vm795, %v1022, 0.0
        %v1034 = vadd.f32 %v1032, %v1033
        %v1035 = vsel %vm795, %v1023, 0.0
        %v1036 = vadd.f32 %v1034, %v1035
        %v1037 = vsel %vm795, %v1024, 0.0
        %v1038 = vadd.f32 %v1036, %v1037
        %v1039 = vsel %vm795, %v1025, 0.0
        %v1040 = vadd.f32 %v1038, %v1039
        %v1041 = vrot.slane %v1040, 4
        %v1042 = vadd.f32 %v1040, %v1041
        %v1043 = vrot.slane %v1042, 2
        %v1044 = vadd.f32 %v1042, %v1043
        %v1045 = vrot.slane %v1044, 1
        %v1046 = vadd.f32 %v1044, %v1045
        %vm1047 = vcmask 1040384
        %v1048 = vsel %vm1047, %v1017, %v1046
        %vm1049 = vcmask 58368
        %1050 = vst.msk [vmem:[%s237] sm:$0x3] %vm1049, %v1048
        %s1051 = sand.u32 %s99, 1
        %s1052 = scalar_lea.sflag [#allocation4], %s1051
        %s1053 = sand.u32 %s99, 1
        %s1054 = smul.addr %s1053, 64
        %s1055 = scalar_lea.vmem [#allocation7], %s1054
        %s1056 = sand.u32 %s127, 1
        %s1057 = scalar_lea.sflag [#allocation9], %s1056
        %s1058 = sand.u32 %s127, 1
        %s1059 = smul.addr %s1058, 2
        %s1060 = scalar_lea.vmem [#allocation8], %s1059
        // Predicated region
        $region37: #{basic_block_forward.8} parent=27 // pred_check
          %p1061 = pneg %p109
        $region38: #{basic_block_forward.8} parent=27 // pred_check_branch
          %1063 = sbr.rel (%p1061) target = $region40
        $region39: #{basic_block_forward.8} parent=27 // pred_region
          %s1065 = ssub.s32 1024, 1024
          %1066 = vsyncadd %s1052, %s1065
          %s1067 = smul.addr %s29, 8
          %s1068 = sadd.s32 %s30, %s1067
          %s1069 = smul.addr %s1068, 128
          %s1070 = scalar_lea.hbm %s2, %s1069
          %s1071 = sshll.u32 %s1055, 4
          %s1072 = int_to_ptr.vmem [resolvable:$true] %s1071
          %1077 = dma.vmem_to_hbm [thread:$0]  %s1072, 1024, %s1070, %s1052, 128, 128, 8
        $region40: #{basic_block_forward.8} parent=27 // pred_fallthru
          _
        // Predicated region
        $region41: #{basic_block_forward.8} parent=27 // pred_check
          %p1078 = pneg %p137
        $region42: #{basic_block_forward.8} parent=27 // pred_check_branch
          %1080 = sbr.rel (%p1078) target = $region44
        $region43: #{basic_block_forward.8} parent=27 // pred_region
          %s1082 = ssub.s32 32, 32
          %1083 = vsyncadd %s1057, %s1082
          %s1084 = sadd.s32 %s30, %s29
          %s1085 = smul.addr %s1084, 32
          %s1086 = scalar_lea.hbm %s3, %s1085
          %s1088 = sshll.u32 %s1060, 4
          %s1089 = int_to_ptr.vmem [resolvable:$true] %s1088
          %1091 = dma.vmem_to_hbm [thread:$0]  %s1089, 32, %s1086, %s1057
        $region44: #{basic_block_forward.8} parent=27 // pred_fallthru
          _
      $region28: #{basic_block_forward.8} parent=5 // pred_fallthru
        _
      %p1092 = scmp.le.s32.totalorder 2, %s20
      // Predicated region
      $region45: #{basic_block_forward.8} parent=5 // pred_check
        %p1093 = pneg %p1092
      $region46: #{basic_block_forward.8} parent=5 // pred_check_branch
        %1095 = sbr.rel (%p1093) target = $region48
      $region47: #{basic_block_forward.8} parent=5 // pred_region
        %s1096 = ssub.s32 %s20, 2
        // Predicated region
        $region49: #{basic_block_forward.8} parent=47 // pred_check
          %p1097 = pneg %p115
        $region50: #{basic_block_forward.8} parent=47 // pred_check_branch
          %1099 = sbr.rel (%p1097) target = $region52
        $region51: #{basic_block_forward.8} parent=47 // pred_region
          %s1100 = sand.u32 %s100, 1
          %s1101 = scalar_lea.sflag [#allocation4], %s1100
          %s1102 = sand.u32 %s100, 1
          %s1103 = smul.addr %s1102, 64
          %s1104 = scalar_lea.vmem [#allocation7], %s1103
          %1105 = dma.done %s1101, 1024
        $region52: #{basic_block_forward.8} parent=47 // pred_fallthru
          _
        // Predicated region
        $region53: #{basic_block_forward.8} parent=47 // pred_check
          %p1106 = pneg %p143
        $region54: #{basic_block_forward.8} parent=47 // pred_check_branch
          %1108 = sbr.rel (%p1106) target = $region56
        $region55: #{basic_block_forward.8} parent=47 // pred_region
          %s1109 = sand.u32 %s128, 1
          %s1110 = scalar_lea.sflag [#allocation9], %s1109
          %s1111 = sand.u32 %s128, 1
          %s1112 = smul.addr %s1111, 2
          %s1113 = scalar_lea.vmem [#allocation8], %s1112
          %1114 = dma.done %s1110, 32
        $region56: #{basic_block_forward.8} parent=47 // pred_fallthru
          _
      $region48: #{basic_block_forward.8} parent=5 // pred_fallthru
        _
    $region6: #{basic_block_forward.8} parent=1 // loop_footer
      %s24 = sadd.s32 1, %s20
    $region7: #{basic_block_forward.8} parent=1 // loop_footer_branch
      %19 = sbr.rel target = $region3
    $region8: #{basic_block_forward.8} parent=1 // loop_exit
      _
    %1115 = vsyncpa [#allocation3], 1
    %s1116 = scalar_lea.sflag [#allocation3], 1
    %1117 = vsyncpa %s1116, 1
    %1118 = vsyncpa [#allocation6], 1
    %1119 = vsyncpa [#allocation4], 1
    %s1120 = scalar_lea.sflag [#allocation4], 1
    %1121 = vsyncpa %s1120, 1
    %1122 = vsyncpa [#allocation9], 1
    %s1123 = scalar_lea.sflag [#allocation9], 1
    %1124 = vsyncpa %s1123, 1

</llo_original>
